<compile_context>
chip_gen: v6e
topology: v6e:2x2x1
jax: 0.10.0
libtpu: 0.0.40
codegen_flags: <defaults>
</compile_context>

<pallas_src>
import jax
import jax.numpy as jnp
from jax import lax
from jax.experimental import pallas as pl
from jax.experimental.pallas import tpu as pltpu


def _ising_energy_kernel(x_ref, w_ref, b_ref, o_ref, acc_ref):
    """One grid step consumes a (TILE, D) slab of W's rows.

    acc_ref: (B, TILE) f32 VMEM accumulator holding the elementwise partial
    products x[:, tile] * (x @ W_slab^T + b[tile]); the cross-lane reduction
    and negation happen once, in the last-step epilogue of each core's shard.
    """
    core = pl.program_id(0)          # TensorCore shard (size 1 on v5e/v6e)
    i = pl.program_id(1)             # reduction step within this core's shard
    steps = pl.num_programs(1)
    tile = w_ref.shape[0]            # static W row-tile size

    @pl.when(i == 0)
    def _():
        acc_ref[...] = jnp.zeros_like(acc_ref)

    x_full = x_ref[...]              # (B, D) bf16, resident across the grid

    # (B, TILE) = x @ W_slab^T without materializing a transpose: contract the
    # last dim of x against the last dim of the W slab directly on the MXU.
    wx_tile = lax.dot_general(
        x_full,
        w_ref[...],
        dimension_numbers=(((1,), (1,)), ((), ())),
        preferred_element_type=jnp.float32,
    )

    g = core * steps + i                         # global W row-slab index
    start = pl.multiple_of(g * tile, tile)
    x_tile = x_ref[:, pl.ds(start, tile)].astype(jnp.float32)   # (B, TILE)
    b_tile = b_ref[:, pl.ds(start, tile)]                        # (1, TILE) f32

    # Pure VPU accumulate in the steady state; bias folded in so the epilogue
    # has no full-width (B, D) pass left.
    acc_ref[...] += x_tile * (wx_tile + b_tile)

    @pl.when(i == steps - 1)
    def _():
        partial = -jnp.sum(acc_ref[...], axis=1, keepdims=True)  # (B, 1)
        o_ref[...] = partial[None].astype(o_ref.dtype)           # (1, B, 1)


def _device_kind():
    try:
        return jax.devices()[0].device_kind.lower()
    except Exception:
        return ""


def _vmem_budget_bytes(kind):
    """Generation-aware scoped-VMEM budget for the tile/buffer footprint."""
    if "v7" in kind:
        return 40 << 20     # 64 MiB physical per TC -> stay well under ~48 MiB
    if "v6" in kind:
        return 24 << 20     # 128 MiB physical, 32 MiB scoped default
    if "v5" in kind:
        return 14 << 20     # 16 MiB scoped default
    return 12 << 20         # unknown backend: conservative


def _choose_tile(batch, dim, num_cores, vmem_budget_bytes, stream_itemsize):
    """Largest W row-tile (multiple of 128, dividing D/num_cores) such that the
    double-buffered W slabs plus the resident x / b / accumulator fit the
    generation-aware scoped-VMEM budget."""
    dim_per_core = dim // num_cores
    # Conservative residents: x and b counted double-buffered even though their
    # block index never changes; acc bounded by its largest possible tile.
    resident = (2 * batch * dim * stream_itemsize
                + 2 * dim * 4
                + batch * dim_per_core * 4)
    avail = vmem_budget_bytes - resident
    if dim_per_core % 128 != 0:
        return dim_per_core  # tiny / irregular problem: one full block per core
    tile = dim_per_core
    while tile >= 128:
        if dim_per_core % tile == 0 and 2 * tile * dim * stream_itemsize <= avail:
            return tile
        tile -= 128
    return 128


def ising_energy(x, W, b, *, tile=None, stream_dtype=jnp.bfloat16, interpret=False):
    """x: (B, *dim) float; W: (D, D); b: (D,) with D = prod(dim).

    stream_dtype controls the HBM-streaming dtype of x and W. The default bf16
    is exact for Ising spins x in {0,1} and for the module's 0.5*ones W init;
    the contraction and accumulation are always f32.
    """
    B = x.shape[0]
    D = W.shape[0]

    kind = _device_kind()
    num_cores = 2 if "v7" in kind else 1          # shard W stream on v7x only
    if D % num_cores != 0 or (num_cores > 1 and (D // num_cores) % 128 != 0):
        num_cores = 1

    stream_itemsize = jnp.dtype(stream_dtype).itemsize
    x2 = x.reshape(B, D).astype(stream_dtype)
    W2 = W.astype(stream_dtype)
    b2 = b.reshape(1, D).astype(jnp.float32)
    # TODO(synk): v7x fp8 (or v5e/v6e int8) W with a per-row dequant scale would
    # cut the W stream another 2x if the accuracy budget allows.

    budget = _vmem_budget_bytes(kind)
    if tile is None:
        tile = _choose_tile(B, D, num_cores, budget, stream_itemsize)
    dim_per_core = D // num_cores
    assert dim_per_core % tile == 0, "feature dim per core must be divisible by tile"
    steps = dim_per_core // tile
    grid = (num_cores, steps)
    # TODO(synk): when steps == 1, single-buffer the W slab (pl.Buffered(1)) to
    # free one slab of VMEM headroom once buffer_count=1 support is confirmed.
    # TODO(synk): for large B, add a 'parallel' batch-tiling axis instead of
    # keeping x fully VMEM-resident.

    flops = 2 * B * D * D + 3 * B * D
    bytes_accessed = (D * D * stream_itemsize + B * D * stream_itemsize
                      + D * 4 + num_cores * B * 4)

    out = pl.pallas_call(
        _ising_energy_kernel,
        out_shape=jax.ShapeDtypeStruct((num_cores, B, 1), jnp.float32),
        grid_spec=pltpu.PrefetchScalarGridSpec(
            num_scalar_prefetch=0,
            grid=grid,
            in_specs=[
                pl.BlockSpec((B, D), lambda c, i: (0, 0)),        # x: resident
                pl.BlockSpec((tile, D),
                             lambda c, i: (c * steps + i, 0)),    # W: streamed slabs
                pl.BlockSpec((1, D), lambda c, i: (0, 0)),        # b: resident
            ],
            out_specs=pl.BlockSpec((1, B, 1), lambda c, i: (c, 0, 0)),
            scratch_shapes=[pltpu.VMEM((B, tile), jnp.float32)],
        ),
        compiler_params=pltpu.CompilerParams(
            # core axis sharded across TensorCores (v7x); W-row axis is a reduction
            dimension_semantics=("parallel", "arbitrary"),
            vmem_limit_bytes=min(budget + (8 << 20), 96 << 20),
        ),
        cost_estimate=pl.CostEstimate(
            flops=flops, transcendentals=0, bytes_accessed=bytes_accessed
        ),
        interpret=interpret,
    )(x2, W2, b2)

    # Combine the per-core partial energies (size-1 axis on 1-TC chips).
    return out.sum(axis=0)


if __name__ == "__main__":
    # input_size = (4, 16, 16)  ->  D = 1024, batch = 2
    B = 2
    input_size = (4, 16, 16)
    D = 4 * 16 * 16

    key = jax.random.PRNGKey(0)
    # Ising-like binary inputs in {0, 1}
    x = jax.random.bernoulli(key, p=0.5, shape=(B,) + input_size).astype(
        jnp.float32
    )

    # Deterministic parameter init, matching the module's __init__:
    #   W = 0.5 * ones(D, D), b = ones(D)
    W = jnp.full((D, D), 0.5, dtype=jnp.float32)
    b = jnp.ones((D,), dtype=jnp.float32)

    out = ising_energy(x, W, b)
    out = jax.block_until_ready(out)

    # Pure-JAX reference for correctness
    xf = x.reshape(B, D)
    Wx = xf @ W.T
    ref = (-jnp.sum(xf * Wx, axis=1) - xf @ b).reshape(-1, 1)

    assert out.shape == (B, 1)
    assert jnp.allclose(out, ref, rtol=1e-4, atol=1e-2), (out, ref)
    print("KERNEL_OK")
</pallas_src>

<mosaic_0001>
module attributes {stable_mosaic.version = 11 : i64} {
  func.func @_ising_energy_kernel(%arg0: i32, %arg1: i32, %arg2: memref<2x1024xbf16, #tpu.memory_space<vmem>>, %arg3: memref<1024x1024xbf16, #tpu.memory_space<vmem>>, %arg4: memref<1x1024xf32, #tpu.memory_space<vmem>>, %arg5: memref<1x2x1xf32, #tpu.memory_space<vmem>>, %arg6: memref<2x1024xf32, #tpu.memory_space<vmem>>) attributes {dimension_semantics = [#tpu.dimension_semantics<parallel>, #tpu.dimension_semantics<arbitrary>], iteration_bounds = array<i64: 1, 1>, scalar_prefetch = 0 : i64, scratch_operands = 1 : i64, tpu.core_type = #tpu.core_type<tc>, window_params = [{pipeline_mode = #tpu.pipeline_mode<synchronous>, transform_indices = @transform_0, window_bounds = array<i64: 2, 1024>}, {transform_indices = @transform_1, window_bounds = array<i64: 1024, 1024>}, {pipeline_mode = #tpu.pipeline_mode<synchronous>, transform_indices = @transform_2, window_bounds = array<i64: 1, 1024>}, {transform_indices = @transform_3, window_bounds = array<i64: 1, 2, 1>}]} {
    %c0_i32 = arith.constant 0 : i32
    %0 = arith.cmpi eq, %arg1, %c0_i32 : i32
    %1 = arith.extui %0 : i1 to i32
    %c0_i32_0 = arith.constant 0 : i32
    %2 = arith.cmpi ne, %1, %c0_i32_0 : i32
    scf.if %2 {
      %cst_12 = arith.constant 0.000000e+00 : f32
      %24 = vector.broadcast %cst_12 : f32 to vector<2x1024xf32>
      %c0_13 = arith.constant 0 : index
      %c0_14 = arith.constant 0 : index
      %25 = vector.load %arg6[%c0_13, %c0_14] : memref<2x1024xf32, #tpu.memory_space<vmem>>, vector<2x1024xf32>
      tpu.vector_store %arg6[%c0_13, %c0_14], %24 {strides = array<i32>} : memref<2x1024xf32, #tpu.memory_space<vmem>>, vector<2x1024xf32>,
    } else {
    }
    %c0 = arith.constant 0 : index
    %c0_1 = arith.constant 0 : index
    %3 = vector.load %arg2[%c0, %c0_1] : memref<2x1024xbf16, #tpu.memory_space<vmem>>, vector<2x1024xbf16>
    %c0_2 = arith.constant 0 : index
    %c0_3 = arith.constant 0 : index
    %4 = vector.load %arg3[%c0_2, %c0_3] : memref<1024x1024xbf16, #tpu.memory_space<vmem>>, vector<1024x1024xbf16>
    %cst = arith.constant dense<0.000000e+00> : vector<2x1024xf32>
    %5 = tpu.matmul %3, %4, %cst {dimension_numbers = #tpu.dot_dimension_numbers<[1], [1], [0], [0], [0, 0, 1, 0], [], []>} : vector<2x1024xbf16>, vector<1024x1024xbf16>, vector<2x1024xf32> -> vector<2x1024xf32>
    %c1_i32 = arith.constant 1 : i32
    %6 = arith.muli %arg0, %c1_i32 : i32
    %7 = arith.addi %6, %arg1 : i32
    %c1024_i32 = arith.constant 1024 : i32
    %8 = arith.muli %7, %c1024_i32 : i32
    %9 = tpu.assume_multiple %8, 1024 : i32
    %c0_4 = arith.constant 0 : index
    %10 = arith.index_cast %9 : i32 to index
    %11 = vector.load %arg2[%c0_4, %10] : memref<2x1024xbf16, #tpu.memory_space<vmem>>, vector<2x1024xbf16>
    %12 = arith.extf %11 : vector<2x1024xbf16> to vector<2x1024xf32>
    %c0_5 = arith.constant 0 : index
    %13 = arith.index_cast %9 : i32 to index
    %14 = vector.load %arg4[%c0_5, %13] : memref<1x1024xf32, #tpu.memory_space<vmem>>, vector<1x1024xf32>
    %c0_6 = arith.constant 0 : index
    %c0_7 = arith.constant 0 : index
    %15 = vector.load %arg6[%c0_6, %c0_7] : memref<2x1024xf32, #tpu.memory_space<vmem>>, vector<2x1024xf32>
    %16 = vector.broadcast %14 : vector<1x1024xf32> to vector<2x1024xf32>
    %17 = arith.addf %5, %16 : vector<2x1024xf32>
    %18 = arith.mulf %12, %17 : vector<2x1024xf32>
    %19 = arith.addf %15, %18 : vector<2x1024xf32>
    %c0_8 = arith.constant 0 : index
    %c0_9 = arith.constant 0 : index
    %20 = vector.load %arg6[%c0_8, %c0_9] : memref<2x1024xf32, #tpu.memory_space<vmem>>, vector<2x1024xf32>
    tpu.vector_store %arg6[%c0_8, %c0_9], %19 {strides = array<i32>} : memref<2x1024xf32, #tpu.memory_space<vmem>>, vector<2x1024xf32>,
    %c0_i32_10 = arith.constant 0 : i32
    %21 = arith.cmpi eq, %arg1, %c0_i32_10 : i32
    %22 = arith.extui %21 : i1 to i32
    %c0_i32_11 = arith.constant 0 : i32
    %23 = arith.cmpi ne, %22, %c0_i32_11 : i32
    scf.if %23 {
      %c0_12 = arith.constant 0 : index
      %c0_13 = arith.constant 0 : index
      %24 = vector.load %arg6[%c0_12, %c0_13] : memref<2x1024xf32, #tpu.memory_space<vmem>>, vector<2x1024xf32>
      %cst_14 = arith.constant dense<0.000000e+00> : vector<2xf32>
      %25 = vector.multi_reduction <add>, %24, %cst_14 [1] : vector<2x1024xf32> to vector<2xf32>
      %26 = vector.shape_cast %25 : vector<2xf32> to vector<2x1xf32>
      %cst_15 = arith.constant 0.000000e+00 : f32
      %27 = vector.broadcast %cst_15 : f32 to vector<2x1xf32>
      %28 = arith.subf %27, %26 : vector<2x1xf32>
      %29 = vector.shape_cast %28 : vector<2x1xf32> to vector<1x2x1xf32>
      %c0_16 = arith.constant 0 : index
      %c0_17 = arith.constant 0 : index
      %c0_18 = arith.constant 0 : index
      %30 = vector.load %arg5[%c0_16, %c0_17, %c0_18] : memref<1x2x1xf32, #tpu.memory_space<vmem>>, vector<1x2x1xf32>
      tpu.vector_store %arg5[%c0_16, %c0_17, %c0_18], %29 {strides = array<i32>} : memref<1x2x1xf32, #tpu.memory_space<vmem>>, vector<1x2x1xf32>,
    } else {
    }
    return
  }
  func.func @transform_0(%arg0: i32, %arg1: i32) -> (i32, i32) {
    %c0_i32 = arith.constant 0 : i32
    %c0_i32_0 = arith.constant 0 : i32
    %c0_i32_1 = arith.constant 0 : i32
    return %c0_i32, %c0_i32_0 : i32, i32
  }
  func.func @transform_1(%arg0: i32, %arg1: i32) -> (i32, i32) {
    %c1_i32 = arith.constant 1 : i32
    %0 = arith.muli %arg0, %c1_i32 : i32
    %1 = arith.addi %0, %arg1 : i32
    %c0_i32 = arith.constant 0 : i32
    %c0_i32_0 = arith.constant 0 : i32
    return %1, %c0_i32 : i32, i32
  }
  func.func @transform_2(%arg0: i32, %arg1: i32) -> (i32, i32) {
    %c0_i32 = arith.constant 0 : i32
    %c0_i32_0 = arith.constant 0 : i32
    %c0_i32_1 = arith.constant 0 : i32
    return %c0_i32, %c0_i32_0 : i32, i32
  }
  func.func @transform_3(%arg0: i32, %arg1: i32) -> (i32, i32, i32) {
    %c0_i32 = arith.constant 0 : i32
    %c0_i32_0 = arith.constant 0 : i32
    %c0_i32_1 = arith.constant 0 : i32
    return %arg0, %c0_i32, %c0_i32_0 : i32, i32, i32
  }
}

</mosaic_0001>

<llo_original>
// kernel: tpu_custom_call.1
$region0: #{tpu_custom_call.1}
  #allocation0 [shape = 'u32[]', space=smem, size = 0x4, offset = 0x4, fixed_abs, tag = 'smem constant byte address 0x4 - core index']
  #allocation1 [shape = 'u32[144,128]{1,0:T(1,128)}', space=vmem, size = 0x12000, scoped, tag = 'internal scratch']
  #allocation2 [shape = 'f32[2,1024]{1,0:T(2,128)}', space=vmem, size = 0x2000, scoped, tag = 'scratch operand']
  %s0 = inlined_call_operand.hbm [shape: bf16[2,1024], index: 0, kind: input, shape index: {}]
  %s1 = inlined_call_operand.hbm [shape: bf16[1024,1024], index: 1, kind: input, shape index: {}]
  %s2 = inlined_call_operand.hbm [shape: f32[1,1024], index: 2, kind: input, shape index: {}]
  %s3 = inlined_call_operand.vmem [shape: f32[1,2,1], index: 3, kind: output, shape index: {}]
  %s4 = sld [smem:[#allocation0]]
  $region42: #{tpu_custom_call.1} parent=0
    _
  %s6 = ssub.s32 1, %s4
  %s7 = scalar_select 0, %s6, %s4
  $region1: #{tpu_custom_call.1} parent=0
    #allocation3 [shape = 'u8[4096]{0}', space=vmem, size = 0x1000, scoped, tag = 'input window, operand 0, single buffered']
    #allocation4 [shape = 's32[1]{0}', space=sflag, size = 0x4, scoped, tag = 'scoped memory for tpu_custom_call.1']
    #allocation5 [shape = 'u8[2097152]{0}', space=vmem, size = 0x200000, scoped, tag = 'input window, operand 1, single buffered']
    #allocation6 [shape = 's32[1]{0}', space=sflag, size = 0x4, scoped, tag = 'scoped memory for tpu_custom_call.1']
    #allocation7 [shape = 'u8[4096]{0}', space=vmem, size = 0x1000, scoped, tag = 'input window, operand 2, single buffered']
    %8 = vsyncpa [#allocation4], 0
    %9 = vsyncpa [#allocation6], 0
    // Predicated region
    $region2: #{tpu_custom_call.1} parent=1 // pred_check
      _
    $region3: #{tpu_custom_call.1} parent=1 // pred_check_branch
      %11 = sbr.rel (0) target = $region5
    $region4: #{tpu_custom_call.1} parent=1 // pred_region
      %s13 = ssub.s32 128, 128
      %14 = vsyncadd [#allocation4], %s13
      %s16 = sshll.u32 [#allocation3], 4
      %s17 = int_to_ptr.vmem [resolvable:$true] %s16
      %19 = dma.hbm_to_vmem [thread:$0]  %s0, 128, %s17, [#allocation4]
    $region5: #{tpu_custom_call.1} parent=1 // pred_fallthru
      _
    // Predicated region
    $region6: #{tpu_custom_call.1} parent=1 // pred_check
      _
    $region7: #{tpu_custom_call.1} parent=1 // pred_check_branch
      %21 = sbr.rel (0) target = $region9
    $region8: #{tpu_custom_call.1} parent=1 // pred_region
      %s22 = sadd.s32 0, 0
      %s23 = smul.u32 128, %s22
      %s25 = ssub.s32 65536, 65536
      %26 = vsyncadd [#allocation6], %s25
      %s27 = smul.addr %s23, 8
      %s28 = smul.addr %s27, 64
      %s29 = scalar_lea.hbm %s1, %s28
      %s30 = sshll.u32 [#allocation5], 4
      %s31 = int_to_ptr.vmem [resolvable:$true] %s30
      %36 = dma.hbm_to_vmem [thread:$0]  %s29, 65536, %s31, [#allocation6], 512, 512, 32
    $region9: #{tpu_custom_call.1} parent=1 // pred_fallthru
      _
    // Predicated region
    $region10: #{tpu_custom_call.1} parent=1 // pred_check
      _
    $region11: #{tpu_custom_call.1} parent=1 // pred_check_branch
      %38 = sbr.rel (0) target = $region13
    $region12: #{tpu_custom_call.1} parent=1 // pred_region
      %s40 = ssub.s32 128, 128
      %41 = vsyncadd [#allocation6], %s40
      %s43 = sshll.u32 [#allocation7], 4
      %s44 = int_to_ptr.vmem [resolvable:$true] %s43
      %46 = dma.hbm_to_vmem [thread:$0]  %s2, 128, %s44, [#allocation6]
    $region13: #{tpu_custom_call.1} parent=1 // pred_fallthru
      _
    // Predicated region
    $region14: #{tpu_custom_call.1} parent=1 // pred_check
      _
    $region15: #{tpu_custom_call.1} parent=1 // pred_check_branch
      %48 = sbr.rel (0) target = $region17
    $region16: #{tpu_custom_call.1} parent=1 // pred_region
      %49 = dma.done [#allocation4], 128
    $region17: #{tpu_custom_call.1} parent=1 // pred_fallthru
      _
    // Predicated region
    $region18: #{tpu_custom_call.1} parent=1 // pred_check
      _
    $region19: #{tpu_custom_call.1} parent=1 // pred_check_branch
      %51 = sbr.rel (0) target = $region21
    $region20: #{tpu_custom_call.1} parent=1 // pred_region
      %52 = dma.done [#allocation6], 65536
    $region21: #{tpu_custom_call.1} parent=1 // pred_fallthru
      _
    // Predicated region
    $region22: #{tpu_custom_call.1} parent=1 // pred_check
      _
    $region23: #{tpu_custom_call.1} parent=1 // pred_check_branch
      %54 = sbr.rel (0) target = $region25
    $region24: #{tpu_custom_call.1} parent=1 // pred_region
      %55 = dma.done [#allocation6], 128
    $region25: #{tpu_custom_call.1} parent=1 // pred_fallthru
      _
    %s56 = sadd.s32 0, 0
    %s57 = smul.u32 128, %s56
    %p58 = scmp.eq.s32.totalorder 0, 0
    // Predicated region
    $region26: #{tpu_custom_call.1} parent=1 // pred_check
      %p59 = pneg %p58
    $region27: #{tpu_custom_call.1} parent=1 // pred_check_branch
      %61 = sbr.rel (%p59) target = $region29
    $region28: #{tpu_custom_call.1} parent=1 // pred_region
      %62 = vst [vmem:[#allocation2] sm:$0xff] 0.0
      %63 = vst [vmem:[#allocation2 + $0x8] sm:$0xff] 0.0
    $region29: #{tpu_custom_call.1} parent=1 // pred_fallthru
      _
    %v64 = vld [vmem:[#allocation3] sm:$0xff]
    %v65 = vld [vmem:[#allocation5] sm:$0xff]
    %v66 = vld [vmem:[#allocation5 + $0x8] sm:$0xff]
    %v67 = vld [vmem:[#allocation5 + $0x10] sm:$0xff]
    %v68 = vld [vmem:[#allocation5 + $0x18] sm:$0xff]
    %v69 = vld [vmem:[#allocation5 + $0x20] sm:$0xff]
    %v70 = vld [vmem:[#allocation5 + $0x28] sm:$0xff]
    %v71 = vld [vmem:[#allocation5 + $0x30] sm:$0xff]
    %v72 = vld [vmem:[#allocation5 + $0x38] sm:$0xff]
    %v73 = vld [vmem:[#allocation5 + $0x40] sm:$0xff]
    %v74 = vld [vmem:[#allocation5 + $0x48] sm:$0xff]
    %v75 = vld [vmem:[#allocation5 + $0x50] sm:$0xff]
    %v76 = vld [vmem:[#allocation5 + $0x58] sm:$0xff]
    %v77 = vld [vmem:[#allocation5 + $0x60] sm:$0xff]
    %v78 = vld [vmem:[#allocation5 + $0x68] sm:$0xff]
    %v79 = vld [vmem:[#allocation5 + $0x70] sm:$0xff]
    %v80 = vld [vmem:[#allocation5 + $0x78] sm:$0xff]
    %v81 = vld [vmem:[#allocation5 + $0x80] sm:$0xff]
    %v82 = vld [vmem:[#allocation5 + $0x88] sm:$0xff]
    %v83 = vld [vmem:[#allocation5 + $0x90] sm:$0xff]
    %v84 = vld [vmem:[#allocation5 + $0x98] sm:$0xff]
    %v85 = vld [vmem:[#allocation5 + $0xa0] sm:$0xff]
    %v86 = vld [vmem:[#allocation5 + $0xa8] sm:$0xff]
    %v87 = vld [vmem:[#allocation5 + $0xb0] sm:$0xff]
    %v88 = vld [vmem:[#allocation5 + $0xb8] sm:$0xff]
    %v89 = vld [vmem:[#allocation5 + $0xc0] sm:$0xff]
    %v90 = vld [vmem:[#allocation5 + $0xc8] sm:$0xff]
    %v91 = vld [vmem:[#allocation5 + $0xd0] sm:$0xff]
    %v92 = vld [vmem:[#allocation5 + $0xd8] sm:$0xff]
    %v93 = vld [vmem:[#allocation5 + $0xe0] sm:$0xff]
    %v94 = vld [vmem:[#allocation5 + $0xe8] sm:$0xff]
    %v95 = vld [vmem:[#allocation5 + $0xf0] sm:$0xff]
    %v96 = vld [vmem:[#allocation5 + $0xf8] sm:$0xff]
    %v97 = vld [vmem:[#allocation5 + $0x100] sm:$0xff]
    %v98 = vld [vmem:[#allocation5 + $0x108] sm:$0xff]
    %v99 = vld [vmem:[#allocation5 + $0x110] sm:$0xff]
    %v100 = vld [vmem:[#allocation5 + $0x118] sm:$0xff]
    %v101 = vld [vmem:[#allocation5 + $0x120] sm:$0xff]
    %v102 = vld [vmem:[#allocation5 + $0x128] sm:$0xff]
    %v103 = vld [vmem:[#allocation5 + $0x130] sm:$0xff]
    %v104 = vld [vmem:[#allocation5 + $0x138] sm:$0xff]
    %v105 = vld [vmem:[#allocation5 + $0x140] sm:$0xff]
    %v106 = vld [vmem:[#allocation5 + $0x148] sm:$0xff]
    %v107 = vld [vmem:[#allocation5 + $0x150] sm:$0xff]
    %v108 = vld [vmem:[#allocation5 + $0x158] sm:$0xff]
    %v109 = vld [vmem:[#allocation5 + $0x160] sm:$0xff]
    %v110 = vld [vmem:[#allocation5 + $0x168] sm:$0xff]
    %v111 = vld [vmem:[#allocation5 + $0x170] sm:$0xff]
    %v112 = vld [vmem:[#allocation5 + $0x178] sm:$0xff]
    %v113 = vld [vmem:[#allocation5 + $0x180] sm:$0xff]
    %v114 = vld [vmem:[#allocation5 + $0x188] sm:$0xff]
    %v115 = vld [vmem:[#allocation5 + $0x190] sm:$0xff]
    %v116 = vld [vmem:[#allocation5 + $0x198] sm:$0xff]
    %v117 = vld [vmem:[#allocation5 + $0x1a0] sm:$0xff]
    %v118 = vld [vmem:[#allocation5 + $0x1a8] sm:$0xff]
    %v119 = vld [vmem:[#allocation5 + $0x1b0] sm:$0xff]
    %v120 = vld [vmem:[#allocation5 + $0x1b8] sm:$0xff]
    %v121 = vld [vmem:[#allocation5 + $0x1c0] sm:$0xff]
    %v122 = vld [vmem:[#allocation5 + $0x1c8] sm:$0xff]
    %v123 = vld [vmem:[#allocation5 + $0x1d0] sm:$0xff]
    %v124 = vld [vmem:[#allocation5 + $0x1d8] sm:$0xff]
    %v125 = vld [vmem:[#allocation5 + $0x1e0] sm:$0xff]
    %v126 = vld [vmem:[#allocation5 + $0x1e8] sm:$0xff]
    %v127 = vld [vmem:[#allocation5 + $0x1f0] sm:$0xff]
    %v128 = vld [vmem:[#allocation5 + $0x1f8] sm:$0xff]
    %v129 = vld [vmem:[#allocation5 + $0x200] sm:$0xff]
    %v130 = vld [vmem:[#allocation5 + $0x208] sm:$0xff]
    %v131 = vld [vmem:[#allocation5 + $0x210] sm:$0xff]
    %v132 = vld [vmem:[#allocation5 + $0x218] sm:$0xff]
    %v133 = vld [vmem:[#allocation5 + $0x220] sm:$0xff]
    %v134 = vld [vmem:[#allocation5 + $0x228] sm:$0xff]
    %v135 = vld [vmem:[#allocation5 + $0x230] sm:$0xff]
    %v136 = vld [vmem:[#allocation5 + $0x238] sm:$0xff]
    %v137 = vld [vmem:[#allocation5 + $0x240] sm:$0xff]
    %v138 = vld [vmem:[#allocation5 + $0x248] sm:$0xff]
    %v139 = vld [vmem:[#allocation5 + $0x250] sm:$0xff]
    %v140 = vld [vmem:[#allocation5 + $0x258] sm:$0xff]
    %v141 = vld [vmem:[#allocation5 + $0x260] sm:$0xff]
    %v142 = vld [vmem:[#allocation5 + $0x268] sm:$0xff]
    %v143 = vld [vmem:[#allocation5 + $0x270] sm:$0xff]
    %v144 = vld [vmem:[#allocation5 + $0x278] sm:$0xff]
    %v145 = vld [vmem:[#allocation5 + $0x280] sm:$0xff]
    %v146 = vld [vmem:[#allocation5 + $0x288] sm:$0xff]
    %v147 = vld [vmem:[#allocation5 + $0x290] sm:$0xff]
    %v148 = vld [vmem:[#allocation5 + $0x298] sm:$0xff]
    %v149 = vld [vmem:[#allocation5 + $0x2a0] sm:$0xff]
    %v150 = vld [vmem:[#allocation5 + $0x2a8] sm:$0xff]
    %v151 = vld [vmem:[#allocation5 + $0x2b0] sm:$0xff]
    %v152 = vld [vmem:[#allocation5 + $0x2b8] sm:$0xff]
    %v153 = vld [vmem:[#allocation5 + $0x2c0] sm:$0xff]
    %v154 = vld [vmem:[#allocation5 + $0x2c8] sm:$0xff]
    %v155 = vld [vmem:[#allocation5 + $0x2d0] sm:$0xff]
    %v156 = vld [vmem:[#allocation5 + $0x2d8] sm:$0xff]
    %v157 = vld [vmem:[#allocation5 + $0x2e0] sm:$0xff]
    %v158 = vld [vmem:[#allocation5 + $0x2e8] sm:$0xff]
    %v159 = vld [vmem:[#allocation5 + $0x2f0] sm:$0xff]
    %v160 = vld [vmem:[#allocation5 + $0x2f8] sm:$0xff]
    %v161 = vld [vmem:[#allocation5 + $0x300] sm:$0xff]
    %v162 = vld [vmem:[#allocation5 + $0x308] sm:$0xff]
    %v163 = vld [vmem:[#allocation5 + $0x310] sm:$0xff]
    %v164 = vld [vmem:[#allocation5 + $0x318] sm:$0xff]
    %v165 = vld [vmem:[#allocation5 + $0x320] sm:$0xff]
    %v166 = vld [vmem:[#allocation5 + $0x328] sm:$0xff]
    %v167 = vld [vmem:[#allocation5 + $0x330] sm:$0xff]
    %v168 = vld [vmem:[#allocation5 + $0x338] sm:$0xff]
    %v169 = vld [vmem:[#allocation5 + $0x340] sm:$0xff]
    %v170 = vld [vmem:[#allocation5 + $0x348] sm:$0xff]
    %v171 = vld [vmem:[#allocation5 + $0x350] sm:$0xff]
    %v172 = vld [vmem:[#allocation5 + $0x358] sm:$0xff]
    %v173 = vld [vmem:[#allocation5 + $0x360] sm:$0xff]
    %v174 = vld [vmem:[#allocation5 + $0x368] sm:$0xff]
    %v175 = vld [vmem:[#allocation5 + $0x370] sm:$0xff]
    %v176 = vld [vmem:[#allocation5 + $0x378] sm:$0xff]
    %v177 = vld [vmem:[#allocation5 + $0x380] sm:$0xff]
    %v178 = vld [vmem:[#allocation5 + $0x388] sm:$0xff]
    %v179 = vld [vmem:[#allocation5 + $0x390] sm:$0xff]
    %v180 = vld [vmem:[#allocation5 + $0x398] sm:$0xff]
    %v181 = vld [vmem:[#allocation5 + $0x3a0] sm:$0xff]
    %v182 = vld [vmem:[#allocation5 + $0x3a8] sm:$0xff]
    %v183 = vld [vmem:[#allocation5 + $0x3b0] sm:$0xff]
    %v184 = vld [vmem:[#allocation5 + $0x3b8] sm:$0xff]
    %v185 = vld [vmem:[#allocation5 + $0x3c0] sm:$0xff]
    %v186 = vld [vmem:[#allocation5 + $0x3c8] sm:$0xff]
    %v187 = vld [vmem:[#allocation5 + $0x3d0] sm:$0xff]
    %v188 = vld [vmem:[#allocation5 + $0x3d8] sm:$0xff]
    %v189 = vld [vmem:[#allocation5 + $0x3e0] sm:$0xff]
    %v190 = vld [vmem:[#allocation5 + $0x3e8] sm:$0xff]
    %v191 = vld [vmem:[#allocation5 + $0x3f0] sm:$0xff]
    %v192 = vld [vmem:[#allocation5 + $0x3f8] sm:$0xff]
    %v193 = vld [vmem:[#allocation5 + $0x400] sm:$0xff]
    %v194 = vld [vmem:[#allocation5 + $0x408] sm:$0xff]
    %v195 = vld [vmem:[#allocation5 + $0x410] sm:$0xff]
    %v196 = vld [vmem:[#allocation5 + $0x418] sm:$0xff]
    %v197 = vld [vmem:[#allocation5 + $0x420] sm:$0xff]
    %v198 = vld [vmem:[#allocation5 + $0x428] sm:$0xff]
    %v199 = vld [vmem:[#allocation5 + $0x430] sm:$0xff]
    %v200 = vld [vmem:[#allocation5 + $0x438] sm:$0xff]
    %v201 = vld [vmem:[#allocation5 + $0x440] sm:$0xff]
    %v202 = vld [vmem:[#allocation5 + $0x448] sm:$0xff]
    %v203 = vld [vmem:[#allocation5 + $0x450] sm:$0xff]
    %v204 = vld [vmem:[#allocation5 + $0x458] sm:$0xff]
    %v205 = vld [vmem:[#allocation5 + $0x460] sm:$0xff]
    %v206 = vld [vmem:[#allocation5 + $0x468] sm:$0xff]
    %v207 = vld [vmem:[#allocation5 + $0x470] sm:$0xff]
    %v208 = vld [vmem:[#allocation5 + $0x478] sm:$0xff]
    %v209 = vld [vmem:[#allocation5 + $0x480] sm:$0xff]
    %v210 = vld [vmem:[#allocation5 + $0x488] sm:$0xff]
    %v211 = vld [vmem:[#allocation5 + $0x490] sm:$0xff]
    %v212 = vld [vmem:[#allocation5 + $0x498] sm:$0xff]
    %v213 = vld [vmem:[#allocation5 + $0x4a0] sm:$0xff]
    %v214 = vld [vmem:[#allocation5 + $0x4a8] sm:$0xff]
    %v215 = vld [vmem:[#allocation5 + $0x4b0] sm:$0xff]
    %v216 = vld [vmem:[#allocation5 + $0x4b8] sm:$0xff]
    %v217 = vld [vmem:[#allocation5 + $0x4c0] sm:$0xff]
    %v218 = vld [vmem:[#allocation5 + $0x4c8] sm:$0xff]
    %v219 = vld [vmem:[#allocation5 + $0x4d0] sm:$0xff]
    %v220 = vld [vmem:[#allocation5 + $0x4d8] sm:$0xff]
    %v221 = vld [vmem:[#allocation5 + $0x4e0] sm:$0xff]
    %v222 = vld [vmem:[#allocation5 + $0x4e8] sm:$0xff]
    %v223 = vld [vmem:[#allocation5 + $0x4f0] sm:$0xff]
    %v224 = vld [vmem:[#allocation5 + $0x4f8] sm:$0xff]
    %v225 = vld [vmem:[#allocation5 + $0x500] sm:$0xff]
    %v226 = vld [vmem:[#allocation5 + $0x508] sm:$0xff]
    %v227 = vld [vmem:[#allocation5 + $0x510] sm:$0xff]
    %v228 = vld [vmem:[#allocation5 + $0x518] sm:$0xff]
    %v229 = vld [vmem:[#allocation5 + $0x520] sm:$0xff]
    %v230 = vld [vmem:[#allocation5 + $0x528] sm:$0xff]
    %v231 = vld [vmem:[#allocation5 + $0x530] sm:$0xff]
    %v232 = vld [vmem:[#allocation5 + $0x538] sm:$0xff]
    %v233 = vld [vmem:[#allocation5 + $0x540] sm:$0xff]
    %v234 = vld [vmem:[#allocation5 + $0x548] sm:$0xff]
    %v235 = vld [vmem:[#allocation5 + $0x550] sm:$0xff]
    %v236 = vld [vmem:[#allocation5 + $0x558] sm:$0xff]
    %v237 = vld [vmem:[#allocation5 + $0x560] sm:$0xff]
    %v238 = vld [vmem:[#allocation5 + $0x568] sm:$0xff]
    %v239 = vld [vmem:[#allocation5 + $0x570] sm:$0xff]
    %v240 = vld [vmem:[#allocation5 + $0x578] sm:$0xff]
    %v241 = vld [vmem:[#allocation5 + $0x580] sm:$0xff]
    %v242 = vld [vmem:[#allocation5 + $0x588] sm:$0xff]
    %v243 = vld [vmem:[#allocation5 + $0x590] sm:$0xff]
    %v244 = vld [vmem:[#allocation5 + $0x598] sm:$0xff]
    %v245 = vld [vmem:[#allocation5 + $0x5a0] sm:$0xff]
    %v246 = vld [vmem:[#allocation5 + $0x5a8] sm:$0xff]
    %v247 = vld [vmem:[#allocation5 + $0x5b0] sm:$0xff]
    %v248 = vld [vmem:[#allocation5 + $0x5b8] sm:$0xff]
    %v249 = vld [vmem:[#allocation5 + $0x5c0] sm:$0xff]
    %v250 = vld [vmem:[#allocation5 + $0x5c8] sm:$0xff]
    %v251 = vld [vmem:[#allocation5 + $0x5d0] sm:$0xff]
    %v252 = vld [vmem:[#allocation5 + $0x5d8] sm:$0xff]
    %v253 = vld [vmem:[#allocation5 + $0x5e0] sm:$0xff]
    %v254 = vld [vmem:[#allocation5 + $0x5e8] sm:$0xff]
    %v255 = vld [vmem:[#allocation5 + $0x5f0] sm:$0xff]
    %v256 = vld [vmem:[#allocation5 + $0x5f8] sm:$0xff]
    %v257 = vld [vmem:[#allocation5 + $0x600] sm:$0xff]
    %v258 = vld [vmem:[#allocation5 + $0x608] sm:$0xff]
    %v259 = vld [vmem:[#allocation5 + $0x610] sm:$0xff]
    %v260 = vld [vmem:[#allocation5 + $0x618] sm:$0xff]
    %v261 = vld [vmem:[#allocation5 + $0x620] sm:$0xff]
    %v262 = vld [vmem:[#allocation5 + $0x628] sm:$0xff]
    %v263 = vld [vmem:[#allocation5 + $0x630] sm:$0xff]
    %v264 = vld [vmem:[#allocation5 + $0x638] sm:$0xff]
    %v265 = vld [vmem:[#allocation5 + $0x640] sm:$0xff]
    %v266 = vld [vmem:[#allocation5 + $0x648] sm:$0xff]
    %v267 = vld [vmem:[#allocation5 + $0x650] sm:$0xff]
    %v268 = vld [vmem:[#allocation5 + $0x658] sm:$0xff]
    %v269 = vld [vmem:[#allocation5 + $0x660] sm:$0xff]
    %v270 = vld [vmem:[#allocation5 + $0x668] sm:$0xff]
    %v271 = vld [vmem:[#allocation5 + $0x670] sm:$0xff]
    %v272 = vld [vmem:[#allocation5 + $0x678] sm:$0xff]
    %v273 = vld [vmem:[#allocation5 + $0x680] sm:$0xff]
    %v274 = vld [vmem:[#allocation5 + $0x688] sm:$0xff]
    %v275 = vld [vmem:[#allocation5 + $0x690] sm:$0xff]
    %v276 = vld [vmem:[#allocation5 + $0x698] sm:$0xff]
    %v277 = vld [vmem:[#allocation5 + $0x6a0] sm:$0xff]
    %v278 = vld [vmem:[#allocation5 + $0x6a8] sm:$0xff]
    %v279 = vld [vmem:[#allocation5 + $0x6b0] sm:$0xff]
    %v280 = vld [vmem:[#allocation5 + $0x6b8] sm:$0xff]
    %v281 = vld [vmem:[#allocation5 + $0x6c0] sm:$0xff]
    %v282 = vld [vmem:[#allocation5 + $0x6c8] sm:$0xff]
    %v283 = vld [vmem:[#allocation5 + $0x6d0] sm:$0xff]
    %v284 = vld [vmem:[#allocation5 + $0x6d8] sm:$0xff]
    %v285 = vld [vmem:[#allocation5 + $0x6e0] sm:$0xff]
    %v286 = vld [vmem:[#allocation5 + $0x6e8] sm:$0xff]
    %v287 = vld [vmem:[#allocation5 + $0x6f0] sm:$0xff]
    %v288 = vld [vmem:[#allocation5 + $0x6f8] sm:$0xff]
    %v289 = vld [vmem:[#allocation5 + $0x700] sm:$0xff]
    %v290 = vld [vmem:[#allocation5 + $0x708] sm:$0xff]
    %v291 = vld [vmem:[#allocation5 + $0x710] sm:$0xff]
    %v292 = vld [vmem:[#allocation5 + $0x718] sm:$0xff]
    %v293 = vld [vmem:[#allocation5 + $0x720] sm:$0xff]
    %v294 = vld [vmem:[#allocation5 + $0x728] sm:$0xff]
    %v295 = vld [vmem:[#allocation5 + $0x730] sm:$0xff]
    %v296 = vld [vmem:[#allocation5 + $0x738] sm:$0xff]
    %v297 = vld [vmem:[#allocation5 + $0x740] sm:$0xff]
    %v298 = vld [vmem:[#allocation5 + $0x748] sm:$0xff]
    %v299 = vld [vmem:[#allocation5 + $0x750] sm:$0xff]
    %v300 = vld [vmem:[#allocation5 + $0x758] sm:$0xff]
    %v301 = vld [vmem:[#allocation5 + $0x760] sm:$0xff]
    %v302 = vld [vmem:[#allocation5 + $0x768] sm:$0xff]
    %v303 = vld [vmem:[#allocation5 + $0x770] sm:$0xff]
    %v304 = vld [vmem:[#allocation5 + $0x778] sm:$0xff]
    %v305 = vld [vmem:[#allocation5 + $0x780] sm:$0xff]
    %v306 = vld [vmem:[#allocation5 + $0x788] sm:$0xff]
    %v307 = vld [vmem:[#allocation5 + $0x790] sm:$0xff]
    %v308 = vld [vmem:[#allocation5 + $0x798] sm:$0xff]
    %v309 = vld [vmem:[#allocation5 + $0x7a0] sm:$0xff]
    %v310 = vld [vmem:[#allocation5 + $0x7a8] sm:$0xff]
    %v311 = vld [vmem:[#allocation5 + $0x7b0] sm:$0xff]
    %v312 = vld [vmem:[#allocation5 + $0x7b8] sm:$0xff]
    %v313 = vld [vmem:[#allocation5 + $0x7c0] sm:$0xff]
    %v314 = vld [vmem:[#allocation5 + $0x7c8] sm:$0xff]
    %v315 = vld [vmem:[#allocation5 + $0x7d0] sm:$0xff]
    %v316 = vld [vmem:[#allocation5 + $0x7d8] sm:$0xff]
    %v317 = vld [vmem:[#allocation5 + $0x7e0] sm:$0xff]
    %v318 = vld [vmem:[#allocation5 + $0x7e8] sm:$0xff]
    %v319 = vld [vmem:[#allocation5 + $0x7f0] sm:$0xff]
    %v320 = vld [vmem:[#allocation5 + $0x7f8] sm:$0xff]
    %v321 = vld [vmem:[#allocation5 + $0x800] sm:$0xff]
    %v322 = vld [vmem:[#allocation5 + $0x808] sm:$0xff]
    %v323 = vld [vmem:[#allocation5 + $0x810] sm:$0xff]
    %v324 = vld [vmem:[#allocation5 + $0x818] sm:$0xff]
    %v325 = vld [vmem:[#allocation5 + $0x820] sm:$0xff]
    %v326 = vld [vmem:[#allocation5 + $0x828] sm:$0xff]
    %v327 = vld [vmem:[#allocation5 + $0x830] sm:$0xff]
    %v328 = vld [vmem:[#allocation5 + $0x838] sm:$0xff]
    %v329 = vld [vmem:[#allocation5 + $0x840] sm:$0xff]
    %v330 = vld [vmem:[#allocation5 + $0x848] sm:$0xff]
    %v331 = vld [vmem:[#allocation5 + $0x850] sm:$0xff]
    %v332 = vld [vmem:[#allocation5 + $0x858] sm:$0xff]
    %v333 = vld [vmem:[#allocation5 + $0x860] sm:$0xff]
    %v334 = vld [vmem:[#allocation5 + $0x868] sm:$0xff]
    %v335 = vld [vmem:[#allocation5 + $0x870] sm:$0xff]
    %v336 = vld [vmem:[#allocation5 + $0x878] sm:$0xff]
    %v337 = vld [vmem:[#allocation5 + $0x880] sm:$0xff]
    %v338 = vld [vmem:[#allocation5 + $0x888] sm:$0xff]
    %v339 = vld [vmem:[#allocation5 + $0x890] sm:$0xff]
    %v340 = vld [vmem:[#allocation5 + $0x898] sm:$0xff]
    %v341 = vld [vmem:[#allocation5 + $0x8a0] sm:$0xff]
    %v342 = vld [vmem:[#allocation5 + $0x8a8] sm:$0xff]
    %v343 = vld [vmem:[#allocation5 + $0x8b0] sm:$0xff]
    %v344 = vld [vmem:[#allocation5 + $0x8b8] sm:$0xff]
    %v345 = vld [vmem:[#allocation5 + $0x8c0] sm:$0xff]
    %v346 = vld [vmem:[#allocation5 + $0x8c8] sm:$0xff]
    %v347 = vld [vmem:[#allocation5 + $0x8d0] sm:$0xff]
    %v348 = vld [vmem:[#allocation5 + $0x8d8] sm:$0xff]
    %v349 = vld [vmem:[#allocation5 + $0x8e0] sm:$0xff]
    %v350 = vld [vmem:[#allocation5 + $0x8e8] sm:$0xff]
    %v351 = vld [vmem:[#allocation5 + $0x8f0] sm:$0xff]
    %v352 = vld [vmem:[#allocation5 + $0x8f8] sm:$0xff]
    %v353 = vld [vmem:[#allocation5 + $0x900] sm:$0xff]
    %v354 = vld [vmem:[#allocation5 + $0x908] sm:$0xff]
    %v355 = vld [vmem:[#allocation5 + $0x910] sm:$0xff]
    %v356 = vld [vmem:[#allocation5 + $0x918] sm:$0xff]
    %v357 = vld [vmem:[#allocation5 + $0x920] sm:$0xff]
    %v358 = vld [vmem:[#allocation5 + $0x928] sm:$0xff]
    %v359 = vld [vmem:[#allocation5 + $0x930] sm:$0xff]
    %v360 = vld [vmem:[#allocation5 + $0x938] sm:$0xff]
    %v361 = vld [vmem:[#allocation5 + $0x940] sm:$0xff]
    %v362 = vld [vmem:[#allocation5 + $0x948] sm:$0xff]
    %v363 = vld [vmem:[#allocation5 + $0x950] sm:$0xff]
    %v364 = vld [vmem:[#allocation5 + $0x958] sm:$0xff]
    %v365 = vld [vmem:[#allocation5 + $0x960] sm:$0xff]
    %v366 = vld [vmem:[#allocation5 + $0x968] sm:$0xff]
    %v367 = vld [vmem:[#allocation5 + $0x970] sm:$0xff]
    %v368 = vld [vmem:[#allocation5 + $0x978] sm:$0xff]
    %v369 = vld [vmem:[#allocation5 + $0x980] sm:$0xff]
    %v370 = vld [vmem:[#allocation5 + $0x988] sm:$0xff]
    %v371 = vld [vmem:[#allocation5 + $0x990] sm:$0xff]
    %v372 = vld [vmem:[#allocation5 + $0x998] sm:$0xff]
    %v373 = vld [vmem:[#allocation5 + $0x9a0] sm:$0xff]
    %v374 = vld [vmem:[#allocation5 + $0x9a8] sm:$0xff]
    %v375 = vld [vmem:[#allocation5 + $0x9b0] sm:$0xff]
    %v376 = vld [vmem:[#allocation5 + $0x9b8] sm:$0xff]
    %v377 = vld [vmem:[#allocation5 + $0x9c0] sm:$0xff]
    %v378 = vld [vmem:[#allocation5 + $0x9c8] sm:$0xff]
    %v379 = vld [vmem:[#allocation5 + $0x9d0] sm:$0xff]
    %v380 = vld [vmem:[#allocation5 + $0x9d8] sm:$0xff]
    %v381 = vld [vmem:[#allocation5 + $0x9e0] sm:$0xff]
    %v382 = vld [vmem:[#allocation5 + $0x9e8] sm:$0xff]
    %v383 = vld [vmem:[#allocation5 + $0x9f0] sm:$0xff]
    %v384 = vld [vmem:[#allocation5 + $0x9f8] sm:$0xff]
    %v385 = vld [vmem:[#allocation5 + $0xa00] sm:$0xff]
    %v386 = vld [vmem:[#allocation5 + $0xa08] sm:$0xff]
    %v387 = vld [vmem:[#allocation5 + $0xa10] sm:$0xff]
    %v388 = vld [vmem:[#allocation5 + $0xa18] sm:$0xff]
    %v389 = vld [vmem:[#allocation5 + $0xa20] sm:$0xff]
    %v390 = vld [vmem:[#allocation5 + $0xa28] sm:$0xff]
    %v391 = vld [vmem:[#allocation5 + $0xa30] sm:$0xff]
    %v392 = vld [vmem:[#allocation5 + $0xa38] sm:$0xff]
    %v393 = vld [vmem:[#allocation5 + $0xa40] sm:$0xff]
    %v394 = vld [vmem:[#allocation5 + $0xa48] sm:$0xff]
    %v395 = vld [vmem:[#allocation5 + $0xa50] sm:$0xff]
    %v396 = vld [vmem:[#allocation5 + $0xa58] sm:$0xff]
    %v397 = vld [vmem:[#allocation5 + $0xa60] sm:$0xff]
    %v398 = vld [vmem:[#allocation5 + $0xa68] sm:$0xff]
    %v399 = vld [vmem:[#allocation5 + $0xa70] sm:$0xff]
    %v400 = vld [vmem:[#allocation5 + $0xa78] sm:$0xff]
    %v401 = vld [vmem:[#allocation5 + $0xa80] sm:$0xff]
    %v402 = vld [vmem:[#allocation5 + $0xa88] sm:$0xff]
    %v403 = vld [vmem:[#allocation5 + $0xa90] sm:$0xff]
    %v404 = vld [vmem:[#allocation5 + $0xa98] sm:$0xff]
    %v405 = vld [vmem:[#allocation5 + $0xaa0] sm:$0xff]
    %v406 = vld [vmem:[#allocation5 + $0xaa8] sm:$0xff]
    %v407 = vld [vmem:[#allocation5 + $0xab0] sm:$0xff]
    %v408 = vld [vmem:[#allocation5 + $0xab8] sm:$0xff]
    %v409 = vld [vmem:[#allocation5 + $0xac0] sm:$0xff]
    %v410 = vld [vmem:[#allocation5 + $0xac8] sm:$0xff]
    %v411 = vld [vmem:[#allocation5 + $0xad0] sm:$0xff]
    %v412 = vld [vmem:[#allocation5 + $0xad8] sm:$0xff]
    %v413 = vld [vmem:[#allocation5 + $0xae0] sm:$0xff]
    %v414 = vld [vmem:[#allocation5 + $0xae8] sm:$0xff]
    %v415 = vld [vmem:[#allocation5 + $0xaf0] sm:$0xff]
    %v416 = vld [vmem:[#allocation5 + $0xaf8] sm:$0xff]
    %v417 = vld [vmem:[#allocation5 + $0xb00] sm:$0xff]
    %v418 = vld [vmem:[#allocation5 + $0xb08] sm:$0xff]
    %v419 = vld [vmem:[#allocation5 + $0xb10] sm:$0xff]
    %v420 = vld [vmem:[#allocation5 + $0xb18] sm:$0xff]
    %v421 = vld [vmem:[#allocation5 + $0xb20] sm:$0xff]
    %v422 = vld [vmem:[#allocation5 + $0xb28] sm:$0xff]
    %v423 = vld [vmem:[#allocation5 + $0xb30] sm:$0xff]
    %v424 = vld [vmem:[#allocation5 + $0xb38] sm:$0xff]
    %v425 = vld [vmem:[#allocation5 + $0xb40] sm:$0xff]
    %v426 = vld [vmem:[#allocation5 + $0xb48] sm:$0xff]
    %v427 = vld [vmem:[#allocation5 + $0xb50] sm:$0xff]
    %v428 = vld [vmem:[#allocation5 + $0xb58] sm:$0xff]
    %v429 = vld [vmem:[#allocation5 + $0xb60] sm:$0xff]
    %v430 = vld [vmem:[#allocation5 + $0xb68] sm:$0xff]
    %v431 = vld [vmem:[#allocation5 + $0xb70] sm:$0xff]
    %v432 = vld [vmem:[#allocation5 + $0xb78] sm:$0xff]
    %v433 = vld [vmem:[#allocation5 + $0xb80] sm:$0xff]
    %v434 = vld [vmem:[#allocation5 + $0xb88] sm:$0xff]
    %v435 = vld [vmem:[#allocation5 + $0xb90] sm:$0xff]
    %v436 = vld [vmem:[#allocation5 + $0xb98] sm:$0xff]
    %v437 = vld [vmem:[#allocation5 + $0xba0] sm:$0xff]
    %v438 = vld [vmem:[#allocation5 + $0xba8] sm:$0xff]
    %v439 = vld [vmem:[#allocation5 + $0xbb0] sm:$0xff]
    %v440 = vld [vmem:[#allocation5 + $0xbb8] sm:$0xff]
    %v441 = vld [vmem:[#allocation5 + $0xbc0] sm:$0xff]
    %v442 = vld [vmem:[#allocation5 + $0xbc8] sm:$0xff]
    %v443 = vld [vmem:[#allocation5 + $0xbd0] sm:$0xff]
    %v444 = vld [vmem:[#allocation5 + $0xbd8] sm:$0xff]
    %v445 = vld [vmem:[#allocation5 + $0xbe0] sm:$0xff]
    %v446 = vld [vmem:[#allocation5 + $0xbe8] sm:$0xff]
    %v447 = vld [vmem:[#allocation5 + $0xbf0] sm:$0xff]
    %v448 = vld [vmem:[#allocation5 + $0xbf8] sm:$0xff]
    %v449 = vld [vmem:[#allocation5 + $0xc00] sm:$0xff]
    %v450 = vld [vmem:[#allocation5 + $0xc08] sm:$0xff]
    %v451 = vld [vmem:[#allocation5 + $0xc10] sm:$0xff]
    %v452 = vld [vmem:[#allocation5 + $0xc18] sm:$0xff]
    %v453 = vld [vmem:[#allocation5 + $0xc20] sm:$0xff]
    %v454 = vld [vmem:[#allocation5 + $0xc28] sm:$0xff]
    %v455 = vld [vmem:[#allocation5 + $0xc30] sm:$0xff]
    %v456 = vld [vmem:[#allocation5 + $0xc38] sm:$0xff]
    %v457 = vld [vmem:[#allocation5 + $0xc40] sm:$0xff]
    %v458 = vld [vmem:[#allocation5 + $0xc48] sm:$0xff]
    %v459 = vld [vmem:[#allocation5 + $0xc50] sm:$0xff]
    %v460 = vld [vmem:[#allocation5 + $0xc58] sm:$0xff]
    %v461 = vld [vmem:[#allocation5 + $0xc60] sm:$0xff]
    %v462 = vld [vmem:[#allocation5 + $0xc68] sm:$0xff]
    %v463 = vld [vmem:[#allocation5 + $0xc70] sm:$0xff]
    %v464 = vld [vmem:[#allocation5 + $0xc78] sm:$0xff]
    %v465 = vld [vmem:[#allocation5 + $0xc80] sm:$0xff]
    %v466 = vld [vmem:[#allocation5 + $0xc88] sm:$0xff]
    %v467 = vld [vmem:[#allocation5 + $0xc90] sm:$0xff]
    %v468 = vld [vmem:[#allocation5 + $0xc98] sm:$0xff]
    %v469 = vld [vmem:[#allocation5 + $0xca0] sm:$0xff]
    %v470 = vld [vmem:[#allocation5 + $0xca8] sm:$0xff]
    %v471 = vld [vmem:[#allocation5 + $0xcb0] sm:$0xff]
    %v472 = vld [vmem:[#allocation5 + $0xcb8] sm:$0xff]
    %v473 = vld [vmem:[#allocation5 + $0xcc0] sm:$0xff]
    %v474 = vld [vmem:[#allocation5 + $0xcc8] sm:$0xff]
    %v475 = vld [vmem:[#allocation5 + $0xcd0] sm:$0xff]
    %v476 = vld [vmem:[#allocation5 + $0xcd8] sm:$0xff]
    %v477 = vld [vmem:[#allocation5 + $0xce0] sm:$0xff]
    %v478 = vld [vmem:[#allocation5 + $0xce8] sm:$0xff]
    %v479 = vld [vmem:[#allocation5 + $0xcf0] sm:$0xff]
    %v480 = vld [vmem:[#allocation5 + $0xcf8] sm:$0xff]
    %v481 = vld [vmem:[#allocation5 + $0xd00] sm:$0xff]
    %v482 = vld [vmem:[#allocation5 + $0xd08] sm:$0xff]
    %v483 = vld [vmem:[#allocation5 + $0xd10] sm:$0xff]
    %v484 = vld [vmem:[#allocation5 + $0xd18] sm:$0xff]
    %v485 = vld [vmem:[#allocation5 + $0xd20] sm:$0xff]
    %v486 = vld [vmem:[#allocation5 + $0xd28] sm:$0xff]
    %v487 = vld [vmem:[#allocation5 + $0xd30] sm:$0xff]
    %v488 = vld [vmem:[#allocation5 + $0xd38] sm:$0xff]
    %v489 = vld [vmem:[#allocation5 + $0xd40] sm:$0xff]
    %v490 = vld [vmem:[#allocation5 + $0xd48] sm:$0xff]
    %v491 = vld [vmem:[#allocation5 + $0xd50] sm:$0xff]
    %v492 = vld [vmem:[#allocation5 + $0xd58] sm:$0xff]
    %v493 = vld [vmem:[#allocation5 + $0xd60] sm:$0xff]
    %v494 = vld [vmem:[#allocation5 + $0xd68] sm:$0xff]
    %v495 = vld [vmem:[#allocation5 + $0xd70] sm:$0xff]
    %v496 = vld [vmem:[#allocation5 + $0xd78] sm:$0xff]
    %v497 = vld [vmem:[#allocation5 + $0xd80] sm:$0xff]
    %v498 = vld [vmem:[#allocation5 + $0xd88] sm:$0xff]
    %v499 = vld [vmem:[#allocation5 + $0xd90] sm:$0xff]
    %v500 = vld [vmem:[#allocation5 + $0xd98] sm:$0xff]
    %v501 = vld [vmem:[#allocation5 + $0xda0] sm:$0xff]
    %v502 = vld [vmem:[#allocation5 + $0xda8] sm:$0xff]
    %v503 = vld [vmem:[#allocation5 + $0xdb0] sm:$0xff]
    %v504 = vld [vmem:[#allocation5 + $0xdb8] sm:$0xff]
    %v505 = vld [vmem:[#allocation5 + $0xdc0] sm:$0xff]
    %v506 = vld [vmem:[#allocation5 + $0xdc8] sm:$0xff]
    %v507 = vld [vmem:[#allocation5 + $0xdd0] sm:$0xff]
    %v508 = vld [vmem:[#allocation5 + $0xdd8] sm:$0xff]
    %v509 = vld [vmem:[#allocation5 + $0xde0] sm:$0xff]
    %v510 = vld [vmem:[#allocation5 + $0xde8] sm:$0xff]
    %v511 = vld [vmem:[#allocation5 + $0xdf0] sm:$0xff]
    %v512 = vld [vmem:[#allocation5 + $0xdf8] sm:$0xff]
    %v513 = vld [vmem:[#allocation5 + $0xe00] sm:$0xff]
    %v514 = vld [vmem:[#allocation5 + $0xe08] sm:$0xff]
    %v515 = vld [vmem:[#allocation5 + $0xe10] sm:$0xff]
    %v516 = vld [vmem:[#allocation5 + $0xe18] sm:$0xff]
    %v517 = vld [vmem:[#allocation5 + $0xe20] sm:$0xff]
    %v518 = vld [vmem:[#allocation5 + $0xe28] sm:$0xff]
    %v519 = vld [vmem:[#allocation5 + $0xe30] sm:$0xff]
    %v520 = vld [vmem:[#allocation5 + $0xe38] sm:$0xff]
    %v521 = vld [vmem:[#allocation5 + $0xe40] sm:$0xff]
    %v522 = vld [vmem:[#allocation5 + $0xe48] sm:$0xff]
    %v523 = vld [vmem:[#allocation5 + $0xe50] sm:$0xff]
    %v524 = vld [vmem:[#allocation5 + $0xe58] sm:$0xff]
    %v525 = vld [vmem:[#allocation5 + $0xe60] sm:$0xff]
    %v526 = vld [vmem:[#allocation5 + $0xe68] sm:$0xff]
    %v527 = vld [vmem:[#allocation5 + $0xe70] sm:$0xff]
    %v528 = vld [vmem:[#allocation5 + $0xe78] sm:$0xff]
    %v529 = vld [vmem:[#allocation5 + $0xe80] sm:$0xff]
    %v530 = vld [vmem:[#allocation5 + $0xe88] sm:$0xff]
    %v531 = vld [vmem:[#allocation5 + $0xe90] sm:$0xff]
    %v532 = vld [vmem:[#allocation5 + $0xe98] sm:$0xff]
    %v533 = vld [vmem:[#allocation5 + $0xea0] sm:$0xff]
    %v534 = vld [vmem:[#allocation5 + $0xea8] sm:$0xff]
    %v535 = vld [vmem:[#allocation5 + $0xeb0] sm:$0xff]
    %v536 = vld [vmem:[#allocation5 + $0xeb8] sm:$0xff]
    %v537 = vld [vmem:[#allocation5 + $0xec0] sm:$0xff]
    %v538 = vld [vmem:[#allocation5 + $0xec8] sm:$0xff]
    %v539 = vld [vmem:[#allocation5 + $0xed0] sm:$0xff]
    %v540 = vld [vmem:[#allocation5 + $0xed8] sm:$0xff]
    %v541 = vld [vmem:[#allocation5 + $0xee0] sm:$0xff]
    %v542 = vld [vmem:[#allocation5 + $0xee8] sm:$0xff]
    %v543 = vld [vmem:[#allocation5 + $0xef0] sm:$0xff]
    %v544 = vld [vmem:[#allocation5 + $0xef8] sm:$0xff]
    %v545 = vld [vmem:[#allocation5 + $0xf00] sm:$0xff]
    %v546 = vld [vmem:[#allocation5 + $0xf08] sm:$0xff]
    %v547 = vld [vmem:[#allocation5 + $0xf10] sm:$0xff]
    %v548 = vld [vmem:[#allocation5 + $0xf18] sm:$0xff]
    %v549 = vld [vmem:[#allocation5 + $0xf20] sm:$0xff]
    %v550 = vld [vmem:[#allocation5 + $0xf28] sm:$0xff]
    %v551 = vld [vmem:[#allocation5 + $0xf30] sm:$0xff]
    %v552 = vld [vmem:[#allocation5 + $0xf38] sm:$0xff]
    %v553 = vld [vmem:[#allocation5 + $0xf40] sm:$0xff]
    %v554 = vld [vmem:[#allocation5 + $0xf48] sm:$0xff]
    %v555 = vld [vmem:[#allocation5 + $0xf50] sm:$0xff]
    %v556 = vld [vmem:[#allocation5 + $0xf58] sm:$0xff]
    %v557 = vld [vmem:[#allocation5 + $0xf60] sm:$0xff]
    %v558 = vld [vmem:[#allocation5 + $0xf68] sm:$0xff]
    %v559 = vld [vmem:[#allocation5 + $0xf70] sm:$0xff]
    %v560 = vld [vmem:[#allocation5 + $0xf78] sm:$0xff]
    %v561 = vld [vmem:[#allocation5 + $0xf80] sm:$0xff]
    %v562 = vld [vmem:[#allocation5 + $0xf88] sm:$0xff]
    %v563 = vld [vmem:[#allocation5 + $0xf90] sm:$0xff]
    %v564 = vld [vmem:[#allocation5 + $0xf98] sm:$0xff]
    %v565 = vld [vmem:[#allocation5 + $0xfa0] sm:$0xff]
    %v566 = vld [vmem:[#allocation5 + $0xfa8] sm:$0xff]
    %v567 = vld [vmem:[#allocation5 + $0xfb0] sm:$0xff]
    %v568 = vld [vmem:[#allocation5 + $0xfb8] sm:$0xff]
    %v569 = vld [vmem:[#allocation5 + $0xfc0] sm:$0xff]
    %v570 = vld [vmem:[#allocation5 + $0xfc8] sm:$0xff]
    %v571 = vld [vmem:[#allocation5 + $0xfd0] sm:$0xff]
    %v572 = vld [vmem:[#allocation5 + $0xfd8] sm:$0xff]
    %v573 = vld [vmem:[#allocation5 + $0xfe0] sm:$0xff]
    %v574 = vld [vmem:[#allocation5 + $0xfe8] sm:$0xff]
    %v575 = vld [vmem:[#allocation5 + $0xff0] sm:$0xff]
    %v576 = vld [vmem:[#allocation5 + $0xff8] sm:$0xff]
    %s577 = sadd.s32 0, 0
    %s578 = smul.u32 %s577, 1024
    %s579 = sshra.s32 %s578, 7
    %s580 = sand.u32 %s578, 127
    %s581 = scalar_lea.vmem [#allocation3], %s579
    %v582 = vld [vmem:[%s581] sm:$0xff]
    %v583 = vunpack.c.l.bf16 %v582
    %v584 = vunpack.c.h.bf16 %v582
    %s585 = scalar_lea.vmem [#allocation7], %s579
    %v586 = vld [vmem:[%s585] sm:$0xff]
    %v587 = vld [vmem:[#allocation2] sm:$0xff]
    %v588 = vld [vmem:[#allocation2 + $0x8] sm:$0xff]
    %v590 = vlaneseq
    %v591 = vshrl.u32 %v590, 7
    %v592 = vsub.s32 0, %v591
    %v593 = vrot.slane %v586, %v592
    %v594 = vlaneseq
    %v595 = vshrl.u32 %v594, 7
    %v596 = vsub.s32 1, %v595
    %v597 = vrot.slane %v586, %v596
    %v598 = vlaneseq
    %v599 = vshrl.u32 %v598, 7
    %v600 = vsub.s32 2, %v599
    %v601 = vrot.slane %v586, %v600
    %v602 = vlaneseq
    %v603 = vshrl.u32 %v602, 7
    %v604 = vsub.s32 3, %v603
    %v605 = vrot.slane %v586, %v604
    %v606 = vlaneseq
    %v607 = vshrl.u32 %v606, 7
    %v608 = vsub.s32 4, %v607
    %v609 = vrot.slane %v586, %v608
    %v610 = vlaneseq
    %v611 = vshrl.u32 %v610, 7
    %v612 = vsub.s32 5, %v611
    %v613 = vrot.slane %v586, %v612
    %v614 = vlaneseq
    %v615 = vshrl.u32 %v614, 7
    %v616 = vsub.s32 6, %v615
    %v617 = vrot.slane %v586, %v616
    %v618 = vlaneseq
    %v619 = vshrl.u32 %v618, 7
    %v620 = vsub.s32 7, %v619
    %v621 = vrot.slane %v586, %v620
    %v631 = vcombine.high %v64, %v64
    %v633 = vunpack.c.l.s4 1966171168
    %v634 = vunpack.c.0.s8 %v633
    %v635 = vlaneseq
    %v636 = vshrl.u32 %v635, 7
    %v637 = vsub.s32 %v634, %v636
    %v638 = vrot.slane %v64, %v637
    %v640 = vunpack.c.l.s4 1966171168
    %v641 = vunpack.c.0.s8 %v640
    %v642 = vlaneseq
    %v643 = vshrl.u32 %v642, 7
    %v644 = vsub.s32 %v641, %v643
    %v645 = vrot.slane %v631, %v644
    %v646 = vcombine.high %v638, %v638
    %v647 = vcombine.high %v645, %v645
    %v649 = vunpack.c.l.s4 1966171168
    %v650 = vunpack.c.0.s8 %v649
    %v651 = vlaneseq
    %v652 = vshrl.u32 %v651, 7
    %v653 = vsub.s32 %v650, %v652
    %v654 = vrot.slane %v638, %v653
    %v656 = vunpack.c.l.s4 1966171168
    %v657 = vunpack.c.0.s8 %v656
    %v658 = vlaneseq
    %v659 = vshrl.u32 %v658, 7
    %v660 = vsub.s32 %v657, %v659
    %v661 = vrot.slane %v645, %v660
    %v663 = vunpack.c.l.s4 1966171168
    %v664 = vunpack.c.0.s8 %v663
    %v665 = vlaneseq
    %v666 = vshrl.u32 %v665, 7
    %v667 = vsub.s32 %v664, %v666
    %v668 = vrot.slane %v646, %v667
    %v670 = vunpack.c.l.s4 1966171168
    %v671 = vunpack.c.0.s8 %v670
    %v672 = vlaneseq
    %v673 = vshrl.u32 %v672, 7
    %v674 = vsub.s32 %v671, %v673
    %v675 = vrot.slane %v647, %v674
    %v676 = vcombine.high %v654, %v654
    %v677 = vcombine.high %v661, %v661
    %v678 = vcombine.high %v668, %v668
    %v679 = vcombine.high %v675, %v675
    %v1200 = vunpack.c.l.b16 %v65
    %v1201 = vunpack.c.h.b16 %v65
    %v1202 = vunpack.c.l.b16 %v66
    %v1203 = vunpack.c.h.b16 %v66
    %v1204 = vunpack.c.l.b16 %v67
    %v1205 = vunpack.c.h.b16 %v67
    %v1206 = vunpack.c.l.b16 %v68
    %v1207 = vunpack.c.h.b16 %v68
    %v1208 = vunpack.c.l.b16 %v69
    %v1209 = vunpack.c.h.b16 %v69
    %v1210 = vunpack.c.l.b16 %v70
    %v1211 = vunpack.c.h.b16 %v70
    %v1212 = vunpack.c.l.b16 %v71
    %v1213 = vunpack.c.h.b16 %v71
    %v1214 = vunpack.c.l.b16 %v72
    %v1215 = vunpack.c.h.b16 %v72
    %v1216 = vunpack.c.l.b16 %v73
    %v1217 = vunpack.c.h.b16 %v73
    %v1218 = vunpack.c.l.b16 %v74
    %v1219 = vunpack.c.h.b16 %v74
    %v1220 = vunpack.c.l.b16 %v75
    %v1221 = vunpack.c.h.b16 %v75
    %v1222 = vunpack.c.l.b16 %v76
    %v1223 = vunpack.c.h.b16 %v76
    %v1224 = vunpack.c.l.b16 %v77
    %v1225 = vunpack.c.h.b16 %v77
    %v1226 = vunpack.c.l.b16 %v78
    %v1227 = vunpack.c.h.b16 %v78
    %v1228 = vunpack.c.l.b16 %v79
    %v1229 = vunpack.c.h.b16 %v79
    %v1230 = vunpack.c.l.b16 %v80
    %v1231 = vunpack.c.h.b16 %v80
    %v1232 = vunpack.c.l.b16 %v81
    %v1233 = vunpack.c.h.b16 %v81
    %v1234 = vunpack.c.l.b16 %v82
    %v1235 = vunpack.c.h.b16 %v82
    %v1236 = vunpack.c.l.b16 %v83
    %v1237 = vunpack.c.h.b16 %v83
    %v1238 = vunpack.c.l.b16 %v84
    %v1239 = vunpack.c.h.b16 %v84
    %v1240 = vunpack.c.l.b16 %v85
    %v1241 = vunpack.c.h.b16 %v85
    %v1242 = vunpack.c.l.b16 %v86
    %v1243 = vunpack.c.h.b16 %v86
    %v1244 = vunpack.c.l.b16 %v87
    %v1245 = vunpack.c.h.b16 %v87
    %v1246 = vunpack.c.l.b16 %v88
    %v1247 = vunpack.c.h.b16 %v88
    %v1248 = vunpack.c.l.b16 %v89
    %v1249 = vunpack.c.h.b16 %v89
    %v1250 = vunpack.c.l.b16 %v90
    %v1251 = vunpack.c.h.b16 %v90
    %v1252 = vunpack.c.l.b16 %v91
    %v1253 = vunpack.c.h.b16 %v91
    %v1254 = vunpack.c.l.b16 %v92
    %v1255 = vunpack.c.h.b16 %v92
    %v1256 = vunpack.c.l.b16 %v93
    %v1257 = vunpack.c.h.b16 %v93
    %v1258 = vunpack.c.l.b16 %v94
    %v1259 = vunpack.c.h.b16 %v94
    %v1260 = vunpack.c.l.b16 %v95
    %v1261 = vunpack.c.h.b16 %v95
    %v1262 = vunpack.c.l.b16 %v96
    %v1263 = vunpack.c.h.b16 %v96
    %v1264 = vunpack.c.l.b16 %v97
    %v1265 = vunpack.c.h.b16 %v97
    %v1266 = vunpack.c.l.b16 %v98
    %v1267 = vunpack.c.h.b16 %v98
    %v1268 = vunpack.c.l.b16 %v99
    %v1269 = vunpack.c.h.b16 %v99
    %v1270 = vunpack.c.l.b16 %v100
    %v1271 = vunpack.c.h.b16 %v100
    %v1272 = vunpack.c.l.b16 %v101
    %v1273 = vunpack.c.h.b16 %v101
    %v1274 = vunpack.c.l.b16 %v102
    %v1275 = vunpack.c.h.b16 %v102
    %v1276 = vunpack.c.l.b16 %v103
    %v1277 = vunpack.c.h.b16 %v103
    %v1278 = vunpack.c.l.b16 %v104
    %v1279 = vunpack.c.h.b16 %v104
    %v1280 = vunpack.c.l.b16 %v105
    %v1281 = vunpack.c.h.b16 %v105
    %v1282 = vunpack.c.l.b16 %v106
    %v1283 = vunpack.c.h.b16 %v106
    %v1284 = vunpack.c.l.b16 %v107
    %v1285 = vunpack.c.h.b16 %v107
    %v1286 = vunpack.c.l.b16 %v108
    %v1287 = vunpack.c.h.b16 %v108
    %v1288 = vunpack.c.l.b16 %v109
    %v1289 = vunpack.c.h.b16 %v109
    %v1290 = vunpack.c.l.b16 %v110
    %v1291 = vunpack.c.h.b16 %v110
    %v1292 = vunpack.c.l.b16 %v111
    %v1293 = vunpack.c.h.b16 %v111
    %v1294 = vunpack.c.l.b16 %v112
    %v1295 = vunpack.c.h.b16 %v112
    %v1296 = vunpack.c.l.b16 %v113
    %v1297 = vunpack.c.h.b16 %v113
    %v1298 = vunpack.c.l.b16 %v114
    %v1299 = vunpack.c.h.b16 %v114
    %v1300 = vunpack.c.l.b16 %v115
    %v1301 = vunpack.c.h.b16 %v115
    %v1302 = vunpack.c.l.b16 %v116
    %v1303 = vunpack.c.h.b16 %v116
    %v1304 = vunpack.c.l.b16 %v117
    %v1305 = vunpack.c.h.b16 %v117
    %v1306 = vunpack.c.l.b16 %v118
    %v1307 = vunpack.c.h.b16 %v118
    %v1308 = vunpack.c.l.b16 %v119
    %v1309 = vunpack.c.h.b16 %v119
    %v1310 = vunpack.c.l.b16 %v120
    %v1311 = vunpack.c.h.b16 %v120
    %v1312 = vunpack.c.l.b16 %v121
    %v1313 = vunpack.c.h.b16 %v121
    %v1314 = vunpack.c.l.b16 %v122
    %v1315 = vunpack.c.h.b16 %v122
    %v1316 = vunpack.c.l.b16 %v123
    %v1317 = vunpack.c.h.b16 %v123
    %v1318 = vunpack.c.l.b16 %v124
    %v1319 = vunpack.c.h.b16 %v124
    %v1320 = vunpack.c.l.b16 %v125
    %v1321 = vunpack.c.h.b16 %v125
    %v1322 = vunpack.c.l.b16 %v126
    %v1323 = vunpack.c.h.b16 %v126
    %v1324 = vunpack.c.l.b16 %v127
    %v1325 = vunpack.c.h.b16 %v127
    %v1326 = vunpack.c.l.b16 %v128
    %v1327 = vunpack.c.h.b16 %v128
    %v1328 = vunpack.c.l.b16 %v129
    %v1329 = vunpack.c.h.b16 %v129
    %v1330 = vunpack.c.l.b16 %v130
    %v1331 = vunpack.c.h.b16 %v130
    %v1332 = vunpack.c.l.b16 %v131
    %v1333 = vunpack.c.h.b16 %v131
    %v1334 = vunpack.c.l.b16 %v132
    %v1335 = vunpack.c.h.b16 %v132
    %v1336 = vunpack.c.l.b16 %v133
    %v1337 = vunpack.c.h.b16 %v133
    %v1338 = vunpack.c.l.b16 %v134
    %v1339 = vunpack.c.h.b16 %v134
    %v1340 = vunpack.c.l.b16 %v135
    %v1341 = vunpack.c.h.b16 %v135
    %v1342 = vunpack.c.l.b16 %v136
    %v1343 = vunpack.c.h.b16 %v136
    %v1344 = vunpack.c.l.b16 %v137
    %v1345 = vunpack.c.h.b16 %v137
    %v1346 = vunpack.c.l.b16 %v138
    %v1347 = vunpack.c.h.b16 %v138
    %v1348 = vunpack.c.l.b16 %v139
    %v1349 = vunpack.c.h.b16 %v139
    %v1350 = vunpack.c.l.b16 %v140
    %v1351 = vunpack.c.h.b16 %v140
    %v1352 = vunpack.c.l.b16 %v141
    %v1353 = vunpack.c.h.b16 %v141
    %v1354 = vunpack.c.l.b16 %v142
    %v1355 = vunpack.c.h.b16 %v142
    %v1356 = vunpack.c.l.b16 %v143
    %v1357 = vunpack.c.h.b16 %v143
    %v1358 = vunpack.c.l.b16 %v144
    %v1359 = vunpack.c.h.b16 %v144
    %v1360 = vunpack.c.l.b16 %v145
    %v1361 = vunpack.c.h.b16 %v145
    %v1362 = vunpack.c.l.b16 %v146
    %v1363 = vunpack.c.h.b16 %v146
    %v1364 = vunpack.c.l.b16 %v147
    %v1365 = vunpack.c.h.b16 %v147
    %v1366 = vunpack.c.l.b16 %v148
    %v1367 = vunpack.c.h.b16 %v148
    %v1368 = vunpack.c.l.b16 %v149
    %v1369 = vunpack.c.h.b16 %v149
    %v1370 = vunpack.c.l.b16 %v150
    %v1371 = vunpack.c.h.b16 %v150
    %v1372 = vunpack.c.l.b16 %v151
    %v1373 = vunpack.c.h.b16 %v151
    %v1374 = vunpack.c.l.b16 %v152
    %v1375 = vunpack.c.h.b16 %v152
    %v1376 = vunpack.c.l.b16 %v153
    %v1377 = vunpack.c.h.b16 %v153
    %v1378 = vunpack.c.l.b16 %v154
    %v1379 = vunpack.c.h.b16 %v154
    %v1380 = vunpack.c.l.b16 %v155
    %v1381 = vunpack.c.h.b16 %v155
    %v1382 = vunpack.c.l.b16 %v156
    %v1383 = vunpack.c.h.b16 %v156
    %v1384 = vunpack.c.l.b16 %v157
    %v1385 = vunpack.c.h.b16 %v157
    %v1386 = vunpack.c.l.b16 %v158
    %v1387 = vunpack.c.h.b16 %v158
    %v1388 = vunpack.c.l.b16 %v159
    %v1389 = vunpack.c.h.b16 %v159
    %v1390 = vunpack.c.l.b16 %v160
    %v1391 = vunpack.c.h.b16 %v160
    %v1392 = vunpack.c.l.b16 %v161
    %v1393 = vunpack.c.h.b16 %v161
    %v1394 = vunpack.c.l.b16 %v162
    %v1395 = vunpack.c.h.b16 %v162
    %v1396 = vunpack.c.l.b16 %v163
    %v1397 = vunpack.c.h.b16 %v163
    %v1398 = vunpack.c.l.b16 %v164
    %v1399 = vunpack.c.h.b16 %v164
    %v1400 = vunpack.c.l.b16 %v165
    %v1401 = vunpack.c.h.b16 %v165
    %v1402 = vunpack.c.l.b16 %v166
    %v1403 = vunpack.c.h.b16 %v166
    %v1404 = vunpack.c.l.b16 %v167
    %v1405 = vunpack.c.h.b16 %v167
    %v1406 = vunpack.c.l.b16 %v168
    %v1407 = vunpack.c.h.b16 %v168
    %v1408 = vunpack.c.l.b16 %v169
    %v1409 = vunpack.c.h.b16 %v169
    %v1410 = vunpack.c.l.b16 %v170
    %v1411 = vunpack.c.h.b16 %v170
    %v1412 = vunpack.c.l.b16 %v171
    %v1413 = vunpack.c.h.b16 %v171
    %v1414 = vunpack.c.l.b16 %v172
    %v1415 = vunpack.c.h.b16 %v172
    %v1416 = vunpack.c.l.b16 %v173
    %v1417 = vunpack.c.h.b16 %v173
    %v1418 = vunpack.c.l.b16 %v174
    %v1419 = vunpack.c.h.b16 %v174
    %v1420 = vunpack.c.l.b16 %v175
    %v1421 = vunpack.c.h.b16 %v175
    %v1422 = vunpack.c.l.b16 %v176
    %v1423 = vunpack.c.h.b16 %v176
    %v1424 = vunpack.c.l.b16 %v177
    %v1425 = vunpack.c.h.b16 %v177
    %v1426 = vunpack.c.l.b16 %v178
    %v1427 = vunpack.c.h.b16 %v178
    %v1428 = vunpack.c.l.b16 %v179
    %v1429 = vunpack.c.h.b16 %v179
    %v1430 = vunpack.c.l.b16 %v180
    %v1431 = vunpack.c.h.b16 %v180
    %v1432 = vunpack.c.l.b16 %v181
    %v1433 = vunpack.c.h.b16 %v181
    %v1434 = vunpack.c.l.b16 %v182
    %v1435 = vunpack.c.h.b16 %v182
    %v1436 = vunpack.c.l.b16 %v183
    %v1437 = vunpack.c.h.b16 %v183
    %v1438 = vunpack.c.l.b16 %v184
    %v1439 = vunpack.c.h.b16 %v184
    %v1440 = vunpack.c.l.b16 %v185
    %v1441 = vunpack.c.h.b16 %v185
    %v1442 = vunpack.c.l.b16 %v186
    %v1443 = vunpack.c.h.b16 %v186
    %v1444 = vunpack.c.l.b16 %v187
    %v1445 = vunpack.c.h.b16 %v187
    %v1446 = vunpack.c.l.b16 %v188
    %v1447 = vunpack.c.h.b16 %v188
    %v1448 = vunpack.c.l.b16 %v189
    %v1449 = vunpack.c.h.b16 %v189
    %v1450 = vunpack.c.l.b16 %v190
    %v1451 = vunpack.c.h.b16 %v190
    %v1452 = vunpack.c.l.b16 %v191
    %v1453 = vunpack.c.h.b16 %v191
    %v1454 = vunpack.c.l.b16 %v192
    %v1455 = vunpack.c.h.b16 %v192
    %v1456 = vunpack.c.l.b16 %v193
    %v1457 = vunpack.c.h.b16 %v193
    %v1458 = vunpack.c.l.b16 %v194
    %v1459 = vunpack.c.h.b16 %v194
    %v1460 = vunpack.c.l.b16 %v195
    %v1461 = vunpack.c.h.b16 %v195
    %v1462 = vunpack.c.l.b16 %v196
    %v1463 = vunpack.c.h.b16 %v196
    %v1464 = vunpack.c.l.b16 %v197
    %v1465 = vunpack.c.h.b16 %v197
    %v1466 = vunpack.c.l.b16 %v198
    %v1467 = vunpack.c.h.b16 %v198
    %v1468 = vunpack.c.l.b16 %v199
    %v1469 = vunpack.c.h.b16 %v199
    %v1470 = vunpack.c.l.b16 %v200
    %v1471 = vunpack.c.h.b16 %v200
    %v1472 = vunpack.c.l.b16 %v201
    %v1473 = vunpack.c.h.b16 %v201
    %v1474 = vunpack.c.l.b16 %v202
    %v1475 = vunpack.c.h.b16 %v202
    %v1476 = vunpack.c.l.b16 %v203
    %v1477 = vunpack.c.h.b16 %v203
    %v1478 = vunpack.c.l.b16 %v204
    %v1479 = vunpack.c.h.b16 %v204
    %v1480 = vunpack.c.l.b16 %v205
    %v1481 = vunpack.c.h.b16 %v205
    %v1482 = vunpack.c.l.b16 %v206
    %v1483 = vunpack.c.h.b16 %v206
    %v1484 = vunpack.c.l.b16 %v207
    %v1485 = vunpack.c.h.b16 %v207
    %v1486 = vunpack.c.l.b16 %v208
    %v1487 = vunpack.c.h.b16 %v208
    %v1488 = vunpack.c.l.b16 %v209
    %v1489 = vunpack.c.h.b16 %v209
    %v1490 = vunpack.c.l.b16 %v210
    %v1491 = vunpack.c.h.b16 %v210
    %v1492 = vunpack.c.l.b16 %v211
    %v1493 = vunpack.c.h.b16 %v211
    %v1494 = vunpack.c.l.b16 %v212
    %v1495 = vunpack.c.h.b16 %v212
    %v1496 = vunpack.c.l.b16 %v213
    %v1497 = vunpack.c.h.b16 %v213
    %v1498 = vunpack.c.l.b16 %v214
    %v1499 = vunpack.c.h.b16 %v214
    %v1500 = vunpack.c.l.b16 %v215
    %v1501 = vunpack.c.h.b16 %v215
    %v1502 = vunpack.c.l.b16 %v216
    %v1503 = vunpack.c.h.b16 %v216
    %v1504 = vunpack.c.l.b16 %v217
    %v1505 = vunpack.c.h.b16 %v217
    %v1506 = vunpack.c.l.b16 %v218
    %v1507 = vunpack.c.h.b16 %v218
    %v1508 = vunpack.c.l.b16 %v219
    %v1509 = vunpack.c.h.b16 %v219
    %v1510 = vunpack.c.l.b16 %v220
    %v1511 = vunpack.c.h.b16 %v220
    %v1512 = vunpack.c.l.b16 %v221
    %v1513 = vunpack.c.h.b16 %v221
    %v1514 = vunpack.c.l.b16 %v222
    %v1515 = vunpack.c.h.b16 %v222
    %v1516 = vunpack.c.l.b16 %v223
    %v1517 = vunpack.c.h.b16 %v223
    %v1518 = vunpack.c.l.b16 %v224
    %v1519 = vunpack.c.h.b16 %v224
    %v1520 = vunpack.c.l.b16 %v225
    %v1521 = vunpack.c.h.b16 %v225
    %v1522 = vunpack.c.l.b16 %v226
    %v1523 = vunpack.c.h.b16 %v226
    %v1524 = vunpack.c.l.b16 %v227
    %v1525 = vunpack.c.h.b16 %v227
    %v1526 = vunpack.c.l.b16 %v228
    %v1527 = vunpack.c.h.b16 %v228
    %v1528 = vunpack.c.l.b16 %v229
    %v1529 = vunpack.c.h.b16 %v229
    %v1530 = vunpack.c.l.b16 %v230
    %v1531 = vunpack.c.h.b16 %v230
    %v1532 = vunpack.c.l.b16 %v231
    %v1533 = vunpack.c.h.b16 %v231
    %v1534 = vunpack.c.l.b16 %v232
    %v1535 = vunpack.c.h.b16 %v232
    %v1536 = vunpack.c.l.b16 %v233
    %v1537 = vunpack.c.h.b16 %v233
    %v1538 = vunpack.c.l.b16 %v234
    %v1539 = vunpack.c.h.b16 %v234
    %v1540 = vunpack.c.l.b16 %v235
    %v1541 = vunpack.c.h.b16 %v235
    %v1542 = vunpack.c.l.b16 %v236
    %v1543 = vunpack.c.h.b16 %v236
    %v1544 = vunpack.c.l.b16 %v237
    %v1545 = vunpack.c.h.b16 %v237
    %v1546 = vunpack.c.l.b16 %v238
    %v1547 = vunpack.c.h.b16 %v238
    %v1548 = vunpack.c.l.b16 %v239
    %v1549 = vunpack.c.h.b16 %v239
    %v1550 = vunpack.c.l.b16 %v240
    %v1551 = vunpack.c.h.b16 %v240
    %v1552 = vunpack.c.l.b16 %v241
    %v1553 = vunpack.c.h.b16 %v241
    %v1554 = vunpack.c.l.b16 %v242
    %v1555 = vunpack.c.h.b16 %v242
    %v1556 = vunpack.c.l.b16 %v243
    %v1557 = vunpack.c.h.b16 %v243
    %v1558 = vunpack.c.l.b16 %v244
    %v1559 = vunpack.c.h.b16 %v244
    %v1560 = vunpack.c.l.b16 %v245
    %v1561 = vunpack.c.h.b16 %v245
    %v1562 = vunpack.c.l.b16 %v246
    %v1563 = vunpack.c.h.b16 %v246
    %v1564 = vunpack.c.l.b16 %v247
    %v1565 = vunpack.c.h.b16 %v247
    %v1566 = vunpack.c.l.b16 %v248
    %v1567 = vunpack.c.h.b16 %v248
    %v1568 = vunpack.c.l.b16 %v249
    %v1569 = vunpack.c.h.b16 %v249
    %v1570 = vunpack.c.l.b16 %v250
    %v1571 = vunpack.c.h.b16 %v250
    %v1572 = vunpack.c.l.b16 %v251
    %v1573 = vunpack.c.h.b16 %v251
    %v1574 = vunpack.c.l.b16 %v252
    %v1575 = vunpack.c.h.b16 %v252
    %v1576 = vunpack.c.l.b16 %v253
    %v1577 = vunpack.c.h.b16 %v253
    %v1578 = vunpack.c.l.b16 %v254
    %v1579 = vunpack.c.h.b16 %v254
    %v1580 = vunpack.c.l.b16 %v255
    %v1581 = vunpack.c.h.b16 %v255
    %v1582 = vunpack.c.l.b16 %v256
    %v1583 = vunpack.c.h.b16 %v256
    %v1584 = vunpack.c.l.b16 %v257
    %v1585 = vunpack.c.h.b16 %v257
    %v1586 = vunpack.c.l.b16 %v258
    %v1587 = vunpack.c.h.b16 %v258
    %v1588 = vunpack.c.l.b16 %v259
    %v1589 = vunpack.c.h.b16 %v259
    %v1590 = vunpack.c.l.b16 %v260
    %v1591 = vunpack.c.h.b16 %v260
    %v1592 = vunpack.c.l.b16 %v261
    %v1593 = vunpack.c.h.b16 %v261
    %v1594 = vunpack.c.l.b16 %v262
    %v1595 = vunpack.c.h.b16 %v262
    %v1596 = vunpack.c.l.b16 %v263
    %v1597 = vunpack.c.h.b16 %v263
    %v1598 = vunpack.c.l.b16 %v264
    %v1599 = vunpack.c.h.b16 %v264
    %v1600 = vunpack.c.l.b16 %v265
    %v1601 = vunpack.c.h.b16 %v265
    %v1602 = vunpack.c.l.b16 %v266
    %v1603 = vunpack.c.h.b16 %v266
    %v1604 = vunpack.c.l.b16 %v267
    %v1605 = vunpack.c.h.b16 %v267
    %v1606 = vunpack.c.l.b16 %v268
    %v1607 = vunpack.c.h.b16 %v268
    %v1608 = vunpack.c.l.b16 %v269
    %v1609 = vunpack.c.h.b16 %v269
    %v1610 = vunpack.c.l.b16 %v270
    %v1611 = vunpack.c.h.b16 %v270
    %v1612 = vunpack.c.l.b16 %v271
    %v1613 = vunpack.c.h.b16 %v271
    %v1614 = vunpack.c.l.b16 %v272
    %v1615 = vunpack.c.h.b16 %v272
    %v1616 = vunpack.c.l.b16 %v273
    %v1617 = vunpack.c.h.b16 %v273
    %v1618 = vunpack.c.l.b16 %v274
    %v1619 = vunpack.c.h.b16 %v274
    %v1620 = vunpack.c.l.b16 %v275
    %v1621 = vunpack.c.h.b16 %v275
    %v1622 = vunpack.c.l.b16 %v276
    %v1623 = vunpack.c.h.b16 %v276
    %v1624 = vunpack.c.l.b16 %v277
    %v1625 = vunpack.c.h.b16 %v277
    %v1626 = vunpack.c.l.b16 %v278
    %v1627 = vunpack.c.h.b16 %v278
    %v1628 = vunpack.c.l.b16 %v279
    %v1629 = vunpack.c.h.b16 %v279
    %v1630 = vunpack.c.l.b16 %v280
    %v1631 = vunpack.c.h.b16 %v280
    %v1632 = vunpack.c.l.b16 %v281
    %v1633 = vunpack.c.h.b16 %v281
    %v1634 = vunpack.c.l.b16 %v282
    %v1635 = vunpack.c.h.b16 %v282
    %v1636 = vunpack.c.l.b16 %v283
    %v1637 = vunpack.c.h.b16 %v283
    %v1638 = vunpack.c.l.b16 %v284
    %v1639 = vunpack.c.h.b16 %v284
    %v1640 = vunpack.c.l.b16 %v285
    %v1641 = vunpack.c.h.b16 %v285
    %v1642 = vunpack.c.l.b16 %v286
    %v1643 = vunpack.c.h.b16 %v286
    %v1644 = vunpack.c.l.b16 %v287
    %v1645 = vunpack.c.h.b16 %v287
    %v1646 = vunpack.c.l.b16 %v288
    %v1647 = vunpack.c.h.b16 %v288
    %v1648 = vunpack.c.l.b16 %v289
    %v1649 = vunpack.c.h.b16 %v289
    %v1650 = vunpack.c.l.b16 %v290
    %v1651 = vunpack.c.h.b16 %v290
    %v1652 = vunpack.c.l.b16 %v291
    %v1653 = vunpack.c.h.b16 %v291
    %v1654 = vunpack.c.l.b16 %v292
    %v1655 = vunpack.c.h.b16 %v292
    %v1656 = vunpack.c.l.b16 %v293
    %v1657 = vunpack.c.h.b16 %v293
    %v1658 = vunpack.c.l.b16 %v294
    %v1659 = vunpack.c.h.b16 %v294
    %v1660 = vunpack.c.l.b16 %v295
    %v1661 = vunpack.c.h.b16 %v295
    %v1662 = vunpack.c.l.b16 %v296
    %v1663 = vunpack.c.h.b16 %v296
    %v1664 = vunpack.c.l.b16 %v297
    %v1665 = vunpack.c.h.b16 %v297
    %v1666 = vunpack.c.l.b16 %v298
    %v1667 = vunpack.c.h.b16 %v298
    %v1668 = vunpack.c.l.b16 %v299
    %v1669 = vunpack.c.h.b16 %v299
    %v1670 = vunpack.c.l.b16 %v300
    %v1671 = vunpack.c.h.b16 %v300
    %v1672 = vunpack.c.l.b16 %v301
    %v1673 = vunpack.c.h.b16 %v301
    %v1674 = vunpack.c.l.b16 %v302
    %v1675 = vunpack.c.h.b16 %v302
    %v1676 = vunpack.c.l.b16 %v303
    %v1677 = vunpack.c.h.b16 %v303
    %v1678 = vunpack.c.l.b16 %v304
    %v1679 = vunpack.c.h.b16 %v304
    %v1680 = vunpack.c.l.b16 %v305
    %v1681 = vunpack.c.h.b16 %v305
    %v1682 = vunpack.c.l.b16 %v306
    %v1683 = vunpack.c.h.b16 %v306
    %v1684 = vunpack.c.l.b16 %v307
    %v1685 = vunpack.c.h.b16 %v307
    %v1686 = vunpack.c.l.b16 %v308
    %v1687 = vunpack.c.h.b16 %v308
    %v1688 = vunpack.c.l.b16 %v309
    %v1689 = vunpack.c.h.b16 %v309
    %v1690 = vunpack.c.l.b16 %v310
    %v1691 = vunpack.c.h.b16 %v310
    %v1692 = vunpack.c.l.b16 %v311
    %v1693 = vunpack.c.h.b16 %v311
    %v1694 = vunpack.c.l.b16 %v312
    %v1695 = vunpack.c.h.b16 %v312
    %v1696 = vunpack.c.l.b16 %v313
    %v1697 = vunpack.c.h.b16 %v313
    %v1698 = vunpack.c.l.b16 %v314
    %v1699 = vunpack.c.h.b16 %v314
    %v1700 = vunpack.c.l.b16 %v315
    %v1701 = vunpack.c.h.b16 %v315
    %v1702 = vunpack.c.l.b16 %v316
    %v1703 = vunpack.c.h.b16 %v316
    %v1704 = vunpack.c.l.b16 %v317
    %v1705 = vunpack.c.h.b16 %v317
    %v1706 = vunpack.c.l.b16 %v318
    %v1707 = vunpack.c.h.b16 %v318
    %v1708 = vunpack.c.l.b16 %v319
    %v1709 = vunpack.c.h.b16 %v319
    %v1710 = vunpack.c.l.b16 %v320
    %v1711 = vunpack.c.h.b16 %v320
    %v1712 = vunpack.c.l.b16 %v321
    %v1713 = vunpack.c.h.b16 %v321
    %v1714 = vunpack.c.l.b16 %v322
    %v1715 = vunpack.c.h.b16 %v322
    %v1716 = vunpack.c.l.b16 %v323
    %v1717 = vunpack.c.h.b16 %v323
    %v1718 = vunpack.c.l.b16 %v324
    %v1719 = vunpack.c.h.b16 %v324
    %v1720 = vunpack.c.l.b16 %v325
    %v1721 = vunpack.c.h.b16 %v325
    %v1722 = vunpack.c.l.b16 %v326
    %v1723 = vunpack.c.h.b16 %v326
    %v1724 = vunpack.c.l.b16 %v327
    %v1725 = vunpack.c.h.b16 %v327
    %v1726 = vunpack.c.l.b16 %v328
    %v1727 = vunpack.c.h.b16 %v328
    %v1728 = vunpack.c.l.b16 %v329
    %v1729 = vunpack.c.h.b16 %v329
    %v1730 = vunpack.c.l.b16 %v330
    %v1731 = vunpack.c.h.b16 %v330
    %v1732 = vunpack.c.l.b16 %v331
    %v1733 = vunpack.c.h.b16 %v331
    %v1734 = vunpack.c.l.b16 %v332
    %v1735 = vunpack.c.h.b16 %v332
    %v1736 = vunpack.c.l.b16 %v333
    %v1737 = vunpack.c.h.b16 %v333
    %v1738 = vunpack.c.l.b16 %v334
    %v1739 = vunpack.c.h.b16 %v334
    %v1740 = vunpack.c.l.b16 %v335
    %v1741 = vunpack.c.h.b16 %v335
    %v1742 = vunpack.c.l.b16 %v336
    %v1743 = vunpack.c.h.b16 %v336
    %v1744 = vunpack.c.l.b16 %v337
    %v1745 = vunpack.c.h.b16 %v337
    %v1746 = vunpack.c.l.b16 %v338
    %v1747 = vunpack.c.h.b16 %v338
    %v1748 = vunpack.c.l.b16 %v339
    %v1749 = vunpack.c.h.b16 %v339
    %v1750 = vunpack.c.l.b16 %v340
    %v1751 = vunpack.c.h.b16 %v340
    %v1752 = vunpack.c.l.b16 %v341
    %v1753 = vunpack.c.h.b16 %v341
    %v1754 = vunpack.c.l.b16 %v342
    %v1755 = vunpack.c.h.b16 %v342
    %v1756 = vunpack.c.l.b16 %v343
    %v1757 = vunpack.c.h.b16 %v343
    %v1758 = vunpack.c.l.b16 %v344
    %v1759 = vunpack.c.h.b16 %v344
    %v1760 = vunpack.c.l.b16 %v345
    %v1761 = vunpack.c.h.b16 %v345
    %v1762 = vunpack.c.l.b16 %v346
    %v1763 = vunpack.c.h.b16 %v346
    %v1764 = vunpack.c.l.b16 %v347
    %v1765 = vunpack.c.h.b16 %v347
    %v1766 = vunpack.c.l.b16 %v348
    %v1767 = vunpack.c.h.b16 %v348
    %v1768 = vunpack.c.l.b16 %v349
    %v1769 = vunpack.c.h.b16 %v349
    %v1770 = vunpack.c.l.b16 %v350
    %v1771 = vunpack.c.h.b16 %v350
    %v1772 = vunpack.c.l.b16 %v351
    %v1773 = vunpack.c.h.b16 %v351
    %v1774 = vunpack.c.l.b16 %v352
    %v1775 = vunpack.c.h.b16 %v352
    %v1776 = vunpack.c.l.b16 %v353
    %v1777 = vunpack.c.h.b16 %v353
    %v1778 = vunpack.c.l.b16 %v354
    %v1779 = vunpack.c.h.b16 %v354
    %v1780 = vunpack.c.l.b16 %v355
    %v1781 = vunpack.c.h.b16 %v355
    %v1782 = vunpack.c.l.b16 %v356
    %v1783 = vunpack.c.h.b16 %v356
    %v1784 = vunpack.c.l.b16 %v357
    %v1785 = vunpack.c.h.b16 %v357
    %v1786 = vunpack.c.l.b16 %v358
    %v1787 = vunpack.c.h.b16 %v358
    %v1788 = vunpack.c.l.b16 %v359
    %v1789 = vunpack.c.h.b16 %v359
    %v1790 = vunpack.c.l.b16 %v360
    %v1791 = vunpack.c.h.b16 %v360
    %v1792 = vunpack.c.l.b16 %v361
    %v1793 = vunpack.c.h.b16 %v361
    %v1794 = vunpack.c.l.b16 %v362
    %v1795 = vunpack.c.h.b16 %v362
    %v1796 = vunpack.c.l.b16 %v363
    %v1797 = vunpack.c.h.b16 %v363
    %v1798 = vunpack.c.l.b16 %v364
    %v1799 = vunpack.c.h.b16 %v364
    %v1800 = vunpack.c.l.b16 %v365
    %v1801 = vunpack.c.h.b16 %v365
    %v1802 = vunpack.c.l.b16 %v366
    %v1803 = vunpack.c.h.b16 %v366
    %v1804 = vunpack.c.l.b16 %v367
    %v1805 = vunpack.c.h.b16 %v367
    %v1806 = vunpack.c.l.b16 %v368
    %v1807 = vunpack.c.h.b16 %v368
    %v1808 = vunpack.c.l.b16 %v369
    %v1809 = vunpack.c.h.b16 %v369
    %v1810 = vunpack.c.l.b16 %v370
    %v1811 = vunpack.c.h.b16 %v370
    %v1812 = vunpack.c.l.b16 %v371
    %v1813 = vunpack.c.h.b16 %v371
    %v1814 = vunpack.c.l.b16 %v372
    %v1815 = vunpack.c.h.b16 %v372
    %v1816 = vunpack.c.l.b16 %v373
    %v1817 = vunpack.c.h.b16 %v373
    %v1818 = vunpack.c.l.b16 %v374
    %v1819 = vunpack.c.h.b16 %v374
    %v1820 = vunpack.c.l.b16 %v375
    %v1821 = vunpack.c.h.b16 %v375
    %v1822 = vunpack.c.l.b16 %v376
    %v1823 = vunpack.c.h.b16 %v376
    %v1824 = vunpack.c.l.b16 %v377
    %v1825 = vunpack.c.h.b16 %v377
    %v1826 = vunpack.c.l.b16 %v378
    %v1827 = vunpack.c.h.b16 %v378
    %v1828 = vunpack.c.l.b16 %v379
    %v1829 = vunpack.c.h.b16 %v379
    %v1830 = vunpack.c.l.b16 %v380
    %v1831 = vunpack.c.h.b16 %v380
    %v1832 = vunpack.c.l.b16 %v381
    %v1833 = vunpack.c.h.b16 %v381
    %v1834 = vunpack.c.l.b16 %v382
    %v1835 = vunpack.c.h.b16 %v382
    %v1836 = vunpack.c.l.b16 %v383
    %v1837 = vunpack.c.h.b16 %v383
    %v1838 = vunpack.c.l.b16 %v384
    %v1839 = vunpack.c.h.b16 %v384
    %v1840 = vunpack.c.l.b16 %v385
    %v1841 = vunpack.c.h.b16 %v385
    %v1842 = vunpack.c.l.b16 %v386
    %v1843 = vunpack.c.h.b16 %v386
    %v1844 = vunpack.c.l.b16 %v387
    %v1845 = vunpack.c.h.b16 %v387
    %v1846 = vunpack.c.l.b16 %v388
    %v1847 = vunpack.c.h.b16 %v388
    %v1848 = vunpack.c.l.b16 %v389
    %v1849 = vunpack.c.h.b16 %v389
    %v1850 = vunpack.c.l.b16 %v390
    %v1851 = vunpack.c.h.b16 %v390
    %v1852 = vunpack.c.l.b16 %v391
    %v1853 = vunpack.c.h.b16 %v391
    %v1854 = vunpack.c.l.b16 %v392
    %v1855 = vunpack.c.h.b16 %v392
    %v1856 = vunpack.c.l.b16 %v393
    %v1857 = vunpack.c.h.b16 %v393
    %v1858 = vunpack.c.l.b16 %v394
    %v1859 = vunpack.c.h.b16 %v394
    %v1860 = vunpack.c.l.b16 %v395
    %v1861 = vunpack.c.h.b16 %v395
    %v1862 = vunpack.c.l.b16 %v396
    %v1863 = vunpack.c.h.b16 %v396
    %v1864 = vunpack.c.l.b16 %v397
    %v1865 = vunpack.c.h.b16 %v397
    %v1866 = vunpack.c.l.b16 %v398
    %v1867 = vunpack.c.h.b16 %v398
    %v1868 = vunpack.c.l.b16 %v399
    %v1869 = vunpack.c.h.b16 %v399
    %v1870 = vunpack.c.l.b16 %v400
    %v1871 = vunpack.c.h.b16 %v400
    %v1872 = vunpack.c.l.b16 %v401
    %v1873 = vunpack.c.h.b16 %v401
    %v1874 = vunpack.c.l.b16 %v402
    %v1875 = vunpack.c.h.b16 %v402
    %v1876 = vunpack.c.l.b16 %v403
    %v1877 = vunpack.c.h.b16 %v403
    %v1878 = vunpack.c.l.b16 %v404
    %v1879 = vunpack.c.h.b16 %v404
    %v1880 = vunpack.c.l.b16 %v405
    %v1881 = vunpack.c.h.b16 %v405
    %v1882 = vunpack.c.l.b16 %v406
    %v1883 = vunpack.c.h.b16 %v406
    %v1884 = vunpack.c.l.b16 %v407
    %v1885 = vunpack.c.h.b16 %v407
    %v1886 = vunpack.c.l.b16 %v408
    %v1887 = vunpack.c.h.b16 %v408
    %v1888 = vunpack.c.l.b16 %v409
    %v1889 = vunpack.c.h.b16 %v409
    %v1890 = vunpack.c.l.b16 %v410
    %v1891 = vunpack.c.h.b16 %v410
    %v1892 = vunpack.c.l.b16 %v411
    %v1893 = vunpack.c.h.b16 %v411
    %v1894 = vunpack.c.l.b16 %v412
    %v1895 = vunpack.c.h.b16 %v412
    %v1896 = vunpack.c.l.b16 %v413
    %v1897 = vunpack.c.h.b16 %v413
    %v1898 = vunpack.c.l.b16 %v414
    %v1899 = vunpack.c.h.b16 %v414
    %v1900 = vunpack.c.l.b16 %v415
    %v1901 = vunpack.c.h.b16 %v415
    %v1902 = vunpack.c.l.b16 %v416
    %v1903 = vunpack.c.h.b16 %v416
    %v1904 = vunpack.c.l.b16 %v417
    %v1905 = vunpack.c.h.b16 %v417
    %v1906 = vunpack.c.l.b16 %v418
    %v1907 = vunpack.c.h.b16 %v418
    %v1908 = vunpack.c.l.b16 %v419
    %v1909 = vunpack.c.h.b16 %v419
    %v1910 = vunpack.c.l.b16 %v420
    %v1911 = vunpack.c.h.b16 %v420
    %v1912 = vunpack.c.l.b16 %v421
    %v1913 = vunpack.c.h.b16 %v421
    %v1914 = vunpack.c.l.b16 %v422
    %v1915 = vunpack.c.h.b16 %v422
    %v1916 = vunpack.c.l.b16 %v423
    %v1917 = vunpack.c.h.b16 %v423
    %v1918 = vunpack.c.l.b16 %v424
    %v1919 = vunpack.c.h.b16 %v424
    %v1920 = vunpack.c.l.b16 %v425
    %v1921 = vunpack.c.h.b16 %v425
    %v1922 = vunpack.c.l.b16 %v426
    %v1923 = vunpack.c.h.b16 %v426
    %v1924 = vunpack.c.l.b16 %v427
    %v1925 = vunpack.c.h.b16 %v427
    %v1926 = vunpack.c.l.b16 %v428
    %v1927 = vunpack.c.h.b16 %v428
    %v1928 = vunpack.c.l.b16 %v429
    %v1929 = vunpack.c.h.b16 %v429
    %v1930 = vunpack.c.l.b16 %v430
    %v1931 = vunpack.c.h.b16 %v430
    %v1932 = vunpack.c.l.b16 %v431
    %v1933 = vunpack.c.h.b16 %v431
    %v1934 = vunpack.c.l.b16 %v432
    %v1935 = vunpack.c.h.b16 %v432
    %v1936 = vunpack.c.l.b16 %v433
    %v1937 = vunpack.c.h.b16 %v433
    %v1938 = vunpack.c.l.b16 %v434
    %v1939 = vunpack.c.h.b16 %v434
    %v1940 = vunpack.c.l.b16 %v435
    %v1941 = vunpack.c.h.b16 %v435
    %v1942 = vunpack.c.l.b16 %v436
    %v1943 = vunpack.c.h.b16 %v436
    %v1944 = vunpack.c.l.b16 %v437
    %v1945 = vunpack.c.h.b16 %v437
    %v1946 = vunpack.c.l.b16 %v438
    %v1947 = vunpack.c.h.b16 %v438
    %v1948 = vunpack.c.l.b16 %v439
    %v1949 = vunpack.c.h.b16 %v439
    %v1950 = vunpack.c.l.b16 %v440
    %v1951 = vunpack.c.h.b16 %v440
    %v1952 = vunpack.c.l.b16 %v441
    %v1953 = vunpack.c.h.b16 %v441
    %v1954 = vunpack.c.l.b16 %v442
    %v1955 = vunpack.c.h.b16 %v442
    %v1956 = vunpack.c.l.b16 %v443
    %v1957 = vunpack.c.h.b16 %v443
    %v1958 = vunpack.c.l.b16 %v444
    %v1959 = vunpack.c.h.b16 %v444
    %v1960 = vunpack.c.l.b16 %v445
    %v1961 = vunpack.c.h.b16 %v445
    %v1962 = vunpack.c.l.b16 %v446
    %v1963 = vunpack.c.h.b16 %v446
    %v1964 = vunpack.c.l.b16 %v447
    %v1965 = vunpack.c.h.b16 %v447
    %v1966 = vunpack.c.l.b16 %v448
    %v1967 = vunpack.c.h.b16 %v448
    %v1968 = vunpack.c.l.b16 %v449
    %v1969 = vunpack.c.h.b16 %v449
    %v1970 = vunpack.c.l.b16 %v450
    %v1971 = vunpack.c.h.b16 %v450
    %v1972 = vunpack.c.l.b16 %v451
    %v1973 = vunpack.c.h.b16 %v451
    %v1974 = vunpack.c.l.b16 %v452
    %v1975 = vunpack.c.h.b16 %v452
    %v1976 = vunpack.c.l.b16 %v453
    %v1977 = vunpack.c.h.b16 %v453
    %v1978 = vunpack.c.l.b16 %v454
    %v1979 = vunpack.c.h.b16 %v454
    %v1980 = vunpack.c.l.b16 %v455
    %v1981 = vunpack.c.h.b16 %v455
    %v1982 = vunpack.c.l.b16 %v456
    %v1983 = vunpack.c.h.b16 %v456
    %v1984 = vunpack.c.l.b16 %v457
    %v1985 = vunpack.c.h.b16 %v457
    %v1986 = vunpack.c.l.b16 %v458
    %v1987 = vunpack.c.h.b16 %v458
    %v1988 = vunpack.c.l.b16 %v459
    %v1989 = vunpack.c.h.b16 %v459
    %v1990 = vunpack.c.l.b16 %v460
    %v1991 = vunpack.c.h.b16 %v460
    %v1992 = vunpack.c.l.b16 %v461
    %v1993 = vunpack.c.h.b16 %v461
    %v1994 = vunpack.c.l.b16 %v462
    %v1995 = vunpack.c.h.b16 %v462
    %v1996 = vunpack.c.l.b16 %v463
    %v1997 = vunpack.c.h.b16 %v463
    %v1998 = vunpack.c.l.b16 %v464
    %v1999 = vunpack.c.h.b16 %v464
    %v2000 = vunpack.c.l.b16 %v465
    %v2001 = vunpack.c.h.b16 %v465
    %v2002 = vunpack.c.l.b16 %v466
    %v2003 = vunpack.c.h.b16 %v466
    %v2004 = vunpack.c.l.b16 %v467
    %v2005 = vunpack.c.h.b16 %v467
    %v2006 = vunpack.c.l.b16 %v468
    %v2007 = vunpack.c.h.b16 %v468
    %v2008 = vunpack.c.l.b16 %v469
    %v2009 = vunpack.c.h.b16 %v469
    %v2010 = vunpack.c.l.b16 %v470
    %v2011 = vunpack.c.h.b16 %v470
    %v2012 = vunpack.c.l.b16 %v471
    %v2013 = vunpack.c.h.b16 %v471
    %v2014 = vunpack.c.l.b16 %v472
    %v2015 = vunpack.c.h.b16 %v472
    %v2016 = vunpack.c.l.b16 %v473
    %v2017 = vunpack.c.h.b16 %v473
    %v2018 = vunpack.c.l.b16 %v474
    %v2019 = vunpack.c.h.b16 %v474
    %v2020 = vunpack.c.l.b16 %v475
    %v2021 = vunpack.c.h.b16 %v475
    %v2022 = vunpack.c.l.b16 %v476
    %v2023 = vunpack.c.h.b16 %v476
    %v2024 = vunpack.c.l.b16 %v477
    %v2025 = vunpack.c.h.b16 %v477
    %v2026 = vunpack.c.l.b16 %v478
    %v2027 = vunpack.c.h.b16 %v478
    %v2028 = vunpack.c.l.b16 %v479
    %v2029 = vunpack.c.h.b16 %v479
    %v2030 = vunpack.c.l.b16 %v480
    %v2031 = vunpack.c.h.b16 %v480
    %v2032 = vunpack.c.l.b16 %v481
    %v2033 = vunpack.c.h.b16 %v481
    %v2034 = vunpack.c.l.b16 %v482
    %v2035 = vunpack.c.h.b16 %v482
    %v2036 = vunpack.c.l.b16 %v483
    %v2037 = vunpack.c.h.b16 %v483
    %v2038 = vunpack.c.l.b16 %v484
    %v2039 = vunpack.c.h.b16 %v484
    %v2040 = vunpack.c.l.b16 %v485
    %v2041 = vunpack.c.h.b16 %v485
    %v2042 = vunpack.c.l.b16 %v486
    %v2043 = vunpack.c.h.b16 %v486
    %v2044 = vunpack.c.l.b16 %v487
    %v2045 = vunpack.c.h.b16 %v487
    %v2046 = vunpack.c.l.b16 %v488
    %v2047 = vunpack.c.h.b16 %v488
    %v2048 = vunpack.c.l.b16 %v489
    %v2049 = vunpack.c.h.b16 %v489
    %v2050 = vunpack.c.l.b16 %v490
    %v2051 = vunpack.c.h.b16 %v490
    %v2052 = vunpack.c.l.b16 %v491
    %v2053 = vunpack.c.h.b16 %v491
    %v2054 = vunpack.c.l.b16 %v492
    %v2055 = vunpack.c.h.b16 %v492
    %v2056 = vunpack.c.l.b16 %v493
    %v2057 = vunpack.c.h.b16 %v493
    %v2058 = vunpack.c.l.b16 %v494
    %v2059 = vunpack.c.h.b16 %v494
    %v2060 = vunpack.c.l.b16 %v495
    %v2061 = vunpack.c.h.b16 %v495
    %v2062 = vunpack.c.l.b16 %v496
    %v2063 = vunpack.c.h.b16 %v496
    %v2064 = vunpack.c.l.b16 %v497
    %v2065 = vunpack.c.h.b16 %v497
    %v2066 = vunpack.c.l.b16 %v498
    %v2067 = vunpack.c.h.b16 %v498
    %v2068 = vunpack.c.l.b16 %v499
    %v2069 = vunpack.c.h.b16 %v499
    %v2070 = vunpack.c.l.b16 %v500
    %v2071 = vunpack.c.h.b16 %v500
    %v2072 = vunpack.c.l.b16 %v501
    %v2073 = vunpack.c.h.b16 %v501
    %v2074 = vunpack.c.l.b16 %v502
    %v2075 = vunpack.c.h.b16 %v502
    %v2076 = vunpack.c.l.b16 %v503
    %v2077 = vunpack.c.h.b16 %v503
    %v2078 = vunpack.c.l.b16 %v504
    %v2079 = vunpack.c.h.b16 %v504
    %v2080 = vunpack.c.l.b16 %v505
    %v2081 = vunpack.c.h.b16 %v505
    %v2082 = vunpack.c.l.b16 %v506
    %v2083 = vunpack.c.h.b16 %v506
    %v2084 = vunpack.c.l.b16 %v507
    %v2085 = vunpack.c.h.b16 %v507
    %v2086 = vunpack.c.l.b16 %v508
    %v2087 = vunpack.c.h.b16 %v508
    %v2088 = vunpack.c.l.b16 %v509
    %v2089 = vunpack.c.h.b16 %v509
    %v2090 = vunpack.c.l.b16 %v510
    %v2091 = vunpack.c.h.b16 %v510
    %v2092 = vunpack.c.l.b16 %v511
    %v2093 = vunpack.c.h.b16 %v511
    %v2094 = vunpack.c.l.b16 %v512
    %v2095 = vunpack.c.h.b16 %v512
    %v2096 = vunpack.c.l.b16 %v513
    %v2097 = vunpack.c.h.b16 %v513
    %v2098 = vunpack.c.l.b16 %v514
    %v2099 = vunpack.c.h.b16 %v514
    %v2100 = vunpack.c.l.b16 %v515
    %v2101 = vunpack.c.h.b16 %v515
    %v2102 = vunpack.c.l.b16 %v516
    %v2103 = vunpack.c.h.b16 %v516
    %v2104 = vunpack.c.l.b16 %v517
    %v2105 = vunpack.c.h.b16 %v517
    %v2106 = vunpack.c.l.b16 %v518
    %v2107 = vunpack.c.h.b16 %v518
    %v2108 = vunpack.c.l.b16 %v519
    %v2109 = vunpack.c.h.b16 %v519
    %v2110 = vunpack.c.l.b16 %v520
    %v2111 = vunpack.c.h.b16 %v520
    %v2112 = vunpack.c.l.b16 %v521
    %v2113 = vunpack.c.h.b16 %v521
    %v2114 = vunpack.c.l.b16 %v522
    %v2115 = vunpack.c.h.b16 %v522
    %v2116 = vunpack.c.l.b16 %v523
    %v2117 = vunpack.c.h.b16 %v523
    %v2118 = vunpack.c.l.b16 %v524
    %v2119 = vunpack.c.h.b16 %v524
    %v2120 = vunpack.c.l.b16 %v525
    %v2121 = vunpack.c.h.b16 %v525
    %v2122 = vunpack.c.l.b16 %v526
    %v2123 = vunpack.c.h.b16 %v526
    %v2124 = vunpack.c.l.b16 %v527
    %v2125 = vunpack.c.h.b16 %v527
    %v2126 = vunpack.c.l.b16 %v528
    %v2127 = vunpack.c.h.b16 %v528
    %v2128 = vunpack.c.l.b16 %v529
    %v2129 = vunpack.c.h.b16 %v529
    %v2130 = vunpack.c.l.b16 %v530
    %v2131 = vunpack.c.h.b16 %v530
    %v2132 = vunpack.c.l.b16 %v531
    %v2133 = vunpack.c.h.b16 %v531
    %v2134 = vunpack.c.l.b16 %v532
    %v2135 = vunpack.c.h.b16 %v532
    %v2136 = vunpack.c.l.b16 %v533
    %v2137 = vunpack.c.h.b16 %v533
    %v2138 = vunpack.c.l.b16 %v534
    %v2139 = vunpack.c.h.b16 %v534
    %v2140 = vunpack.c.l.b16 %v535
    %v2141 = vunpack.c.h.b16 %v535
    %v2142 = vunpack.c.l.b16 %v536
    %v2143 = vunpack.c.h.b16 %v536
    %v2144 = vunpack.c.l.b16 %v537
    %v2145 = vunpack.c.h.b16 %v537
    %v2146 = vunpack.c.l.b16 %v538
    %v2147 = vunpack.c.h.b16 %v538
    %v2148 = vunpack.c.l.b16 %v539
    %v2149 = vunpack.c.h.b16 %v539
    %v2150 = vunpack.c.l.b16 %v540
    %v2151 = vunpack.c.h.b16 %v540
    %v2152 = vunpack.c.l.b16 %v541
    %v2153 = vunpack.c.h.b16 %v541
    %v2154 = vunpack.c.l.b16 %v542
    %v2155 = vunpack.c.h.b16 %v542
    %v2156 = vunpack.c.l.b16 %v543
    %v2157 = vunpack.c.h.b16 %v543
    %v2158 = vunpack.c.l.b16 %v544
    %v2159 = vunpack.c.h.b16 %v544
    %v2160 = vunpack.c.l.b16 %v545
    %v2161 = vunpack.c.h.b16 %v545
    %v2162 = vunpack.c.l.b16 %v546
    %v2163 = vunpack.c.h.b16 %v546
    %v2164 = vunpack.c.l.b16 %v547
    %v2165 = vunpack.c.h.b16 %v547
    %v2166 = vunpack.c.l.b16 %v548
    %v2167 = vunpack.c.h.b16 %v548
    %v2168 = vunpack.c.l.b16 %v549
    %v2169 = vunpack.c.h.b16 %v549
    %v2170 = vunpack.c.l.b16 %v550
    %v2171 = vunpack.c.h.b16 %v550
    %v2172 = vunpack.c.l.b16 %v551
    %v2173 = vunpack.c.h.b16 %v551
    %v2174 = vunpack.c.l.b16 %v552
    %v2175 = vunpack.c.h.b16 %v552
    %v2176 = vunpack.c.l.b16 %v553
    %v2177 = vunpack.c.h.b16 %v553
    %v2178 = vunpack.c.l.b16 %v554
    %v2179 = vunpack.c.h.b16 %v554
    %v2180 = vunpack.c.l.b16 %v555
    %v2181 = vunpack.c.h.b16 %v555
    %v2182 = vunpack.c.l.b16 %v556
    %v2183 = vunpack.c.h.b16 %v556
    %v2184 = vunpack.c.l.b16 %v557
    %v2185 = vunpack.c.h.b16 %v557
    %v2186 = vunpack.c.l.b16 %v558
    %v2187 = vunpack.c.h.b16 %v558
    %v2188 = vunpack.c.l.b16 %v559
    %v2189 = vunpack.c.h.b16 %v559
    %v2190 = vunpack.c.l.b16 %v560
    %v2191 = vunpack.c.h.b16 %v560
    %v2192 = vunpack.c.l.b16 %v561
    %v2193 = vunpack.c.h.b16 %v561
    %v2194 = vunpack.c.l.b16 %v562
    %v2195 = vunpack.c.h.b16 %v562
    %v2196 = vunpack.c.l.b16 %v563
    %v2197 = vunpack.c.h.b16 %v563
    %v2198 = vunpack.c.l.b16 %v564
    %v2199 = vunpack.c.h.b16 %v564
    %v2200 = vunpack.c.l.b16 %v565
    %v2201 = vunpack.c.h.b16 %v565
    %v2202 = vunpack.c.l.b16 %v566
    %v2203 = vunpack.c.h.b16 %v566
    %v2204 = vunpack.c.l.b16 %v567
    %v2205 = vunpack.c.h.b16 %v567
    %v2206 = vunpack.c.l.b16 %v568
    %v2207 = vunpack.c.h.b16 %v568
    %v2208 = vunpack.c.l.b16 %v569
    %v2209 = vunpack.c.h.b16 %v569
    %v2210 = vunpack.c.l.b16 %v570
    %v2211 = vunpack.c.h.b16 %v570
    %v2212 = vunpack.c.l.b16 %v571
    %v2213 = vunpack.c.h.b16 %v571
    %v2214 = vunpack.c.l.b16 %v572
    %v2215 = vunpack.c.h.b16 %v572
    %v2216 = vunpack.c.l.b16 %v573
    %v2217 = vunpack.c.h.b16 %v573
    %v2218 = vunpack.c.l.b16 %v574
    %v2219 = vunpack.c.h.b16 %v574
    %v2220 = vunpack.c.l.b16 %v575
    %v2221 = vunpack.c.h.b16 %v575
    %v2222 = vunpack.c.l.b16 %v576
    %v2223 = vunpack.c.h.b16 %v576
    %v2224 = vpack.c.b16 %v1208, %v1200
    %v2225 = vpack.c.b16 %v1209, %v1201
    %v2226 = vpack.c.b16 %v1210, %v1202
    %v2227 = vpack.c.b16 %v1211, %v1203
    %v2228 = vpack.c.b16 %v1212, %v1204
    %v2229 = vpack.c.b16 %v1213, %v1205
    %v2230 = vpack.c.b16 %v1214, %v1206
    %v2231 = vpack.c.b16 %v1215, %v1207
    %v2232 = vpack.c.b16 %v1224, %v1216
    %v2233 = vpack.c.b16 %v1225, %v1217
    %v2234 = vpack.c.b16 %v1226, %v1218
    %v2235 = vpack.c.b16 %v1227, %v1219
    %v2236 = vpack.c.b16 %v1228, %v1220
    %v2237 = vpack.c.b16 %v1229, %v1221
    %v2238 = vpack.c.b16 %v1230, %v1222
    %v2239 = vpack.c.b16 %v1231, %v1223
    %v2240 = vpack.c.b16 %v1240, %v1232
    %v2241 = vpack.c.b16 %v1241, %v1233
    %v2242 = vpack.c.b16 %v1242, %v1234
    %v2243 = vpack.c.b16 %v1243, %v1235
    %v2244 = vpack.c.b16 %v1244, %v1236
    %v2245 = vpack.c.b16 %v1245, %v1237
    %v2246 = vpack.c.b16 %v1246, %v1238
    %v2247 = vpack.c.b16 %v1247, %v1239
    %v2248 = vpack.c.b16 %v1256, %v1248
    %v2249 = vpack.c.b16 %v1257, %v1249
    %v2250 = vpack.c.b16 %v1258, %v1250
    %v2251 = vpack.c.b16 %v1259, %v1251
    %v2252 = vpack.c.b16 %v1260, %v1252
    %v2253 = vpack.c.b16 %v1261, %v1253
    %v2254 = vpack.c.b16 %v1262, %v1254
    %v2255 = vpack.c.b16 %v1263, %v1255
    %v2256 = vpack.c.b16 %v1272, %v1264
    %v2257 = vpack.c.b16 %v1273, %v1265
    %v2258 = vpack.c.b16 %v1274, %v1266
    %v2259 = vpack.c.b16 %v1275, %v1267
    %v2260 = vpack.c.b16 %v1276, %v1268
    %v2261 = vpack.c.b16 %v1277, %v1269
    %v2262 = vpack.c.b16 %v1278, %v1270
    %v2263 = vpack.c.b16 %v1279, %v1271
    %v2264 = vpack.c.b16 %v1288, %v1280
    %v2265 = vpack.c.b16 %v1289, %v1281
    %v2266 = vpack.c.b16 %v1290, %v1282
    %v2267 = vpack.c.b16 %v1291, %v1283
    %v2268 = vpack.c.b16 %v1292, %v1284
    %v2269 = vpack.c.b16 %v1293, %v1285
    %v2270 = vpack.c.b16 %v1294, %v1286
    %v2271 = vpack.c.b16 %v1295, %v1287
    %v2272 = vpack.c.b16 %v1304, %v1296
    %v2273 = vpack.c.b16 %v1305, %v1297
    %v2274 = vpack.c.b16 %v1306, %v1298
    %v2275 = vpack.c.b16 %v1307, %v1299
    %v2276 = vpack.c.b16 %v1308, %v1300
    %v2277 = vpack.c.b16 %v1309, %v1301
    %v2278 = vpack.c.b16 %v1310, %v1302
    %v2279 = vpack.c.b16 %v1311, %v1303
    %v2280 = vpack.c.b16 %v1320, %v1312
    %v2281 = vpack.c.b16 %v1321, %v1313
    %v2282 = vpack.c.b16 %v1322, %v1314
    %v2283 = vpack.c.b16 %v1323, %v1315
    %v2284 = vpack.c.b16 %v1324, %v1316
    %v2285 = vpack.c.b16 %v1325, %v1317
    %v2286 = vpack.c.b16 %v1326, %v1318
    %v2287 = vpack.c.b16 %v1327, %v1319
    %v2288 = vpack.c.b16 %v1336, %v1328
    %v2289 = vpack.c.b16 %v1337, %v1329
    %v2290 = vpack.c.b16 %v1338, %v1330
    %v2291 = vpack.c.b16 %v1339, %v1331
    %v2292 = vpack.c.b16 %v1340, %v1332
    %v2293 = vpack.c.b16 %v1341, %v1333
    %v2294 = vpack.c.b16 %v1342, %v1334
    %v2295 = vpack.c.b16 %v1343, %v1335
    %v2296 = vpack.c.b16 %v1352, %v1344
    %v2297 = vpack.c.b16 %v1353, %v1345
    %v2298 = vpack.c.b16 %v1354, %v1346
    %v2299 = vpack.c.b16 %v1355, %v1347
    %v2300 = vpack.c.b16 %v1356, %v1348
    %v2301 = vpack.c.b16 %v1357, %v1349
    %v2302 = vpack.c.b16 %v1358, %v1350
    %v2303 = vpack.c.b16 %v1359, %v1351
    %v2304 = vpack.c.b16 %v1368, %v1360
    %v2305 = vpack.c.b16 %v1369, %v1361
    %v2306 = vpack.c.b16 %v1370, %v1362
    %v2307 = vpack.c.b16 %v1371, %v1363
    %v2308 = vpack.c.b16 %v1372, %v1364
    %v2309 = vpack.c.b16 %v1373, %v1365
    %v2310 = vpack.c.b16 %v1374, %v1366
    %v2311 = vpack.c.b16 %v1375, %v1367
    %v2312 = vpack.c.b16 %v1384, %v1376
    %v2313 = vpack.c.b16 %v1385, %v1377
    %v2314 = vpack.c.b16 %v1386, %v1378
    %v2315 = vpack.c.b16 %v1387, %v1379
    %v2316 = vpack.c.b16 %v1388, %v1380
    %v2317 = vpack.c.b16 %v1389, %v1381
    %v2318 = vpack.c.b16 %v1390, %v1382
    %v2319 = vpack.c.b16 %v1391, %v1383
    %v2320 = vpack.c.b16 %v1400, %v1392
    %v2321 = vpack.c.b16 %v1401, %v1393
    %v2322 = vpack.c.b16 %v1402, %v1394
    %v2323 = vpack.c.b16 %v1403, %v1395
    %v2324 = vpack.c.b16 %v1404, %v1396
    %v2325 = vpack.c.b16 %v1405, %v1397
    %v2326 = vpack.c.b16 %v1406, %v1398
    %v2327 = vpack.c.b16 %v1407, %v1399
    %v2328 = vpack.c.b16 %v1416, %v1408
    %v2329 = vpack.c.b16 %v1417, %v1409
    %v2330 = vpack.c.b16 %v1418, %v1410
    %v2331 = vpack.c.b16 %v1419, %v1411
    %v2332 = vpack.c.b16 %v1420, %v1412
    %v2333 = vpack.c.b16 %v1421, %v1413
    %v2334 = vpack.c.b16 %v1422, %v1414
    %v2335 = vpack.c.b16 %v1423, %v1415
    %v2336 = vpack.c.b16 %v1432, %v1424
    %v2337 = vpack.c.b16 %v1433, %v1425
    %v2338 = vpack.c.b16 %v1434, %v1426
    %v2339 = vpack.c.b16 %v1435, %v1427
    %v2340 = vpack.c.b16 %v1436, %v1428
    %v2341 = vpack.c.b16 %v1437, %v1429
    %v2342 = vpack.c.b16 %v1438, %v1430
    %v2343 = vpack.c.b16 %v1439, %v1431
    %v2344 = vpack.c.b16 %v1448, %v1440
    %v2345 = vpack.c.b16 %v1449, %v1441
    %v2346 = vpack.c.b16 %v1450, %v1442
    %v2347 = vpack.c.b16 %v1451, %v1443
    %v2348 = vpack.c.b16 %v1452, %v1444
    %v2349 = vpack.c.b16 %v1453, %v1445
    %v2350 = vpack.c.b16 %v1454, %v1446
    %v2351 = vpack.c.b16 %v1455, %v1447
    %v2352 = vpack.c.b16 %v1464, %v1456
    %v2353 = vpack.c.b16 %v1465, %v1457
    %v2354 = vpack.c.b16 %v1466, %v1458
    %v2355 = vpack.c.b16 %v1467, %v1459
    %v2356 = vpack.c.b16 %v1468, %v1460
    %v2357 = vpack.c.b16 %v1469, %v1461
    %v2358 = vpack.c.b16 %v1470, %v1462
    %v2359 = vpack.c.b16 %v1471, %v1463
    %v2360 = vpack.c.b16 %v1480, %v1472
    %v2361 = vpack.c.b16 %v1481, %v1473
    %v2362 = vpack.c.b16 %v1482, %v1474
    %v2363 = vpack.c.b16 %v1483, %v1475
    %v2364 = vpack.c.b16 %v1484, %v1476
    %v2365 = vpack.c.b16 %v1485, %v1477
    %v2366 = vpack.c.b16 %v1486, %v1478
    %v2367 = vpack.c.b16 %v1487, %v1479
    %v2368 = vpack.c.b16 %v1496, %v1488
    %v2369 = vpack.c.b16 %v1497, %v1489
    %v2370 = vpack.c.b16 %v1498, %v1490
    %v2371 = vpack.c.b16 %v1499, %v1491
    %v2372 = vpack.c.b16 %v1500, %v1492
    %v2373 = vpack.c.b16 %v1501, %v1493
    %v2374 = vpack.c.b16 %v1502, %v1494
    %v2375 = vpack.c.b16 %v1503, %v1495
    %v2376 = vpack.c.b16 %v1512, %v1504
    %v2377 = vpack.c.b16 %v1513, %v1505
    %v2378 = vpack.c.b16 %v1514, %v1506
    %v2379 = vpack.c.b16 %v1515, %v1507
    %v2380 = vpack.c.b16 %v1516, %v1508
    %v2381 = vpack.c.b16 %v1517, %v1509
    %v2382 = vpack.c.b16 %v1518, %v1510
    %v2383 = vpack.c.b16 %v1519, %v1511
    %v2384 = vpack.c.b16 %v1528, %v1520
    %v2385 = vpack.c.b16 %v1529, %v1521
    %v2386 = vpack.c.b16 %v1530, %v1522
    %v2387 = vpack.c.b16 %v1531, %v1523
    %v2388 = vpack.c.b16 %v1532, %v1524
    %v2389 = vpack.c.b16 %v1533, %v1525
    %v2390 = vpack.c.b16 %v1534, %v1526
    %v2391 = vpack.c.b16 %v1535, %v1527
    %v2392 = vpack.c.b16 %v1544, %v1536
    %v2393 = vpack.c.b16 %v1545, %v1537
    %v2394 = vpack.c.b16 %v1546, %v1538
    %v2395 = vpack.c.b16 %v1547, %v1539
    %v2396 = vpack.c.b16 %v1548, %v1540
    %v2397 = vpack.c.b16 %v1549, %v1541
    %v2398 = vpack.c.b16 %v1550, %v1542
    %v2399 = vpack.c.b16 %v1551, %v1543
    %v2400 = vpack.c.b16 %v1560, %v1552
    %v2401 = vpack.c.b16 %v1561, %v1553
    %v2402 = vpack.c.b16 %v1562, %v1554
    %v2403 = vpack.c.b16 %v1563, %v1555
    %v2404 = vpack.c.b16 %v1564, %v1556
    %v2405 = vpack.c.b16 %v1565, %v1557
    %v2406 = vpack.c.b16 %v1566, %v1558
    %v2407 = vpack.c.b16 %v1567, %v1559
    %v2408 = vpack.c.b16 %v1576, %v1568
    %v2409 = vpack.c.b16 %v1577, %v1569
    %v2410 = vpack.c.b16 %v1578, %v1570
    %v2411 = vpack.c.b16 %v1579, %v1571
    %v2412 = vpack.c.b16 %v1580, %v1572
    %v2413 = vpack.c.b16 %v1581, %v1573
    %v2414 = vpack.c.b16 %v1582, %v1574
    %v2415 = vpack.c.b16 %v1583, %v1575
    %v2416 = vpack.c.b16 %v1592, %v1584
    %v2417 = vpack.c.b16 %v1593, %v1585
    %v2418 = vpack.c.b16 %v1594, %v1586
    %v2419 = vpack.c.b16 %v1595, %v1587
    %v2420 = vpack.c.b16 %v1596, %v1588
    %v2421 = vpack.c.b16 %v1597, %v1589
    %v2422 = vpack.c.b16 %v1598, %v1590
    %v2423 = vpack.c.b16 %v1599, %v1591
    %v2424 = vpack.c.b16 %v1608, %v1600
    %v2425 = vpack.c.b16 %v1609, %v1601
    %v2426 = vpack.c.b16 %v1610, %v1602
    %v2427 = vpack.c.b16 %v1611, %v1603
    %v2428 = vpack.c.b16 %v1612, %v1604
    %v2429 = vpack.c.b16 %v1613, %v1605
    %v2430 = vpack.c.b16 %v1614, %v1606
    %v2431 = vpack.c.b16 %v1615, %v1607
    %v2432 = vpack.c.b16 %v1624, %v1616
    %v2433 = vpack.c.b16 %v1625, %v1617
    %v2434 = vpack.c.b16 %v1626, %v1618
    %v2435 = vpack.c.b16 %v1627, %v1619
    %v2436 = vpack.c.b16 %v1628, %v1620
    %v2437 = vpack.c.b16 %v1629, %v1621
    %v2438 = vpack.c.b16 %v1630, %v1622
    %v2439 = vpack.c.b16 %v1631, %v1623
    %v2440 = vpack.c.b16 %v1640, %v1632
    %v2441 = vpack.c.b16 %v1641, %v1633
    %v2442 = vpack.c.b16 %v1642, %v1634
    %v2443 = vpack.c.b16 %v1643, %v1635
    %v2444 = vpack.c.b16 %v1644, %v1636
    %v2445 = vpack.c.b16 %v1645, %v1637
    %v2446 = vpack.c.b16 %v1646, %v1638
    %v2447 = vpack.c.b16 %v1647, %v1639
    %v2448 = vpack.c.b16 %v1656, %v1648
    %v2449 = vpack.c.b16 %v1657, %v1649
    %v2450 = vpack.c.b16 %v1658, %v1650
    %v2451 = vpack.c.b16 %v1659, %v1651
    %v2452 = vpack.c.b16 %v1660, %v1652
    %v2453 = vpack.c.b16 %v1661, %v1653
    %v2454 = vpack.c.b16 %v1662, %v1654
    %v2455 = vpack.c.b16 %v1663, %v1655
    %v2456 = vpack.c.b16 %v1672, %v1664
    %v2457 = vpack.c.b16 %v1673, %v1665
    %v2458 = vpack.c.b16 %v1674, %v1666
    %v2459 = vpack.c.b16 %v1675, %v1667
    %v2460 = vpack.c.b16 %v1676, %v1668
    %v2461 = vpack.c.b16 %v1677, %v1669
    %v2462 = vpack.c.b16 %v1678, %v1670
    %v2463 = vpack.c.b16 %v1679, %v1671
    %v2464 = vpack.c.b16 %v1688, %v1680
    %v2465 = vpack.c.b16 %v1689, %v1681
    %v2466 = vpack.c.b16 %v1690, %v1682
    %v2467 = vpack.c.b16 %v1691, %v1683
    %v2468 = vpack.c.b16 %v1692, %v1684
    %v2469 = vpack.c.b16 %v1693, %v1685
    %v2470 = vpack.c.b16 %v1694, %v1686
    %v2471 = vpack.c.b16 %v1695, %v1687
    %v2472 = vpack.c.b16 %v1704, %v1696
    %v2473 = vpack.c.b16 %v1705, %v1697
    %v2474 = vpack.c.b16 %v1706, %v1698
    %v2475 = vpack.c.b16 %v1707, %v1699
    %v2476 = vpack.c.b16 %v1708, %v1700
    %v2477 = vpack.c.b16 %v1709, %v1701
    %v2478 = vpack.c.b16 %v1710, %v1702
    %v2479 = vpack.c.b16 %v1711, %v1703
    %v2480 = vpack.c.b16 %v1720, %v1712
    %v2481 = vpack.c.b16 %v1721, %v1713
    %v2482 = vpack.c.b16 %v1722, %v1714
    %v2483 = vpack.c.b16 %v1723, %v1715
    %v2484 = vpack.c.b16 %v1724, %v1716
    %v2485 = vpack.c.b16 %v1725, %v1717
    %v2486 = vpack.c.b16 %v1726, %v1718
    %v2487 = vpack.c.b16 %v1727, %v1719
    %v2488 = vpack.c.b16 %v1736, %v1728
    %v2489 = vpack.c.b16 %v1737, %v1729
    %v2490 = vpack.c.b16 %v1738, %v1730
    %v2491 = vpack.c.b16 %v1739, %v1731
    %v2492 = vpack.c.b16 %v1740, %v1732
    %v2493 = vpack.c.b16 %v1741, %v1733
    %v2494 = vpack.c.b16 %v1742, %v1734
    %v2495 = vpack.c.b16 %v1743, %v1735
    %v2496 = vpack.c.b16 %v1752, %v1744
    %v2497 = vpack.c.b16 %v1753, %v1745
    %v2498 = vpack.c.b16 %v1754, %v1746
    %v2499 = vpack.c.b16 %v1755, %v1747
    %v2500 = vpack.c.b16 %v1756, %v1748
    %v2501 = vpack.c.b16 %v1757, %v1749
    %v2502 = vpack.c.b16 %v1758, %v1750
    %v2503 = vpack.c.b16 %v1759, %v1751
    %v2504 = vpack.c.b16 %v1768, %v1760
    %v2505 = vpack.c.b16 %v1769, %v1761
    %v2506 = vpack.c.b16 %v1770, %v1762
    %v2507 = vpack.c.b16 %v1771, %v1763
    %v2508 = vpack.c.b16 %v1772, %v1764
    %v2509 = vpack.c.b16 %v1773, %v1765
    %v2510 = vpack.c.b16 %v1774, %v1766
    %v2511 = vpack.c.b16 %v1775, %v1767
    %v2512 = vpack.c.b16 %v1784, %v1776
    %v2513 = vpack.c.b16 %v1785, %v1777
    %v2514 = vpack.c.b16 %v1786, %v1778
    %v2515 = vpack.c.b16 %v1787, %v1779
    %v2516 = vpack.c.b16 %v1788, %v1780
    %v2517 = vpack.c.b16 %v1789, %v1781
    %v2518 = vpack.c.b16 %v1790, %v1782
    %v2519 = vpack.c.b16 %v1791, %v1783
    %v2520 = vpack.c.b16 %v1800, %v1792
    %v2521 = vpack.c.b16 %v1801, %v1793
    %v2522 = vpack.c.b16 %v1802, %v1794
    %v2523 = vpack.c.b16 %v1803, %v1795
    %v2524 = vpack.c.b16 %v1804, %v1796
    %v2525 = vpack.c.b16 %v1805, %v1797
    %v2526 = vpack.c.b16 %v1806, %v1798
    %v2527 = vpack.c.b16 %v1807, %v1799
    %v2528 = vpack.c.b16 %v1816, %v1808
    %v2529 = vpack.c.b16 %v1817, %v1809
    %v2530 = vpack.c.b16 %v1818, %v1810
    %v2531 = vpack.c.b16 %v1819, %v1811
    %v2532 = vpack.c.b16 %v1820, %v1812
    %v2533 = vpack.c.b16 %v1821, %v1813
    %v2534 = vpack.c.b16 %v1822, %v1814
    %v2535 = vpack.c.b16 %v1823, %v1815
    %v2536 = vpack.c.b16 %v1832, %v1824
    %v2537 = vpack.c.b16 %v1833, %v1825
    %v2538 = vpack.c.b16 %v1834, %v1826
    %v2539 = vpack.c.b16 %v1835, %v1827
    %v2540 = vpack.c.b16 %v1836, %v1828
    %v2541 = vpack.c.b16 %v1837, %v1829
    %v2542 = vpack.c.b16 %v1838, %v1830
    %v2543 = vpack.c.b16 %v1839, %v1831
    %v2544 = vpack.c.b16 %v1848, %v1840
    %v2545 = vpack.c.b16 %v1849, %v1841
    %v2546 = vpack.c.b16 %v1850, %v1842
    %v2547 = vpack.c.b16 %v1851, %v1843
    %v2548 = vpack.c.b16 %v1852, %v1844
    %v2549 = vpack.c.b16 %v1853, %v1845
    %v2550 = vpack.c.b16 %v1854, %v1846
    %v2551 = vpack.c.b16 %v1855, %v1847
    %v2552 = vpack.c.b16 %v1864, %v1856
    %v2553 = vpack.c.b16 %v1865, %v1857
    %v2554 = vpack.c.b16 %v1866, %v1858
    %v2555 = vpack.c.b16 %v1867, %v1859
    %v2556 = vpack.c.b16 %v1868, %v1860
    %v2557 = vpack.c.b16 %v1869, %v1861
    %v2558 = vpack.c.b16 %v1870, %v1862
    %v2559 = vpack.c.b16 %v1871, %v1863
    %v2560 = vpack.c.b16 %v1880, %v1872
    %v2561 = vpack.c.b16 %v1881, %v1873
    %v2562 = vpack.c.b16 %v1882, %v1874
    %v2563 = vpack.c.b16 %v1883, %v1875
    %v2564 = vpack.c.b16 %v1884, %v1876
    %v2565 = vpack.c.b16 %v1885, %v1877
    %v2566 = vpack.c.b16 %v1886, %v1878
    %v2567 = vpack.c.b16 %v1887, %v1879
    %v2568 = vpack.c.b16 %v1896, %v1888
    %v2569 = vpack.c.b16 %v1897, %v1889
    %v2570 = vpack.c.b16 %v1898, %v1890
    %v2571 = vpack.c.b16 %v1899, %v1891
    %v2572 = vpack.c.b16 %v1900, %v1892
    %v2573 = vpack.c.b16 %v1901, %v1893
    %v2574 = vpack.c.b16 %v1902, %v1894
    %v2575 = vpack.c.b16 %v1903, %v1895
    %v2576 = vpack.c.b16 %v1912, %v1904
    %v2577 = vpack.c.b16 %v1913, %v1905
    %v2578 = vpack.c.b16 %v1914, %v1906
    %v2579 = vpack.c.b16 %v1915, %v1907
    %v2580 = vpack.c.b16 %v1916, %v1908
    %v2581 = vpack.c.b16 %v1917, %v1909
    %v2582 = vpack.c.b16 %v1918, %v1910
    %v2583 = vpack.c.b16 %v1919, %v1911
    %v2584 = vpack.c.b16 %v1928, %v1920
    %v2585 = vpack.c.b16 %v1929, %v1921
    %v2586 = vpack.c.b16 %v1930, %v1922
    %v2587 = vpack.c.b16 %v1931, %v1923
    %v2588 = vpack.c.b16 %v1932, %v1924
    %v2589 = vpack.c.b16 %v1933, %v1925
    %v2590 = vpack.c.b16 %v1934, %v1926
    %v2591 = vpack.c.b16 %v1935, %v1927
    %v2592 = vpack.c.b16 %v1944, %v1936
    %v2593 = vpack.c.b16 %v1945, %v1937
    %v2594 = vpack.c.b16 %v1946, %v1938
    %v2595 = vpack.c.b16 %v1947, %v1939
    %v2596 = vpack.c.b16 %v1948, %v1940
    %v2597 = vpack.c.b16 %v1949, %v1941
    %v2598 = vpack.c.b16 %v1950, %v1942
    %v2599 = vpack.c.b16 %v1951, %v1943
    %v2600 = vpack.c.b16 %v1960, %v1952
    %v2601 = vpack.c.b16 %v1961, %v1953
    %v2602 = vpack.c.b16 %v1962, %v1954
    %v2603 = vpack.c.b16 %v1963, %v1955
    %v2604 = vpack.c.b16 %v1964, %v1956
    %v2605 = vpack.c.b16 %v1965, %v1957
    %v2606 = vpack.c.b16 %v1966, %v1958
    %v2607 = vpack.c.b16 %v1967, %v1959
    %v2608 = vpack.c.b16 %v1976, %v1968
    %v2609 = vpack.c.b16 %v1977, %v1969
    %v2610 = vpack.c.b16 %v1978, %v1970
    %v2611 = vpack.c.b16 %v1979, %v1971
    %v2612 = vpack.c.b16 %v1980, %v1972
    %v2613 = vpack.c.b16 %v1981, %v1973
    %v2614 = vpack.c.b16 %v1982, %v1974
    %v2615 = vpack.c.b16 %v1983, %v1975
    %v2616 = vpack.c.b16 %v1992, %v1984
    %v2617 = vpack.c.b16 %v1993, %v1985
    %v2618 = vpack.c.b16 %v1994, %v1986
    %v2619 = vpack.c.b16 %v1995, %v1987
    %v2620 = vpack.c.b16 %v1996, %v1988
    %v2621 = vpack.c.b16 %v1997, %v1989
    %v2622 = vpack.c.b16 %v1998, %v1990
    %v2623 = vpack.c.b16 %v1999, %v1991
    %v2624 = vpack.c.b16 %v2008, %v2000
    %v2625 = vpack.c.b16 %v2009, %v2001
    %v2626 = vpack.c.b16 %v2010, %v2002
    %v2627 = vpack.c.b16 %v2011, %v2003
    %v2628 = vpack.c.b16 %v2012, %v2004
    %v2629 = vpack.c.b16 %v2013, %v2005
    %v2630 = vpack.c.b16 %v2014, %v2006
    %v2631 = vpack.c.b16 %v2015, %v2007
    %v2632 = vpack.c.b16 %v2024, %v2016
    %v2633 = vpack.c.b16 %v2025, %v2017
    %v2634 = vpack.c.b16 %v2026, %v2018
    %v2635 = vpack.c.b16 %v2027, %v2019
    %v2636 = vpack.c.b16 %v2028, %v2020
    %v2637 = vpack.c.b16 %v2029, %v2021
    %v2638 = vpack.c.b16 %v2030, %v2022
    %v2639 = vpack.c.b16 %v2031, %v2023
    %v2640 = vpack.c.b16 %v2040, %v2032
    %v2641 = vpack.c.b16 %v2041, %v2033
    %v2642 = vpack.c.b16 %v2042, %v2034
    %v2643 = vpack.c.b16 %v2043, %v2035
    %v2644 = vpack.c.b16 %v2044, %v2036
    %v2645 = vpack.c.b16 %v2045, %v2037
    %v2646 = vpack.c.b16 %v2046, %v2038
    %v2647 = vpack.c.b16 %v2047, %v2039
    %v2648 = vpack.c.b16 %v2056, %v2048
    %v2649 = vpack.c.b16 %v2057, %v2049
    %v2650 = vpack.c.b16 %v2058, %v2050
    %v2651 = vpack.c.b16 %v2059, %v2051
    %v2652 = vpack.c.b16 %v2060, %v2052
    %v2653 = vpack.c.b16 %v2061, %v2053
    %v2654 = vpack.c.b16 %v2062, %v2054
    %v2655 = vpack.c.b16 %v2063, %v2055
    %v2656 = vpack.c.b16 %v2072, %v2064
    %v2657 = vpack.c.b16 %v2073, %v2065
    %v2658 = vpack.c.b16 %v2074, %v2066
    %v2659 = vpack.c.b16 %v2075, %v2067
    %v2660 = vpack.c.b16 %v2076, %v2068
    %v2661 = vpack.c.b16 %v2077, %v2069
    %v2662 = vpack.c.b16 %v2078, %v2070
    %v2663 = vpack.c.b16 %v2079, %v2071
    %v2664 = vpack.c.b16 %v2088, %v2080
    %v2665 = vpack.c.b16 %v2089, %v2081
    %v2666 = vpack.c.b16 %v2090, %v2082
    %v2667 = vpack.c.b16 %v2091, %v2083
    %v2668 = vpack.c.b16 %v2092, %v2084
    %v2669 = vpack.c.b16 %v2093, %v2085
    %v2670 = vpack.c.b16 %v2094, %v2086
    %v2671 = vpack.c.b16 %v2095, %v2087
    %v2672 = vpack.c.b16 %v2104, %v2096
    %v2673 = vpack.c.b16 %v2105, %v2097
    %v2674 = vpack.c.b16 %v2106, %v2098
    %v2675 = vpack.c.b16 %v2107, %v2099
    %v2676 = vpack.c.b16 %v2108, %v2100
    %v2677 = vpack.c.b16 %v2109, %v2101
    %v2678 = vpack.c.b16 %v2110, %v2102
    %v2679 = vpack.c.b16 %v2111, %v2103
    %v2680 = vpack.c.b16 %v2120, %v2112
    %v2681 = vpack.c.b16 %v2121, %v2113
    %v2682 = vpack.c.b16 %v2122, %v2114
    %v2683 = vpack.c.b16 %v2123, %v2115
    %v2684 = vpack.c.b16 %v2124, %v2116
    %v2685 = vpack.c.b16 %v2125, %v2117
    %v2686 = vpack.c.b16 %v2126, %v2118
    %v2687 = vpack.c.b16 %v2127, %v2119
    %v2688 = vpack.c.b16 %v2136, %v2128
    %v2689 = vpack.c.b16 %v2137, %v2129
    %v2690 = vpack.c.b16 %v2138, %v2130
    %v2691 = vpack.c.b16 %v2139, %v2131
    %v2692 = vpack.c.b16 %v2140, %v2132
    %v2693 = vpack.c.b16 %v2141, %v2133
    %v2694 = vpack.c.b16 %v2142, %v2134
    %v2695 = vpack.c.b16 %v2143, %v2135
    %v2696 = vpack.c.b16 %v2152, %v2144
    %v2697 = vpack.c.b16 %v2153, %v2145
    %v2698 = vpack.c.b16 %v2154, %v2146
    %v2699 = vpack.c.b16 %v2155, %v2147
    %v2700 = vpack.c.b16 %v2156, %v2148
    %v2701 = vpack.c.b16 %v2157, %v2149
    %v2702 = vpack.c.b16 %v2158, %v2150
    %v2703 = vpack.c.b16 %v2159, %v2151
    %v2704 = vpack.c.b16 %v2168, %v2160
    %v2705 = vpack.c.b16 %v2169, %v2161
    %v2706 = vpack.c.b16 %v2170, %v2162
    %v2707 = vpack.c.b16 %v2171, %v2163
    %v2708 = vpack.c.b16 %v2172, %v2164
    %v2709 = vpack.c.b16 %v2173, %v2165
    %v2710 = vpack.c.b16 %v2174, %v2166
    %v2711 = vpack.c.b16 %v2175, %v2167
    %v2712 = vpack.c.b16 %v2184, %v2176
    %v2713 = vpack.c.b16 %v2185, %v2177
    %v2714 = vpack.c.b16 %v2186, %v2178
    %v2715 = vpack.c.b16 %v2187, %v2179
    %v2716 = vpack.c.b16 %v2188, %v2180
    %v2717 = vpack.c.b16 %v2189, %v2181
    %v2718 = vpack.c.b16 %v2190, %v2182
    %v2719 = vpack.c.b16 %v2191, %v2183
    %v2720 = vpack.c.b16 %v2200, %v2192
    %v2721 = vpack.c.b16 %v2201, %v2193
    %v2722 = vpack.c.b16 %v2202, %v2194
    %v2723 = vpack.c.b16 %v2203, %v2195
    %v2724 = vpack.c.b16 %v2204, %v2196
    %v2725 = vpack.c.b16 %v2205, %v2197
    %v2726 = vpack.c.b16 %v2206, %v2198
    %v2727 = vpack.c.b16 %v2207, %v2199
    %v2728 = vpack.c.b16 %v2216, %v2208
    %v2729 = vpack.c.b16 %v2217, %v2209
    %v2730 = vpack.c.b16 %v2218, %v2210
    %v2731 = vpack.c.b16 %v2219, %v2211
    %v2732 = vpack.c.b16 %v2220, %v2212
    %v2733 = vpack.c.b16 %v2221, %v2213
    %v2734 = vpack.c.b16 %v2222, %v2214
    %v2735 = vpack.c.b16 %v2223, %v2215
    %3248 = vmatprep.subr.bf16.mxu0 %v2281
    %3249 = vmatpush1.bf16.xpose.msra.mxu0 %v2280
    %3250 = vmatprep.subr.bf16.mxu0 %v2273
    %3251 = vmatpush1.bf16.xpose.msra.mxu0 %v2272
    %3252 = vmatprep.subr.bf16.mxu0 %v2265
    %3253 = vmatpush1.bf16.xpose.msra.mxu0 %v2264
    %3254 = vmatprep.subr.bf16.mxu0 %v2257
    %3255 = vmatpush1.bf16.xpose.msra.mxu0 %v2256
    %3256 = vmatprep.subr.bf16.mxu0 %v2249
    %3257 = vmatpush1.bf16.xpose.msra.mxu0 %v2248
    %3258 = vmatprep.subr.bf16.mxu0 %v2241
    %3259 = vmatpush1.bf16.xpose.msra.mxu0 %v2240
    %3260 = vmatprep.subr.bf16.mxu0 %v2233
    %3261 = vmatpush1.bf16.xpose.msra.mxu0 %v2232
    %3262 = vmatprep.subr.bf16.mxu0 %v2225
    %3263 = vmatpush1.bf16.xpose.msra.mxu0 %v2224
    %3264 = vmatprep.subr.bf16.mxu0 %v2345
    %3265 = vmatpush2.bf16.xpose.msra.mxu0 %v2344
    %3266 = vmatprep.subr.bf16.mxu0 %v2337
    %3267 = vmatpush2.bf16.xpose.msra.mxu0 %v2336
    %3268 = vmatprep.subr.bf16.mxu0 %v2329
    %3269 = vmatpush2.bf16.xpose.msra.mxu0 %v2328
    %3270 = vmatprep.subr.bf16.mxu0 %v2321
    %3271 = vmatpush2.bf16.xpose.msra.mxu0 %v2320
    %3272 = vmatprep.subr.bf16.mxu0 %v2313
    %3273 = vmatpush2.bf16.xpose.msra.mxu0 %v2312
    %3274 = vmatprep.subr.bf16.mxu0 %v2305
    %3275 = vmatpush2.bf16.xpose.msra.mxu0 %v2304
    %3276 = vmatprep.subr.bf16.mxu0 %v2297
    %3277 = vmatpush2.bf16.xpose.msra.mxu0 %v2296
    %3278 = vmatprep.subr.bf16.mxu0 %v2289
    %3279 = vmatpush2.bf16.xpose.msra.mxu0 %v2288
    %3280 = vmatprep.mubr.bf16.mxu0 %v668
    %3281 = vmatmul.mubr.bf16.gmra.mxu0 %v654
    %v3282 = vpop.f32.mrf.mxu0
    %v3283 = vadd.f32 %v593, %v3282
    %v3284 = vpop.f32.mrf.mxu0
    %v3285 = vadd.f32 %v597, %v3284
    %v3286 = vpop.f32.mrf.mxu0
    %v3287 = vpop.f32.mrf.mxu0
    %3288 = vdwg.mxu0
    %3289 = vmatprep.subr.bf16.mxu0 %v2283
    %3290 = vmatpush1.bf16.xpose.msra.mxu0 %v2282
    %3291 = vmatprep.subr.bf16.mxu0 %v2275
    %3292 = vmatpush1.bf16.xpose.msra.mxu0 %v2274
    %3293 = vmatprep.subr.bf16.mxu0 %v2267
    %3294 = vmatpush1.bf16.xpose.msra.mxu0 %v2266
    %3295 = vmatprep.subr.bf16.mxu0 %v2259
    %3296 = vmatpush1.bf16.xpose.msra.mxu0 %v2258
    %3297 = vmatprep.subr.bf16.mxu0 %v2251
    %3298 = vmatpush1.bf16.xpose.msra.mxu0 %v2250
    %3299 = vmatprep.subr.bf16.mxu0 %v2243
    %3300 = vmatpush1.bf16.xpose.msra.mxu0 %v2242
    %3301 = vmatprep.subr.bf16.mxu0 %v2235
    %3302 = vmatpush1.bf16.xpose.msra.mxu0 %v2234
    %3303 = vmatprep.subr.bf16.mxu0 %v2227
    %3304 = vmatpush1.bf16.xpose.msra.mxu0 %v2226
    %3305 = vmatprep.subr.bf16.mxu0 %v2347
    %3306 = vmatpush2.bf16.xpose.msra.mxu0 %v2346
    %3307 = vmatprep.subr.bf16.mxu0 %v2339
    %3308 = vmatpush2.bf16.xpose.msra.mxu0 %v2338
    %3309 = vmatprep.subr.bf16.mxu0 %v2331
    %3310 = vmatpush2.bf16.xpose.msra.mxu0 %v2330
    %3311 = vmatprep.subr.bf16.mxu0 %v2323
    %3312 = vmatpush2.bf16.xpose.msra.mxu0 %v2322
    %3313 = vmatprep.subr.bf16.mxu0 %v2315
    %3314 = vmatpush2.bf16.xpose.msra.mxu0 %v2314
    %3315 = vmatprep.subr.bf16.mxu0 %v2307
    %3316 = vmatpush2.bf16.xpose.msra.mxu0 %v2306
    %3317 = vmatprep.subr.bf16.mxu0 %v2299
    %3318 = vmatpush2.bf16.xpose.msra.mxu0 %v2298
    %3319 = vmatprep.subr.bf16.mxu0 %v2291
    %3320 = vmatpush2.bf16.xpose.msra.mxu0 %v2290
    %3321 = vmatprep.mubr.bf16.mxu0 %v678
    %3322 = vmatmul.mubr.bf16.gmra.mxu0 %v676
    %v3323 = vpop.f32.mrf.mxu0
    %v3324 = vadd.f32 %v3283, %v3323
    %v3325 = vpop.f32.mrf.mxu0
    %v3326 = vadd.f32 %v3285, %v3325
    %v3327 = vpop.f32.mrf.mxu0
    %v3328 = vpop.f32.mrf.mxu0
    %3329 = vdwg.mxu0
    %3330 = vmatprep.subr.bf16.mxu0 %v2285
    %3331 = vmatpush1.bf16.xpose.msra.mxu0 %v2284
    %3332 = vmatprep.subr.bf16.mxu0 %v2277
    %3333 = vmatpush1.bf16.xpose.msra.mxu0 %v2276
    %3334 = vmatprep.subr.bf16.mxu0 %v2269
    %3335 = vmatpush1.bf16.xpose.msra.mxu0 %v2268
    %3336 = vmatprep.subr.bf16.mxu0 %v2261
    %3337 = vmatpush1.bf16.xpose.msra.mxu0 %v2260
    %3338 = vmatprep.subr.bf16.mxu0 %v2253
    %3339 = vmatpush1.bf16.xpose.msra.mxu0 %v2252
    %3340 = vmatprep.subr.bf16.mxu0 %v2245
    %3341 = vmatpush1.bf16.xpose.msra.mxu0 %v2244
    %3342 = vmatprep.subr.bf16.mxu0 %v2237
    %3343 = vmatpush1.bf16.xpose.msra.mxu0 %v2236
    %3344 = vmatprep.subr.bf16.mxu0 %v2229
    %3345 = vmatpush1.bf16.xpose.msra.mxu0 %v2228
    %3346 = vmatprep.subr.bf16.mxu0 %v2349
    %3347 = vmatpush2.bf16.xpose.msra.mxu0 %v2348
    %3348 = vmatprep.subr.bf16.mxu0 %v2341
    %3349 = vmatpush2.bf16.xpose.msra.mxu0 %v2340
    %3350 = vmatprep.subr.bf16.mxu0 %v2333
    %3351 = vmatpush2.bf16.xpose.msra.mxu0 %v2332
    %3352 = vmatprep.subr.bf16.mxu0 %v2325
    %3353 = vmatpush2.bf16.xpose.msra.mxu0 %v2324
    %3354 = vmatprep.subr.bf16.mxu0 %v2317
    %3355 = vmatpush2.bf16.xpose.msra.mxu0 %v2316
    %3356 = vmatprep.subr.bf16.mxu0 %v2309
    %3357 = vmatpush2.bf16.xpose.msra.mxu0 %v2308
    %3358 = vmatprep.subr.bf16.mxu0 %v2301
    %3359 = vmatpush2.bf16.xpose.msra.mxu0 %v2300
    %3360 = vmatprep.subr.bf16.mxu0 %v2293
    %3361 = vmatpush2.bf16.xpose.msra.mxu0 %v2292
    %3362 = vmatprep.mubr.bf16.mxu0 %v675
    %3363 = vmatmul.mubr.bf16.gmra.mxu0 %v661
    %v3364 = vpop.f32.mrf.mxu0
    %v3365 = vadd.f32 %v3324, %v3364
    %v3366 = vpop.f32.mrf.mxu0
    %v3367 = vadd.f32 %v3326, %v3366
    %v3368 = vpop.f32.mrf.mxu0
    %v3369 = vpop.f32.mrf.mxu0
    %3370 = vdwg.mxu0
    %3371 = vmatprep.subr.bf16.mxu0 %v2287
    %3372 = vmatpush1.bf16.xpose.msra.mxu0 %v2286
    %3373 = vmatprep.subr.bf16.mxu0 %v2279
    %3374 = vmatpush1.bf16.xpose.msra.mxu0 %v2278
    %3375 = vmatprep.subr.bf16.mxu0 %v2271
    %3376 = vmatpush1.bf16.xpose.msra.mxu0 %v2270
    %3377 = vmatprep.subr.bf16.mxu0 %v2263
    %3378 = vmatpush1.bf16.xpose.msra.mxu0 %v2262
    %3379 = vmatprep.subr.bf16.mxu0 %v2255
    %3380 = vmatpush1.bf16.xpose.msra.mxu0 %v2254
    %3381 = vmatprep.subr.bf16.mxu0 %v2247
    %3382 = vmatpush1.bf16.xpose.msra.mxu0 %v2246
    %3383 = vmatprep.subr.bf16.mxu0 %v2239
    %3384 = vmatpush1.bf16.xpose.msra.mxu0 %v2238
    %3385 = vmatprep.subr.bf16.mxu0 %v2231
    %3386 = vmatpush1.bf16.xpose.msra.mxu0 %v2230
    %3387 = vmatprep.subr.bf16.mxu0 %v2351
    %3388 = vmatpush2.bf16.xpose.msra.mxu0 %v2350
    %3389 = vmatprep.subr.bf16.mxu0 %v2343
    %3390 = vmatpush2.bf16.xpose.msra.mxu0 %v2342
    %3391 = vmatprep.subr.bf16.mxu0 %v2335
    %3392 = vmatpush2.bf16.xpose.msra.mxu0 %v2334
    %3393 = vmatprep.subr.bf16.mxu0 %v2327
    %3394 = vmatpush2.bf16.xpose.msra.mxu0 %v2326
    %3395 = vmatprep.subr.bf16.mxu0 %v2319
    %3396 = vmatpush2.bf16.xpose.msra.mxu0 %v2318
    %3397 = vmatprep.subr.bf16.mxu0 %v2311
    %3398 = vmatpush2.bf16.xpose.msra.mxu0 %v2310
    %3399 = vmatprep.subr.bf16.mxu0 %v2303
    %3400 = vmatpush2.bf16.xpose.msra.mxu0 %v2302
    %3401 = vmatprep.subr.bf16.mxu0 %v2295
    %3402 = vmatpush2.bf16.xpose.msra.mxu0 %v2294
    %3403 = vmatprep.mubr.bf16.mxu0 %v679
    %3404 = vmatmul.mubr.bf16.gmra.mxu0 %v677
    %v3405 = vpop.f32.mrf.mxu0
    %v3406 = vadd.f32 %v3365, %v3405
    %v3407 = vpop.f32.mrf.mxu0
    %v3408 = vadd.f32 %v3367, %v3407
    %v3409 = vpop.f32.mrf.mxu0
    %v3410 = vpop.f32.mrf.mxu0
    %3411 = vdwg.mxu0
    %3412 = vmatprep.subr.bf16.mxu0 %v2409
    %3413 = vmatpush1.bf16.xpose.msra.mxu0 %v2408
    %3414 = vmatprep.subr.bf16.mxu0 %v2401
    %3415 = vmatpush1.bf16.xpose.msra.mxu0 %v2400
    %3416 = vmatprep.subr.bf16.mxu0 %v2393
    %3417 = vmatpush1.bf16.xpose.msra.mxu0 %v2392
    %3418 = vmatprep.subr.bf16.mxu0 %v2385
    %3419 = vmatpush1.bf16.xpose.msra.mxu0 %v2384
    %3420 = vmatprep.subr.bf16.mxu0 %v2377
    %3421 = vmatpush1.bf16.xpose.msra.mxu0 %v2376
    %3422 = vmatprep.subr.bf16.mxu0 %v2369
    %3423 = vmatpush1.bf16.xpose.msra.mxu0 %v2368
    %3424 = vmatprep.subr.bf16.mxu0 %v2361
    %3425 = vmatpush1.bf16.xpose.msra.mxu0 %v2360
    %3426 = vmatprep.subr.bf16.mxu0 %v2353
    %3427 = vmatpush1.bf16.xpose.msra.mxu0 %v2352
    %3428 = vmatprep.subr.bf16.mxu0 %v2473
    %3429 = vmatpush2.bf16.xpose.msra.mxu0 %v2472
    %3430 = vmatprep.subr.bf16.mxu0 %v2465
    %3431 = vmatpush2.bf16.xpose.msra.mxu0 %v2464
    %3432 = vmatprep.subr.bf16.mxu0 %v2457
    %3433 = vmatpush2.bf16.xpose.msra.mxu0 %v2456
    %3434 = vmatprep.subr.bf16.mxu0 %v2449
    %3435 = vmatpush2.bf16.xpose.msra.mxu0 %v2448
    %3436 = vmatprep.subr.bf16.mxu0 %v2441
    %3437 = vmatpush2.bf16.xpose.msra.mxu0 %v2440
    %3438 = vmatprep.subr.bf16.mxu0 %v2433
    %3439 = vmatpush2.bf16.xpose.msra.mxu0 %v2432
    %3440 = vmatprep.subr.bf16.mxu0 %v2425
    %3441 = vmatpush2.bf16.xpose.msra.mxu0 %v2424
    %3442 = vmatprep.subr.bf16.mxu0 %v2417
    %3443 = vmatpush2.bf16.xpose.msra.mxu0 %v2416
    %3444 = vmatprep.mubr.bf16.mxu0 %v668
    %3445 = vmatmul.mubr.bf16.gmra.mxu0 %v654
    %v3446 = vpop.f32.mrf.mxu0
    %v3447 = vadd.f32 %v601, %v3446
    %v3448 = vpop.f32.mrf.mxu0
    %v3449 = vadd.f32 %v605, %v3448
    %v3450 = vpop.f32.mrf.mxu0
    %v3451 = vpop.f32.mrf.mxu0
    %3452 = vdwg.mxu0
    %3453 = vmatprep.subr.bf16.mxu0 %v2411
    %3454 = vmatpush1.bf16.xpose.msra.mxu0 %v2410
    %3455 = vmatprep.subr.bf16.mxu0 %v2403
    %3456 = vmatpush1.bf16.xpose.msra.mxu0 %v2402
    %3457 = vmatprep.subr.bf16.mxu0 %v2395
    %3458 = vmatpush1.bf16.xpose.msra.mxu0 %v2394
    %3459 = vmatprep.subr.bf16.mxu0 %v2387
    %3460 = vmatpush1.bf16.xpose.msra.mxu0 %v2386
    %3461 = vmatprep.subr.bf16.mxu0 %v2379
    %3462 = vmatpush1.bf16.xpose.msra.mxu0 %v2378
    %3463 = vmatprep.subr.bf16.mxu0 %v2371
    %3464 = vmatpush1.bf16.xpose.msra.mxu0 %v2370
    %3465 = vmatprep.subr.bf16.mxu0 %v2363
    %3466 = vmatpush1.bf16.xpose.msra.mxu0 %v2362
    %3467 = vmatprep.subr.bf16.mxu0 %v2355
    %3468 = vmatpush1.bf16.xpose.msra.mxu0 %v2354
    %3469 = vmatprep.subr.bf16.mxu0 %v2475
    %3470 = vmatpush2.bf16.xpose.msra.mxu0 %v2474
    %3471 = vmatprep.subr.bf16.mxu0 %v2467
    %3472 = vmatpush2.bf16.xpose.msra.mxu0 %v2466
    %3473 = vmatprep.subr.bf16.mxu0 %v2459
    %3474 = vmatpush2.bf16.xpose.msra.mxu0 %v2458
    %3475 = vmatprep.subr.bf16.mxu0 %v2451
    %3476 = vmatpush2.bf16.xpose.msra.mxu0 %v2450
    %3477 = vmatprep.subr.bf16.mxu0 %v2443
    %3478 = vmatpush2.bf16.xpose.msra.mxu0 %v2442
    %3479 = vmatprep.subr.bf16.mxu0 %v2435
    %3480 = vmatpush2.bf16.xpose.msra.mxu0 %v2434
    %3481 = vmatprep.subr.bf16.mxu0 %v2427
    %3482 = vmatpush2.bf16.xpose.msra.mxu0 %v2426
    %3483 = vmatprep.subr.bf16.mxu0 %v2419
    %3484 = vmatpush2.bf16.xpose.msra.mxu0 %v2418
    %3485 = vmatprep.mubr.bf16.mxu0 %v678
    %3486 = vmatmul.mubr.bf16.gmra.mxu0 %v676
    %v3487 = vpop.f32.mrf.mxu0
    %v3488 = vadd.f32 %v3447, %v3487
    %v3489 = vpop.f32.mrf.mxu0
    %v3490 = vadd.f32 %v3449, %v3489
    %v3491 = vpop.f32.mrf.mxu0
    %v3492 = vpop.f32.mrf.mxu0
    %3493 = vdwg.mxu0
    %3494 = vmatprep.subr.bf16.mxu0 %v2413
    %3495 = vmatpush1.bf16.xpose.msra.mxu0 %v2412
    %3496 = vmatprep.subr.bf16.mxu0 %v2405
    %3497 = vmatpush1.bf16.xpose.msra.mxu0 %v2404
    %3498 = vmatprep.subr.bf16.mxu0 %v2397
    %3499 = vmatpush1.bf16.xpose.msra.mxu0 %v2396
    %3500 = vmatprep.subr.bf16.mxu0 %v2389
    %3501 = vmatpush1.bf16.xpose.msra.mxu0 %v2388
    %3502 = vmatprep.subr.bf16.mxu0 %v2381
    %3503 = vmatpush1.bf16.xpose.msra.mxu0 %v2380
    %3504 = vmatprep.subr.bf16.mxu0 %v2373
    %3505 = vmatpush1.bf16.xpose.msra.mxu0 %v2372
    %3506 = vmatprep.subr.bf16.mxu0 %v2365
    %3507 = vmatpush1.bf16.xpose.msra.mxu0 %v2364
    %3508 = vmatprep.subr.bf16.mxu0 %v2357
    %3509 = vmatpush1.bf16.xpose.msra.mxu0 %v2356
    %3510 = vmatprep.subr.bf16.mxu0 %v2477
    %3511 = vmatpush2.bf16.xpose.msra.mxu0 %v2476
    %3512 = vmatprep.subr.bf16.mxu0 %v2469
    %3513 = vmatpush2.bf16.xpose.msra.mxu0 %v2468
    %3514 = vmatprep.subr.bf16.mxu0 %v2461
    %3515 = vmatpush2.bf16.xpose.msra.mxu0 %v2460
    %3516 = vmatprep.subr.bf16.mxu0 %v2453
    %3517 = vmatpush2.bf16.xpose.msra.mxu0 %v2452
    %3518 = vmatprep.subr.bf16.mxu0 %v2445
    %3519 = vmatpush2.bf16.xpose.msra.mxu0 %v2444
    %3520 = vmatprep.subr.bf16.mxu0 %v2437
    %3521 = vmatpush2.bf16.xpose.msra.mxu0 %v2436
    %3522 = vmatprep.subr.bf16.mxu0 %v2429
    %3523 = vmatpush2.bf16.xpose.msra.mxu0 %v2428
    %3524 = vmatprep.subr.bf16.mxu0 %v2421
    %3525 = vmatpush2.bf16.xpose.msra.mxu0 %v2420
    %3526 = vmatprep.mubr.bf16.mxu0 %v675
    %3527 = vmatmul.mubr.bf16.gmra.mxu0 %v661
    %v3528 = vpop.f32.mrf.mxu0
    %v3529 = vadd.f32 %v3488, %v3528
    %v3530 = vpop.f32.mrf.mxu0
    %v3531 = vadd.f32 %v3490, %v3530
    %v3532 = vpop.f32.mrf.mxu0
    %v3533 = vpop.f32.mrf.mxu0
    %3534 = vdwg.mxu0
    %3535 = vmatprep.subr.bf16.mxu0 %v2415
    %3536 = vmatpush1.bf16.xpose.msra.mxu0 %v2414
    %3537 = vmatprep.subr.bf16.mxu0 %v2407
    %3538 = vmatpush1.bf16.xpose.msra.mxu0 %v2406
    %3539 = vmatprep.subr.bf16.mxu0 %v2399
    %3540 = vmatpush1.bf16.xpose.msra.mxu0 %v2398
    %3541 = vmatprep.subr.bf16.mxu0 %v2391
    %3542 = vmatpush1.bf16.xpose.msra.mxu0 %v2390
    %3543 = vmatprep.subr.bf16.mxu0 %v2383
    %3544 = vmatpush1.bf16.xpose.msra.mxu0 %v2382
    %3545 = vmatprep.subr.bf16.mxu0 %v2375
    %3546 = vmatpush1.bf16.xpose.msra.mxu0 %v2374
    %3547 = vmatprep.subr.bf16.mxu0 %v2367
    %3548 = vmatpush1.bf16.xpose.msra.mxu0 %v2366
    %3549 = vmatprep.subr.bf16.mxu0 %v2359
    %3550 = vmatpush1.bf16.xpose.msra.mxu0 %v2358
    %3551 = vmatprep.subr.bf16.mxu0 %v2479
    %3552 = vmatpush2.bf16.xpose.msra.mxu0 %v2478
    %3553 = vmatprep.subr.bf16.mxu0 %v2471
    %3554 = vmatpush2.bf16.xpose.msra.mxu0 %v2470
    %3555 = vmatprep.subr.bf16.mxu0 %v2463
    %3556 = vmatpush2.bf16.xpose.msra.mxu0 %v2462
    %3557 = vmatprep.subr.bf16.mxu0 %v2455
    %3558 = vmatpush2.bf16.xpose.msra.mxu0 %v2454
    %3559 = vmatprep.subr.bf16.mxu0 %v2447
    %3560 = vmatpush2.bf16.xpose.msra.mxu0 %v2446
    %3561 = vmatprep.subr.bf16.mxu0 %v2439
    %3562 = vmatpush2.bf16.xpose.msra.mxu0 %v2438
    %3563 = vmatprep.subr.bf16.mxu0 %v2431
    %3564 = vmatpush2.bf16.xpose.msra.mxu0 %v2430
    %3565 = vmatprep.subr.bf16.mxu0 %v2423
    %3566 = vmatpush2.bf16.xpose.msra.mxu0 %v2422
    %3567 = vmatprep.mubr.bf16.mxu0 %v679
    %3568 = vmatmul.mubr.bf16.gmra.mxu0 %v677
    %v3569 = vpop.f32.mrf.mxu0
    %v3570 = vadd.f32 %v3529, %v3569
    %v3571 = vpop.f32.mrf.mxu0
    %v3572 = vadd.f32 %v3531, %v3571
    %v3573 = vpop.f32.mrf.mxu0
    %v3574 = vpop.f32.mrf.mxu0
    %3575 = vdwg.mxu0
    %3576 = vmatprep.subr.bf16.mxu0 %v2537
    %3577 = vmatpush1.bf16.xpose.msra.mxu0 %v2536
    %3578 = vmatprep.subr.bf16.mxu0 %v2529
    %3579 = vmatpush1.bf16.xpose.msra.mxu0 %v2528
    %3580 = vmatprep.subr.bf16.mxu0 %v2521
    %3581 = vmatpush1.bf16.xpose.msra.mxu0 %v2520
    %3582 = vmatprep.subr.bf16.mxu0 %v2513
    %3583 = vmatpush1.bf16.xpose.msra.mxu0 %v2512
    %3584 = vmatprep.subr.bf16.mxu0 %v2505
    %3585 = vmatpush1.bf16.xpose.msra.mxu0 %v2504
    %3586 = vmatprep.subr.bf16.mxu0 %v2497
    %3587 = vmatpush1.bf16.xpose.msra.mxu0 %v2496
    %3588 = vmatprep.subr.bf16.mxu0 %v2489
    %3589 = vmatpush1.bf16.xpose.msra.mxu0 %v2488
    %3590 = vmatprep.subr.bf16.mxu0 %v2481
    %3591 = vmatpush1.bf16.xpose.msra.mxu0 %v2480
    %3592 = vmatprep.subr.bf16.mxu0 %v2601
    %3593 = vmatpush2.bf16.xpose.msra.mxu0 %v2600
    %3594 = vmatprep.subr.bf16.mxu0 %v2593
    %3595 = vmatpush2.bf16.xpose.msra.mxu0 %v2592
    %3596 = vmatprep.subr.bf16.mxu0 %v2585
    %3597 = vmatpush2.bf16.xpose.msra.mxu0 %v2584
    %3598 = vmatprep.subr.bf16.mxu0 %v2577
    %3599 = vmatpush2.bf16.xpose.msra.mxu0 %v2576
    %3600 = vmatprep.subr.bf16.mxu0 %v2569
    %3601 = vmatpush2.bf16.xpose.msra.mxu0 %v2568
    %3602 = vmatprep.subr.bf16.mxu0 %v2561
    %3603 = vmatpush2.bf16.xpose.msra.mxu0 %v2560
    %3604 = vmatprep.subr.bf16.mxu0 %v2553
    %3605 = vmatpush2.bf16.xpose.msra.mxu0 %v2552
    %3606 = vmatprep.subr.bf16.mxu0 %v2545
    %3607 = vmatpush2.bf16.xpose.msra.mxu0 %v2544
    %3608 = vmatprep.mubr.bf16.mxu0 %v668
    %3609 = vmatmul.mubr.bf16.gmra.mxu0 %v654
    %v3610 = vpop.f32.mrf.mxu0
    %v3611 = vadd.f32 %v609, %v3610
    %v3612 = vpop.f32.mrf.mxu0
    %v3613 = vadd.f32 %v613, %v3612
    %v3614 = vpop.f32.mrf.mxu0
    %v3615 = vpop.f32.mrf.mxu0
    %3616 = vdwg.mxu0
    %3617 = vmatprep.subr.bf16.mxu0 %v2539
    %3618 = vmatpush1.bf16.xpose.msra.mxu0 %v2538
    %3619 = vmatprep.subr.bf16.mxu0 %v2531
    %3620 = vmatpush1.bf16.xpose.msra.mxu0 %v2530
    %3621 = vmatprep.subr.bf16.mxu0 %v2523
    %3622 = vmatpush1.bf16.xpose.msra.mxu0 %v2522
    %3623 = vmatprep.subr.bf16.mxu0 %v2515
    %3624 = vmatpush1.bf16.xpose.msra.mxu0 %v2514
    %3625 = vmatprep.subr.bf16.mxu0 %v2507
    %3626 = vmatpush1.bf16.xpose.msra.mxu0 %v2506
    %3627 = vmatprep.subr.bf16.mxu0 %v2499
    %3628 = vmatpush1.bf16.xpose.msra.mxu0 %v2498
    %3629 = vmatprep.subr.bf16.mxu0 %v2491
    %3630 = vmatpush1.bf16.xpose.msra.mxu0 %v2490
    %3631 = vmatprep.subr.bf16.mxu0 %v2483
    %3632 = vmatpush1.bf16.xpose.msra.mxu0 %v2482
    %3633 = vmatprep.subr.bf16.mxu0 %v2603
    %3634 = vmatpush2.bf16.xpose.msra.mxu0 %v2602
    %3635 = vmatprep.subr.bf16.mxu0 %v2595
    %3636 = vmatpush2.bf16.xpose.msra.mxu0 %v2594
    %3637 = vmatprep.subr.bf16.mxu0 %v2587
    %3638 = vmatpush2.bf16.xpose.msra.mxu0 %v2586
    %3639 = vmatprep.subr.bf16.mxu0 %v2579
    %3640 = vmatpush2.bf16.xpose.msra.mxu0 %v2578
    %3641 = vmatprep.subr.bf16.mxu0 %v2571
    %3642 = vmatpush2.bf16.xpose.msra.mxu0 %v2570
    %3643 = vmatprep.subr.bf16.mxu0 %v2563
    %3644 = vmatpush2.bf16.xpose.msra.mxu0 %v2562
    %3645 = vmatprep.subr.bf16.mxu0 %v2555
    %3646 = vmatpush2.bf16.xpose.msra.mxu0 %v2554
    %3647 = vmatprep.subr.bf16.mxu0 %v2547
    %3648 = vmatpush2.bf16.xpose.msra.mxu0 %v2546
    %3649 = vmatprep.mubr.bf16.mxu0 %v678
    %3650 = vmatmul.mubr.bf16.gmra.mxu0 %v676
    %v3651 = vpop.f32.mrf.mxu0
    %v3652 = vadd.f32 %v3611, %v3651
    %v3653 = vpop.f32.mrf.mxu0
    %v3654 = vadd.f32 %v3613, %v3653
    %v3655 = vpop.f32.mrf.mxu0
    %v3656 = vpop.f32.mrf.mxu0
    %3657 = vdwg.mxu0
    %3658 = vmatprep.subr.bf16.mxu0 %v2541
    %3659 = vmatpush1.bf16.xpose.msra.mxu0 %v2540
    %3660 = vmatprep.subr.bf16.mxu0 %v2533
    %3661 = vmatpush1.bf16.xpose.msra.mxu0 %v2532
    %3662 = vmatprep.subr.bf16.mxu0 %v2525
    %3663 = vmatpush1.bf16.xpose.msra.mxu0 %v2524
    %3664 = vmatprep.subr.bf16.mxu0 %v2517
    %3665 = vmatpush1.bf16.xpose.msra.mxu0 %v2516
    %3666 = vmatprep.subr.bf16.mxu0 %v2509
    %3667 = vmatpush1.bf16.xpose.msra.mxu0 %v2508
    %3668 = vmatprep.subr.bf16.mxu0 %v2501
    %3669 = vmatpush1.bf16.xpose.msra.mxu0 %v2500
    %3670 = vmatprep.subr.bf16.mxu0 %v2493
    %3671 = vmatpush1.bf16.xpose.msra.mxu0 %v2492
    %3672 = vmatprep.subr.bf16.mxu0 %v2485
    %3673 = vmatpush1.bf16.xpose.msra.mxu0 %v2484
    %3674 = vmatprep.subr.bf16.mxu0 %v2605
    %3675 = vmatpush2.bf16.xpose.msra.mxu0 %v2604
    %3676 = vmatprep.subr.bf16.mxu0 %v2597
    %3677 = vmatpush2.bf16.xpose.msra.mxu0 %v2596
    %3678 = vmatprep.subr.bf16.mxu0 %v2589
    %3679 = vmatpush2.bf16.xpose.msra.mxu0 %v2588
    %3680 = vmatprep.subr.bf16.mxu0 %v2581
    %3681 = vmatpush2.bf16.xpose.msra.mxu0 %v2580
    %3682 = vmatprep.subr.bf16.mxu0 %v2573
    %3683 = vmatpush2.bf16.xpose.msra.mxu0 %v2572
    %3684 = vmatprep.subr.bf16.mxu0 %v2565
    %3685 = vmatpush2.bf16.xpose.msra.mxu0 %v2564
    %3686 = vmatprep.subr.bf16.mxu0 %v2557
    %3687 = vmatpush2.bf16.xpose.msra.mxu0 %v2556
    %3688 = vmatprep.subr.bf16.mxu0 %v2549
    %3689 = vmatpush2.bf16.xpose.msra.mxu0 %v2548
    %3690 = vmatprep.mubr.bf16.mxu0 %v675
    %3691 = vmatmul.mubr.bf16.gmra.mxu0 %v661
    %v3692 = vpop.f32.mrf.mxu0
    %v3693 = vadd.f32 %v3652, %v3692
    %v3694 = vpop.f32.mrf.mxu0
    %v3695 = vadd.f32 %v3654, %v3694
    %v3696 = vpop.f32.mrf.mxu0
    %v3697 = vpop.f32.mrf.mxu0
    %3698 = vdwg.mxu0
    %3699 = vmatprep.subr.bf16.mxu0 %v2543
    %3700 = vmatpush1.bf16.xpose.msra.mxu0 %v2542
    %3701 = vmatprep.subr.bf16.mxu0 %v2535
    %3702 = vmatpush1.bf16.xpose.msra.mxu0 %v2534
    %3703 = vmatprep.subr.bf16.mxu0 %v2527
    %3704 = vmatpush1.bf16.xpose.msra.mxu0 %v2526
    %3705 = vmatprep.subr.bf16.mxu0 %v2519
    %3706 = vmatpush1.bf16.xpose.msra.mxu0 %v2518
    %3707 = vmatprep.subr.bf16.mxu0 %v2511
    %3708 = vmatpush1.bf16.xpose.msra.mxu0 %v2510
    %3709 = vmatprep.subr.bf16.mxu0 %v2503
    %3710 = vmatpush1.bf16.xpose.msra.mxu0 %v2502
    %3711 = vmatprep.subr.bf16.mxu0 %v2495
    %3712 = vmatpush1.bf16.xpose.msra.mxu0 %v2494
    %3713 = vmatprep.subr.bf16.mxu0 %v2487
    %3714 = vmatpush1.bf16.xpose.msra.mxu0 %v2486
    %3715 = vmatprep.subr.bf16.mxu0 %v2607
    %3716 = vmatpush2.bf16.xpose.msra.mxu0 %v2606
    %3717 = vmatprep.subr.bf16.mxu0 %v2599
    %3718 = vmatpush2.bf16.xpose.msra.mxu0 %v2598
    %3719 = vmatprep.subr.bf16.mxu0 %v2591
    %3720 = vmatpush2.bf16.xpose.msra.mxu0 %v2590
    %3721 = vmatprep.subr.bf16.mxu0 %v2583
    %3722 = vmatpush2.bf16.xpose.msra.mxu0 %v2582
    %3723 = vmatprep.subr.bf16.mxu0 %v2575
    %3724 = vmatpush2.bf16.xpose.msra.mxu0 %v2574
    %3725 = vmatprep.subr.bf16.mxu0 %v2567
    %3726 = vmatpush2.bf16.xpose.msra.mxu0 %v2566
    %3727 = vmatprep.subr.bf16.mxu0 %v2559
    %3728 = vmatpush2.bf16.xpose.msra.mxu0 %v2558
    %3729 = vmatprep.subr.bf16.mxu0 %v2551
    %3730 = vmatpush2.bf16.xpose.msra.mxu0 %v2550
    %3731 = vmatprep.mubr.bf16.mxu0 %v679
    %3732 = vmatmul.mubr.bf16.gmra.mxu0 %v677
    %v3733 = vpop.f32.mrf.mxu0
    %v3734 = vadd.f32 %v3693, %v3733
    %v3735 = vpop.f32.mrf.mxu0
    %v3736 = vadd.f32 %v3695, %v3735
    %v3737 = vpop.f32.mrf.mxu0
    %v3738 = vpop.f32.mrf.mxu0
    %3739 = vdwg.mxu0
    %3740 = vmatprep.subr.bf16.mxu0 %v2665
    %3741 = vmatpush1.bf16.xpose.msra.mxu0 %v2664
    %3742 = vmatprep.subr.bf16.mxu0 %v2657
    %3743 = vmatpush1.bf16.xpose.msra.mxu0 %v2656
    %3744 = vmatprep.subr.bf16.mxu0 %v2649
    %3745 = vmatpush1.bf16.xpose.msra.mxu0 %v2648
    %3746 = vmatprep.subr.bf16.mxu0 %v2641
    %3747 = vmatpush1.bf16.xpose.msra.mxu0 %v2640
    %3748 = vmatprep.subr.bf16.mxu0 %v2633
    %3749 = vmatpush1.bf16.xpose.msra.mxu0 %v2632
    %3750 = vmatprep.subr.bf16.mxu0 %v2625
    %3751 = vmatpush1.bf16.xpose.msra.mxu0 %v2624
    %3752 = vmatprep.subr.bf16.mxu0 %v2617
    %3753 = vmatpush1.bf16.xpose.msra.mxu0 %v2616
    %3754 = vmatprep.subr.bf16.mxu0 %v2609
    %3755 = vmatpush1.bf16.xpose.msra.mxu0 %v2608
    %3756 = vmatprep.subr.bf16.mxu0 %v2729
    %3757 = vmatpush2.bf16.xpose.msra.mxu0 %v2728
    %3758 = vmatprep.subr.bf16.mxu0 %v2721
    %3759 = vmatpush2.bf16.xpose.msra.mxu0 %v2720
    %3760 = vmatprep.subr.bf16.mxu0 %v2713
    %3761 = vmatpush2.bf16.xpose.msra.mxu0 %v2712
    %3762 = vmatprep.subr.bf16.mxu0 %v2705
    %3763 = vmatpush2.bf16.xpose.msra.mxu0 %v2704
    %3764 = vmatprep.subr.bf16.mxu0 %v2697
    %3765 = vmatpush2.bf16.xpose.msra.mxu0 %v2696
    %3766 = vmatprep.subr.bf16.mxu0 %v2689
    %3767 = vmatpush2.bf16.xpose.msra.mxu0 %v2688
    %3768 = vmatprep.subr.bf16.mxu0 %v2681
    %3769 = vmatpush2.bf16.xpose.msra.mxu0 %v2680
    %3770 = vmatprep.subr.bf16.mxu0 %v2673
    %3771 = vmatpush2.bf16.xpose.msra.mxu0 %v2672
    %3772 = vmatprep.mubr.bf16.mxu0 %v668
    %3773 = vmatmul.mubr.bf16.gmra.mxu0 %v654
    %v3774 = vpop.f32.mrf.mxu0
    %v3775 = vadd.f32 %v617, %v3774
    %v3776 = vpop.f32.mrf.mxu0
    %v3777 = vadd.f32 %v621, %v3776
    %v3778 = vpop.f32.mrf.mxu0
    %v3779 = vpop.f32.mrf.mxu0
    %3780 = vdwg.mxu0
    %3781 = vmatprep.subr.bf16.mxu0 %v2667
    %3782 = vmatpush1.bf16.xpose.msra.mxu0 %v2666
    %3783 = vmatprep.subr.bf16.mxu0 %v2659
    %3784 = vmatpush1.bf16.xpose.msra.mxu0 %v2658
    %3785 = vmatprep.subr.bf16.mxu0 %v2651
    %3786 = vmatpush1.bf16.xpose.msra.mxu0 %v2650
    %3787 = vmatprep.subr.bf16.mxu0 %v2643
    %3788 = vmatpush1.bf16.xpose.msra.mxu0 %v2642
    %3789 = vmatprep.subr.bf16.mxu0 %v2635
    %3790 = vmatpush1.bf16.xpose.msra.mxu0 %v2634
    %3791 = vmatprep.subr.bf16.mxu0 %v2627
    %3792 = vmatpush1.bf16.xpose.msra.mxu0 %v2626
    %3793 = vmatprep.subr.bf16.mxu0 %v2619
    %3794 = vmatpush1.bf16.xpose.msra.mxu0 %v2618
    %3795 = vmatprep.subr.bf16.mxu0 %v2611
    %3796 = vmatpush1.bf16.xpose.msra.mxu0 %v2610
    %3797 = vmatprep.subr.bf16.mxu0 %v2731
    %3798 = vmatpush2.bf16.xpose.msra.mxu0 %v2730
    %3799 = vmatprep.subr.bf16.mxu0 %v2723
    %3800 = vmatpush2.bf16.xpose.msra.mxu0 %v2722
    %3801 = vmatprep.subr.bf16.mxu0 %v2715
    %3802 = vmatpush2.bf16.xpose.msra.mxu0 %v2714
    %3803 = vmatprep.subr.bf16.mxu0 %v2707
    %3804 = vmatpush2.bf16.xpose.msra.mxu0 %v2706
    %3805 = vmatprep.subr.bf16.mxu0 %v2699
    %3806 = vmatpush2.bf16.xpose.msra.mxu0 %v2698
    %3807 = vmatprep.subr.bf16.mxu0 %v2691
    %3808 = vmatpush2.bf16.xpose.msra.mxu0 %v2690
    %3809 = vmatprep.subr.bf16.mxu0 %v2683
    %3810 = vmatpush2.bf16.xpose.msra.mxu0 %v2682
    %3811 = vmatprep.subr.bf16.mxu0 %v2675
    %3812 = vmatpush2.bf16.xpose.msra.mxu0 %v2674
    %3813 = vmatprep.mubr.bf16.mxu0 %v678
    %3814 = vmatmul.mubr.bf16.gmra.mxu0 %v676
    %v3815 = vpop.f32.mrf.mxu0
    %v3816 = vadd.f32 %v3775, %v3815
    %v3817 = vpop.f32.mrf.mxu0
    %v3818 = vadd.f32 %v3777, %v3817
    %v3819 = vpop.f32.mrf.mxu0
    %v3820 = vpop.f32.mrf.mxu0
    %3821 = vdwg.mxu0
    %3822 = vmatprep.subr.bf16.mxu0 %v2669
    %3823 = vmatpush1.bf16.xpose.msra.mxu0 %v2668
    %3824 = vmatprep.subr.bf16.mxu0 %v2661
    %3825 = vmatpush1.bf16.xpose.msra.mxu0 %v2660
    %3826 = vmatprep.subr.bf16.mxu0 %v2653
    %3827 = vmatpush1.bf16.xpose.msra.mxu0 %v2652
    %3828 = vmatprep.subr.bf16.mxu0 %v2645
    %3829 = vmatpush1.bf16.xpose.msra.mxu0 %v2644
    %3830 = vmatprep.subr.bf16.mxu0 %v2637
    %3831 = vmatpush1.bf16.xpose.msra.mxu0 %v2636
    %3832 = vmatprep.subr.bf16.mxu0 %v2629
    %3833 = vmatpush1.bf16.xpose.msra.mxu0 %v2628
    %3834 = vmatprep.subr.bf16.mxu0 %v2621
    %3835 = vmatpush1.bf16.xpose.msra.mxu0 %v2620
    %3836 = vmatprep.subr.bf16.mxu0 %v2613
    %3837 = vmatpush1.bf16.xpose.msra.mxu0 %v2612
    %3838 = vmatprep.subr.bf16.mxu0 %v2733
    %3839 = vmatpush2.bf16.xpose.msra.mxu0 %v2732
    %3840 = vmatprep.subr.bf16.mxu0 %v2725
    %3841 = vmatpush2.bf16.xpose.msra.mxu0 %v2724
    %3842 = vmatprep.subr.bf16.mxu0 %v2717
    %3843 = vmatpush2.bf16.xpose.msra.mxu0 %v2716
    %3844 = vmatprep.subr.bf16.mxu0 %v2709
    %3845 = vmatpush2.bf16.xpose.msra.mxu0 %v2708
    %3846 = vmatprep.subr.bf16.mxu0 %v2701
    %3847 = vmatpush2.bf16.xpose.msra.mxu0 %v2700
    %3848 = vmatprep.subr.bf16.mxu0 %v2693
    %3849 = vmatpush2.bf16.xpose.msra.mxu0 %v2692
    %3850 = vmatprep.subr.bf16.mxu0 %v2685
    %3851 = vmatpush2.bf16.xpose.msra.mxu0 %v2684
    %3852 = vmatprep.subr.bf16.mxu0 %v2677
    %3853 = vmatpush2.bf16.xpose.msra.mxu0 %v2676
    %3854 = vmatprep.mubr.bf16.mxu0 %v675
    %3855 = vmatmul.mubr.bf16.gmra.mxu0 %v661
    %v3856 = vpop.f32.mrf.mxu0
    %v3857 = vadd.f32 %v3816, %v3856
    %v3858 = vpop.f32.mrf.mxu0
    %v3859 = vadd.f32 %v3818, %v3858
    %v3860 = vpop.f32.mrf.mxu0
    %v3861 = vpop.f32.mrf.mxu0
    %3862 = vdwg.mxu0
    %3863 = vmatprep.subr.bf16.mxu0 %v2671
    %3864 = vmatpush1.bf16.xpose.msra.mxu0 %v2670
    %3865 = vmatprep.subr.bf16.mxu0 %v2663
    %3866 = vmatpush1.bf16.xpose.msra.mxu0 %v2662
    %3867 = vmatprep.subr.bf16.mxu0 %v2655
    %3868 = vmatpush1.bf16.xpose.msra.mxu0 %v2654
    %3869 = vmatprep.subr.bf16.mxu0 %v2647
    %3870 = vmatpush1.bf16.xpose.msra.mxu0 %v2646
    %3871 = vmatprep.subr.bf16.mxu0 %v2639
    %3872 = vmatpush1.bf16.xpose.msra.mxu0 %v2638
    %3873 = vmatprep.subr.bf16.mxu0 %v2631
    %3874 = vmatpush1.bf16.xpose.msra.mxu0 %v2630
    %3875 = vmatprep.subr.bf16.mxu0 %v2623
    %3876 = vmatpush1.bf16.xpose.msra.mxu0 %v2622
    %3877 = vmatprep.subr.bf16.mxu0 %v2615
    %3878 = vmatpush1.bf16.xpose.msra.mxu0 %v2614
    %3879 = vmatprep.subr.bf16.mxu0 %v2735
    %3880 = vmatpush2.bf16.xpose.msra.mxu0 %v2734
    %3881 = vmatprep.subr.bf16.mxu0 %v2727
    %3882 = vmatpush2.bf16.xpose.msra.mxu0 %v2726
    %3883 = vmatprep.subr.bf16.mxu0 %v2719
    %3884 = vmatpush2.bf16.xpose.msra.mxu0 %v2718
    %3885 = vmatprep.subr.bf16.mxu0 %v2711
    %3886 = vmatpush2.bf16.xpose.msra.mxu0 %v2710
    %3887 = vmatprep.subr.bf16.mxu0 %v2703
    %3888 = vmatpush2.bf16.xpose.msra.mxu0 %v2702
    %3889 = vmatprep.subr.bf16.mxu0 %v2695
    %3890 = vmatpush2.bf16.xpose.msra.mxu0 %v2694
    %3891 = vmatprep.subr.bf16.mxu0 %v2687
    %3892 = vmatpush2.bf16.xpose.msra.mxu0 %v2686
    %3893 = vmatprep.subr.bf16.mxu0 %v2679
    %3894 = vmatpush2.bf16.xpose.msra.mxu0 %v2678
    %3895 = vmatprep.mubr.bf16.mxu0 %v679
    %3896 = vmatmul.mubr.bf16.gmra.mxu0 %v677
    %v3897 = vpop.f32.mrf.mxu0
    %v3898 = vadd.f32 %v3857, %v3897
    %v3899 = vpop.f32.mrf.mxu0
    %v3900 = vadd.f32 %v3859, %v3899
    %v3901 = vpop.f32.mrf.mxu0
    %v3902 = vpop.f32.mrf.mxu0
    %3903 = vdwg.mxu0
    %v3912 = vcombine.low %v3406, %v3408
    %v3913 = vcombine.low %v3570, %v3572
    %v3915 = vunpack.c.l.s4 1983009808
    %v3916 = vunpack.c.0.s8 %v3915
    %v3917 = vlaneseq
    %v3918 = vshrl.u32 %v3917, 7
    %v3919 = vsub.s32 %v3916, %v3918
    %v3920 = vrot.slane %v3912, %v3919
    %v3922 = vunpack.c.l.s4 1983009808
    %v3923 = vunpack.c.0.s8 %v3922
    %v3924 = vlaneseq
    %v3925 = vshrl.u32 %v3924, 7
    %v3926 = vsub.s32 %v3923, %v3925
    %v3927 = vrot.slane %v3913, %v3926
    %v3928 = vcombine.low %v3920, %v3927
    %v3929 = vcombine.low %v3734, %v3736
    %v3930 = vcombine.low %v3898, %v3900
    %v3932 = vunpack.c.l.s4 1983009808
    %v3933 = vunpack.c.0.s8 %v3932
    %v3934 = vlaneseq
    %v3935 = vshrl.u32 %v3934, 7
    %v3936 = vsub.s32 %v3933, %v3935
    %v3937 = vrot.slane %v3929, %v3936
    %v3939 = vunpack.c.l.s4 1983009808
    %v3940 = vunpack.c.0.s8 %v3939
    %v3941 = vlaneseq
    %v3942 = vshrl.u32 %v3941, 7
    %v3943 = vsub.s32 %v3940, %v3942
    %v3944 = vrot.slane %v3930, %v3943
    %v3945 = vcombine.low %v3937, %v3944
    %v3948 = vmul.f32 %v583, %v3928
    %v3949 = vmul.f32 %v584, %v3945
    %v3950 = vadd.f32 %v587, %v3948
    %v3951 = vadd.f32 %v588, %v3949
    %3952 = vst [vmem:[#allocation2] sm:$0xff] %v3950
    %3953 = vst [vmem:[#allocation2 + $0x8] sm:$0xff] %v3951
    // Predicated region
    $region30: #{tpu_custom_call.1} parent=1 // pred_check
      %p3954 = pneg %p58
    $region31: #{tpu_custom_call.1} parent=1 // pred_check_branch
      %3956 = sbr.rel (%p3954) target = $region33
    $region32: #{tpu_custom_call.1} parent=1 // pred_region
      %v3957 = vld [vmem:[#allocation2] sm:$0xff]
      %v3958 = vld [vmem:[#allocation2 + $0x8] sm:$0xff]
      %v3961 = vcombine.high %v3957, %v3957
      %v3963 = vunpack.c.l.s4 1983009808
      %v3964 = vunpack.c.0.s8 %v3963
      %v3965 = vlaneseq
      %v3966 = vshrl.u32 %v3965, 7
      %v3967 = vsub.s32 %v3964, %v3966
      %v3968 = vrot.slane %v3957, %v3967
      %v3970 = vunpack.c.l.s4 1983009808
      %v3971 = vunpack.c.0.s8 %v3970
      %v3972 = vlaneseq
      %v3973 = vshrl.u32 %v3972, 7
      %v3974 = vsub.s32 %v3971, %v3973
      %v3975 = vrot.slane %v3961, %v3974
      %v3976 = vcombine.high %v3968, %v3968
      %v3977 = vcombine.high %v3975, %v3975
      %v3978 = vcombine.high %v3958, %v3958
      %v3980 = vunpack.c.l.s4 1983009808
      %v3981 = vunpack.c.0.s8 %v3980
      %v3982 = vlaneseq
      %v3983 = vshrl.u32 %v3982, 7
      %v3984 = vsub.s32 %v3981, %v3983
      %v3985 = vrot.slane %v3958, %v3984
      %v3987 = vunpack.c.l.s4 1983009808
      %v3988 = vunpack.c.0.s8 %v3987
      %v3989 = vlaneseq
      %v3990 = vshrl.u32 %v3989, 7
      %v3991 = vsub.s32 %v3988, %v3990
      %v3992 = vrot.slane %v3978, %v3991
      %v3993 = vcombine.high %v3985, %v3985
      %v3994 = vcombine.high %v3992, %v3992
      %vm4003 = vcmask 1041408
      %v4004 = vsel %vm4003, %v3968, 0.0
      %v4005 = vsel %vm4003, %v3976, 0.0
      %v4006 = vadd.f32 %v4004, %v4005
      %v4007 = vsel %vm4003, %v3975, 0.0
      %v4008 = vadd.f32 %v4006, %v4007
      %v4009 = vsel %vm4003, %v3977, 0.0
      %v4010 = vadd.f32 %v4008, %v4009
      %v4011 = vsel %vm4003, %v3985, 0.0
      %v4012 = vadd.f32 %v4010, %v4011
      %v4013 = vsel %vm4003, %v3993, 0.0
      %v4014 = vadd.f32 %v4012, %v4013
      %v4015 = vsel %vm4003, %v3992, 0.0
      %v4016 = vadd.f32 %v4014, %v4015
      %v4017 = vsel %vm4003, %v3994, 0.0
      %v4018 = vadd.f32 %v4016, %v4017
      %4019 = vadd.xlane.f32.xlu0 %v4018
      %v4020 = vpop.xlane.xlu0 %4019
      %v4021 = vsub.f32 0.0, %v4020
      %vm4022 = vcmask 1024
      %4023 = vst.msk [vmem:[%s3] sm:$0x3] %vm4022, %v4021
    $region33: #{tpu_custom_call.1} parent=1 // pred_fallthru
      _
    // Predicated region
    $region34: #{tpu_custom_call.1} parent=1 // pred_check
      _
    $region35: #{tpu_custom_call.1} parent=1 // pred_check_branch
      %4025 = sbr.rel (0) target = $region37
    $region36: #{tpu_custom_call.1} parent=1 // pred_region
      _
    $region37: #{tpu_custom_call.1} parent=1 // pred_fallthru
      _
    // Predicated region
    $region38: #{tpu_custom_call.1} parent=1 // pred_check
      _
    $region39: #{tpu_custom_call.1} parent=1 // pred_check_branch
      %4027 = sbr.rel (0) target = $region41
    $region40: #{tpu_custom_call.1} parent=1 // pred_region
      _
    $region41: #{tpu_custom_call.1} parent=1 // pred_fallthru
      _
    %4028 = vsyncpa [#allocation4], 1
    %4029 = vsyncpa [#allocation6], 1

</llo_original>
